<compile_context>
chip_gen: v7x
topology: tpu7x:2x2x1
jax: 0.10.0
libtpu: 0.0.40
codegen_flags: <defaults>
</compile_context>

<pallas_src>
import jax
import jax.numpy as jnp
from jax.experimental import pallas as pl
from jax.experimental.pallas import tpu as pltpu

LANE = 128                 # TPU vreg lane width
BN_EPS = 1e-5              # PyTorch BatchNorm2d default eps
WL = 8                     # left halo offset: interior stores and the dx=1 tap stay
                           # sublane-aligned; the 7 dead columns are never stored or
                           # read, so they only cost ~5% of scratch footprint.
MXU_DTYPE = jnp.bfloat16   # MXU input dtype (accumulation stays f32)


def _round_up(x, m):
    return (x + m - 1) // m * m


def _pick_vmem_limit_bytes():
    # v5e/v6e: 128 MiB physical VMEM -> allow up to 96 MiB scoped so medium stages
    # still fit fully fused; v7x: 64 MiB -> cap at 48 MiB. Conservative 32 MiB
    # fallback if the hardware query is unavailable.
    try:
        cap = int(pltpu.get_tpu_info().vmem_capacity_bytes)
        return min(96 * 1024 * 1024, (cap * 3) // 4)
    except Exception:
        return 32 * 1024 * 1024


_VMEM_LIMIT_BYTES = _pick_vmem_limit_bytes()


# ------------------------------ fused kernel ------------------------------- #

def _down_cob_kernel(x_ref, w1_ref, g1_ref, beta1_ref, w2_ref, g2_ref, beta2_ref,
                     o_ref, xp_ref):
    """MaxPool2d(2,2) -> (Conv3x3 pad=1 -> BN(train) -> ReLU) x 2, all in VMEM.

    x_ref    : (N, H/2, 2, W/2, 2*Cin) f32   pool-window view of the NHWC input
    w*_ref   : (3, 3*K, CO) bf16             conv weights, dx taps packed along K
    g*/beta* : (1, CO) f32                   BN gamma / beta, zero-padded
    o_ref    : (N, H/2, W/2, CO)             lane-dense output (CO multiple of 128)
    xp_ref   : (N, H/2+2, W/2+WL+1, CP) f32  halo scratch shared by both convs
    """
    n, hh, _, wh, cin2 = x_ref.shape
    cin = cin2 // 2
    cp = xp_ref.shape[-1]
    wp = xp_ref.shape[2]
    co = o_ref.shape[-1]
    cp1 = w1_ref.shape[1] // 3          # conv1 K lanes actually read from scratch
    rows = n * hh * wh
    inv_rows = 1.0 / rows

    # ---- fused 2x2 max-pool --------------------------------------------------
    p00 = x_ref[:, :, 0, :, pl.ds(0, cin)]      # even h, even w
    p01 = x_ref[:, :, 0, :, pl.ds(cin, cin)]    # even h, odd  w
    p10 = x_ref[:, :, 1, :, pl.ds(0, cin)]      # odd  h, even w
    p11 = x_ref[:, :, 1, :, pl.ds(cin, cin)]    # odd  h, odd  w
    pooled = jnp.maximum(jnp.maximum(p00, p01), jnp.maximum(p10, p11))

    # ---- halo: zero ONLY what the taps read and the interior never overwrites
    # (border rows/cols + interior channel-padding lanes), not the full scratch.
    zrow = jnp.zeros((n, 1, wp, cp), jnp.float32)
    xp_ref[:, pl.ds(0, 1), :, :] = zrow                       # top halo row
    xp_ref[:, pl.ds(hh + 1, 1), :, :] = zrow                  # bottom halo row
    zcol = jnp.zeros((n, hh + 2, 1, cp), jnp.float32)
    xp_ref[:, :, pl.ds(WL - 1, 1), :] = zcol                  # left halo column
    xp_ref[:, :, pl.ds(WL + wh, 1), :] = zcol                 # right halo column
    if cp1 > cin:
        # Channel-padding lanes read by conv1 must be zero (not garbage) so the
        # zero rows of w1 cannot turn uninitialized-VMEM NaNs into NaN sums.
        xp_ref[:, pl.ds(1, hh), pl.ds(WL, wh), pl.ds(cin, cp1 - cin)] = (
            jnp.zeros((n, hh, wh, cp1 - cin), jnp.float32))
    xp_ref[:, pl.ds(1, hh), pl.ds(WL, wh), pl.ds(0, cin)] = pooled.astype(xp_ref.dtype)

    def conv3x3_bn_relu(w_ref, g_ref, beta_ref):
        k_cp = w_ref.shape[1] // 3      # scratch lanes this conv consumes per tap
        # Hoist the dx (W) shifts out of the tap loop and pack them along K: the
        # two unaligned shifted windows are read once per conv, and each dy tap
        # becomes a single (rows, 3*k_cp) x (3*k_cp, CO) bf16 MXU matmul
        # (K = 3*k_cp fills the 256-wide MXU on v6e/v7x; on v5e it runs as three
        # K=128 passes with no loss).
        packed = jnp.concatenate(
            [xp_ref[:, :, pl.ds(WL - 1 + dx, wh), pl.ds(0, k_cp)]
             for dx in range(3)], axis=-1)                    # (n, hh+2, wh, 3*k_cp)
        acc = jnp.zeros((rows, co), jnp.float32)
        for dy in range(3):                                   # static unroll
            patch = packed[:, dy:dy + hh].reshape(rows, 3 * k_cp)
            acc = acc + jnp.dot(patch.astype(MXU_DTYPE), w_ref[dy],
                                preferred_element_type=jnp.float32)
        # Conv bias intentionally omitted: a per-channel constant added before a
        # training-mode BatchNorm cancels exactly in the mean subtraction (only
        # valid with batch statistics; eval-mode running stats would need the
        # bias folded into beta instead).
        # Two-pass BN statistics: mean first, then centered sum of squares; the
        # centered tensor is reused for normalization, so this is free and avoids
        # the E[x^2]-E[x]^2 cancellation of the single-pass form.
        mean = jnp.sum(acc, axis=0, keepdims=True) * inv_rows
        centered = acc - mean
        var = jnp.sum(centered * centered, axis=0, keepdims=True) * inv_rows
        y = centered * jax.lax.rsqrt(var + BN_EPS)
        y = y * g_ref[...] + beta_ref[...]
        return jnp.maximum(y, 0.0)                            # ReLU

    y1 = conv3x3_bn_relu(w1_ref, g1_ref, beta1_ref)
    # Re-fill the interior with y1 for conv2. Conv2's K width equals CO, so it
    # reads exactly the lanes written here; the zero border is untouched and the
    # zero-padded output channels of y1 are exactly zero after BN/ReLU.
    xp_ref[:, pl.ds(1, hh), pl.ds(WL, wh), pl.ds(0, co)] = y1.reshape(n, hh, wh, co)
    y2 = conv3x3_bn_relu(w2_ref, g2_ref, beta2_ref)

    # Lane-dense output store (CO multiple of 128 -> unmasked full-lane vst).
    o_ref[...] = y2.reshape(n, hh, wh, co).astype(o_ref.dtype)


# --------------------------------- wrapper --------------------------------- #

def _vmem():
    return pl.BlockSpec(memory_space=pltpu.MemorySpace.VMEM)


@jax.jit
def down_cob_forward(x_nchw, params):
    """DownCOB forward: (N, Cin, H, W) -> (N, Cout, H/2, W/2), one fused pallas_call."""
    (w1, _b1, g1, bt1), (w2, _b2, g2, bt2) = params
    n, cin, h, w = x_nchw.shape
    cout = w1.shape[-1]
    hh, wh = h // 2, w // 2

    cp1 = _round_up(cin, LANE)          # conv1 per-tap K lanes
    co = _round_up(cout, LANE)          # output channels / conv2 per-tap K lanes
    cp = max(cp1, co)                   # scratch lane width

    # NCHW -> NHWC is the only data-moving layout op in the wrapper; the follow-up
    # reshape exposing the 2x2 pool window is a free row-major reinterpretation.
    x_win = jnp.transpose(x_nchw, (0, 2, 3, 1)).reshape(n, hh, 2, wh, 2 * cin)

    def pack_w(wgt, k_lanes):
        ci = wgt.shape[2]
        wpad = jnp.pad(wgt, ((0, 0), (0, 0), (0, k_lanes - ci), (0, co - cout)))
        # (3, 3, k_lanes, co) -> (3, 3*k_lanes, co): K index = dx*k_lanes + ci,
        # matching the kernel's dx-packed activation layout. Pre-cast to bf16 so
        # no weight casts remain in the kernel body.
        return wpad.reshape(3, 3 * k_lanes, co).astype(MXU_DTYPE)

    w1k = pack_w(w1, cp1)
    w2k = pack_w(w2, co)
    # Gamma/beta stay f32: they feed VPU math, which is kept f32 on all chips.
    g1p = jnp.pad(g1, (0, co - cout)).reshape(1, co)
    b1p = jnp.pad(bt1, (0, co - cout)).reshape(1, co)
    g2p = jnp.pad(g2, (0, co - cout)).reshape(1, co)
    b2p = jnp.pad(bt2, (0, co - cout)).reshape(1, co)

    out_padded = pl.pallas_call(
        _down_cob_kernel,
        out_shape=jax.ShapeDtypeStruct((n, hh, wh, co), x_nchw.dtype),
        in_specs=[_vmem()] * 7,
        out_specs=_vmem(),
        scratch_shapes=[pltpu.VMEM((n, hh + 2, wh + WL + 1, cp), jnp.float32)],
        compiler_params=pltpu.CompilerParams(vmem_limit_bytes=_VMEM_LIMIT_BYTES),
    )(x_win, w1k, g1p, b1p, w2k, g2p, b2p)

    # Slice away the channel padding and return to the PyTorch NCHW layout.
    return jnp.transpose(out_padded[..., :cout], (0, 3, 1, 2))


# ---------------------------- pure-JAX reference ---------------------------- #

def _ref_forward(x_nchw, params, conv_dtype=jnp.float32):
    """Reference. conv_dtype=bfloat16 gives a precision-matched reference
    (bf16 conv inputs, f32 accumulation) for a tight tolerance check."""
    x = jax.lax.reduce_window(x_nchw, -jnp.inf, jax.lax.max,
                              (1, 1, 2, 2), (1, 1, 2, 2), 'VALID')
    for (w, b, g, bt) in params:
        y = jax.lax.conv_general_dilated(
            x.astype(conv_dtype), w.astype(conv_dtype), (1, 1), ((1, 1), (1, 1)),
            dimension_numbers=('NCHW', 'HWIO', 'NCHW'),
            preferred_element_type=jnp.float32)
        y = y + b.reshape(1, -1, 1, 1)                 # bias kept in the reference
        mean = jnp.mean(y, axis=(0, 2, 3), keepdims=True)
        var = jnp.mean((y - mean) ** 2, axis=(0, 2, 3), keepdims=True)
        y = (y - mean) * jax.lax.rsqrt(var + BN_EPS)
        y = y * g.reshape(1, -1, 1, 1) + bt.reshape(1, -1, 1, 1)
        x = jnp.maximum(y, 0.0)
    return x


# ----------------------------------- main ----------------------------------- #

if __name__ == "__main__":
    N, C_IN, C_OUT, H, W = 2, 4, 8, 16, 16

    key = jax.random.PRNGKey(0)
    kx, kw1, kb1, kg1, kbt1, kw2, kb2, kg2, kbt2 = jax.random.split(key, 9)

    x = jax.random.normal(kx, (N, C_IN, H, W), jnp.float32)

    # Deterministic parameter init (shapes per DoubleConvCOB(in_ch=4, out_ch=8)).
    params = [
        (0.1 * jax.random.normal(kw1, (3, 3, C_IN, C_OUT), jnp.float32),   # conv1 weight (HWIO)
         0.1 * jax.random.normal(kb1, (C_OUT,), jnp.float32),              # conv1 bias
         1.0 + 0.1 * jax.random.normal(kg1, (C_OUT,), jnp.float32),        # bn1 gamma
         0.1 * jax.random.normal(kbt1, (C_OUT,), jnp.float32)),            # bn1 beta
        (0.1 * jax.random.normal(kw2, (3, 3, C_OUT, C_OUT), jnp.float32),  # conv2 weight
         0.1 * jax.random.normal(kb2, (C_OUT,), jnp.float32),              # conv2 bias
         1.0 + 0.1 * jax.random.normal(kg2, (C_OUT,), jnp.float32),        # bn2 gamma
         0.1 * jax.random.normal(kbt2, (C_OUT,), jnp.float32)),            # bn2 beta
    ]

    out = jax.block_until_ready(down_cob_forward(x, params))
    assert out.shape == (N, C_OUT, H // 2, W // 2), out.shape

    # Precision-matched reference (bf16 conv inputs, f32 accumulation): tight check.
    ref_bf16 = jax.block_until_ready(_ref_forward(x, params, conv_dtype=MXU_DTYPE))
    # Full-f32 reference: check at a bf16-matmul-appropriate tolerance.
    ref_f32 = jax.block_until_ready(_ref_forward(x, params, conv_dtype=jnp.float32))

    err_matched = float(jnp.max(jnp.abs(out - ref_bf16)))
    err_f32 = float(jnp.max(jnp.abs(out - ref_f32)))
    assert jnp.allclose(out, ref_bf16, atol=1e-2, rtol=1e-2), \
        f"matched-precision max abs err = {err_matched}"
    assert jnp.allclose(out, ref_f32, atol=5e-2, rtol=5e-2), \
        f"f32-reference max abs err = {err_f32}"

    print("KERNEL_OK")
</pallas_src>

<mosaic_0001>
module attributes {stable_mosaic.version = 11 : i64} {
  func.func @_down_cob_kernel(%arg0: memref<2x8x2x8x8xf32, #tpu.memory_space<vmem>>, %arg1: memref<3x384x128xbf16, #tpu.memory_space<vmem>>, %arg2: memref<1x128xf32, #tpu.memory_space<vmem>>, %arg3: memref<1x128xf32, #tpu.memory_space<vmem>>, %arg4: memref<3x384x128xbf16, #tpu.memory_space<vmem>>, %arg5: memref<1x128xf32, #tpu.memory_space<vmem>>, %arg6: memref<1x128xf32, #tpu.memory_space<vmem>>, %arg7: memref<2x8x8x128xf32, #tpu.memory_space<vmem>>, %arg8: memref<2x10x17x128xf32, #tpu.memory_space<vmem>>) attributes {dimension_semantics = [], scalar_prefetch = 0 : i64, scratch_operands = 1 : i64, tpu.core_type = #tpu.core_type<tc>} {
    %c0 = arith.constant 0 : index
    %c0_0 = arith.constant 0 : index
    %c0_1 = arith.constant 0 : index
    %c0_2 = arith.constant 0 : index
    %c0_3 = arith.constant 0 : index
    %0 = vector.load %arg0[%c0, %c0_0, %c0_1, %c0_2, %c0_3] : memref<2x8x2x8x8xf32, #tpu.memory_space<vmem>>, vector<2x8x1x8x4xf32>
    %1 = vector.shape_cast %0 : vector<2x8x1x8x4xf32> to vector<2x8x8x4xf32>
    %c0_4 = arith.constant 0 : index
    %c0_5 = arith.constant 0 : index
    %c0_6 = arith.constant 0 : index
    %c0_7 = arith.constant 0 : index
    %c4 = arith.constant 4 : index
    %2 = vector.load %arg0[%c0_4, %c0_5, %c0_6, %c0_7, %c4] : memref<2x8x2x8x8xf32, #tpu.memory_space<vmem>>, vector<2x8x1x8x4xf32>
    %3 = vector.shape_cast %2 : vector<2x8x1x8x4xf32> to vector<2x8x8x4xf32>
    %c0_8 = arith.constant 0 : index
    %c0_9 = arith.constant 0 : index
    %c1 = arith.constant 1 : index
    %c0_10 = arith.constant 0 : index
    %c0_11 = arith.constant 0 : index
    %4 = vector.load %arg0[%c0_8, %c0_9, %c1, %c0_10, %c0_11] : memref<2x8x2x8x8xf32, #tpu.memory_space<vmem>>, vector<2x8x1x8x4xf32>
    %5 = vector.shape_cast %4 : vector<2x8x1x8x4xf32> to vector<2x8x8x4xf32>
    %c0_12 = arith.constant 0 : index
    %c0_13 = arith.constant 0 : index
    %c1_14 = arith.constant 1 : index
    %c0_15 = arith.constant 0 : index
    %c4_16 = arith.constant 4 : index
    %6 = vector.load %arg0[%c0_12, %c0_13, %c1_14, %c0_15, %c4_16] : memref<2x8x2x8x8xf32, #tpu.memory_space<vmem>>, vector<2x8x1x8x4xf32>
    %7 = vector.shape_cast %6 : vector<2x8x1x8x4xf32> to vector<2x8x8x4xf32>
    %8 = arith.maximumf %1, %3 : vector<2x8x8x4xf32>
    %9 = arith.maximumf %5, %7 : vector<2x8x8x4xf32>
    %10 = arith.maximumf %8, %9 : vector<2x8x8x4xf32>
    %cst = arith.constant 0.000000e+00 : f32
    %11 = vector.broadcast %cst : f32 to vector<2x1x17x128xf32>
    %c0_17 = arith.constant 0 : index
    %c0_18 = arith.constant 0 : index
    %c0_19 = arith.constant 0 : index
    %c0_20 = arith.constant 0 : index
    %12 = vector.load %arg8[%c0_17, %c0_18, %c0_19, %c0_20] : memref<2x10x17x128xf32, #tpu.memory_space<vmem>>, vector<2x1x17x128xf32>
    tpu.vector_store %arg8[%c0_17, %c0_18, %c0_19, %c0_20], %11 {strides = array<i32>} : memref<2x10x17x128xf32, #tpu.memory_space<vmem>>, vector<2x1x17x128xf32>,
    %c0_21 = arith.constant 0 : index
    %c9 = arith.constant 9 : index
    %c0_22 = arith.constant 0 : index
    %c0_23 = arith.constant 0 : index
    %13 = vector.load %arg8[%c0_21, %c9, %c0_22, %c0_23] : memref<2x10x17x128xf32, #tpu.memory_space<vmem>>, vector<2x1x17x128xf32>
    tpu.vector_store %arg8[%c0_21, %c9, %c0_22, %c0_23], %11 {strides = array<i32>} : memref<2x10x17x128xf32, #tpu.memory_space<vmem>>, vector<2x1x17x128xf32>,
    %cst_24 = arith.constant 0.000000e+00 : f32
    %14 = vector.broadcast %cst_24 : f32 to vector<2x10x1x128xf32>
    %c0_25 = arith.constant 0 : index
    %c0_26 = arith.constant 0 : index
    %c7 = arith.constant 7 : index
    %c0_27 = arith.constant 0 : index
    %15 = vector.load %arg8[%c0_25, %c0_26, %c7, %c0_27] : memref<2x10x17x128xf32, #tpu.memory_space<vmem>>, vector<2x10x1x128xf32>
    tpu.vector_store %arg8[%c0_25, %c0_26, %c7, %c0_27], %14 {strides = array<i32>} : memref<2x10x17x128xf32, #tpu.memory_space<vmem>>, vector<2x10x1x128xf32>,
    %c0_28 = arith.constant 0 : index
    %c0_29 = arith.constant 0 : index
    %c16 = arith.constant 16 : index
    %c0_30 = arith.constant 0 : index
    %16 = vector.load %arg8[%c0_28, %c0_29, %c16, %c0_30] : memref<2x10x17x128xf32, #tpu.memory_space<vmem>>, vector<2x10x1x128xf32>
    tpu.vector_store %arg8[%c0_28, %c0_29, %c16, %c0_30], %14 {strides = array<i32>} : memref<2x10x17x128xf32, #tpu.memory_space<vmem>>, vector<2x10x1x128xf32>,
    %cst_31 = arith.constant 0.000000e+00 : f32
    %17 = vector.broadcast %cst_31 : f32 to vector<2x8x8x124xf32>
    %c0_32 = arith.constant 0 : index
    %c1_33 = arith.constant 1 : index
    %c8 = arith.constant 8 : index
    %c4_34 = arith.constant 4 : index
    %18 = vector.load %arg8[%c0_32, %c1_33, %c8, %c4_34] : memref<2x10x17x128xf32, #tpu.memory_space<vmem>>, vector<2x8x8x124xf32>
    tpu.vector_store %arg8[%c0_32, %c1_33, %c8, %c4_34], %17 {strides = array<i32>} : memref<2x10x17x128xf32, #tpu.memory_space<vmem>>, vector<2x8x8x124xf32>,
    %c0_35 = arith.constant 0 : index
    %c1_36 = arith.constant 1 : index
    %c8_37 = arith.constant 8 : index
    %c0_38 = arith.constant 0 : index
    %19 = vector.load %arg8[%c0_35, %c1_36, %c8_37, %c0_38] : memref<2x10x17x128xf32, #tpu.memory_space<vmem>>, vector<2x8x8x4xf32>
    tpu.vector_store %arg8[%c0_35, %c1_36, %c8_37, %c0_38], %10 {strides = array<i32>} : memref<2x10x17x128xf32, #tpu.memory_space<vmem>>, vector<2x8x8x4xf32>,
    %c0_39 = arith.constant 0 : index
    %c0_40 = arith.constant 0 : index
    %c7_41 = arith.constant 7 : index
    %c0_42 = arith.constant 0 : index
    %20 = vector.load %arg8[%c0_39, %c0_40, %c7_41, %c0_42] : memref<2x10x17x128xf32, #tpu.memory_space<vmem>>, vector<2x10x8x128xf32>
    %c0_43 = arith.constant 0 : index
    %c0_44 = arith.constant 0 : index
    %c8_45 = arith.constant 8 : index
    %c0_46 = arith.constant 0 : index
    %21 = vector.load %arg8[%c0_43, %c0_44, %c8_45, %c0_46] : memref<2x10x17x128xf32, #tpu.memory_space<vmem>>, vector<2x10x8x128xf32>
    %c0_47 = arith.constant 0 : index
    %c0_48 = arith.constant 0 : index
    %c9_49 = arith.constant 9 : index
    %c0_50 = arith.constant 0 : index
    %22 = vector.load %arg8[%c0_47, %c0_48, %c9_49, %c0_50] : memref<2x10x17x128xf32, #tpu.memory_space<vmem>>, vector<2x10x8x128xf32>
    %23 = tpu.concatenate %20, %21, %22 in 3 : vector<2x10x8x128xf32>, vector<2x10x8x128xf32>, vector<2x10x8x128xf32> -> vector<2x10x8x384xf32>
    %cst_51 = arith.constant 0.000000e+00 : f32
    %24 = vector.broadcast %cst_51 : f32 to vector<128x128xf32>
    %25 = vector.extract_strided_slice %23 {offsets = [0, 0, 0, 0], sizes = [2, 8, 8, 384], strides = [1, 1, 1, 1]} : vector<2x10x8x384xf32> to vector<2x8x8x384xf32>
    %26 = vector.shape_cast %25 : vector<2x8x8x384xf32> to vector<128x384xf32>
    %27 = arith.truncf %26 : vector<128x384xf32> to vector<128x384xbf16>
    %c0_52 = arith.constant 0 : index
    %c0_53 = arith.constant 0 : index
    %c0_54 = arith.constant 0 : index
    %28 = vector.load %arg1[%c0_52, %c0_53, %c0_54] : memref<3x384x128xbf16, #tpu.memory_space<vmem>>, vector<1x384x128xbf16>
    %29 = vector.shape_cast %28 : vector<1x384x128xbf16> to vector<384x128xbf16>
    %cst_55 = arith.constant dense<0.000000e+00> : vector<128x128xf32>
    %30 = tpu.matmul %27, %29, %cst_55 {dimension_numbers = #tpu.dot_dimension_numbers<[1], [0], [0], [1], [0, 0, 1, 1], [], []>} : vector<128x384xbf16>, vector<384x128xbf16>, vector<128x128xf32> -> vector<128x128xf32>
    %31 = arith.addf %24, %30 : vector<128x128xf32>
    %32 = vector.extract_strided_slice %23 {offsets = [0, 1, 0, 0], sizes = [2, 8, 8, 384], strides = [1, 1, 1, 1]} : vector<2x10x8x384xf32> to vector<2x8x8x384xf32>
    %33 = vector.shape_cast %32 : vector<2x8x8x384xf32> to vector<128x384xf32>
    %34 = arith.truncf %33 : vector<128x384xf32> to vector<128x384xbf16>
    %c1_56 = arith.constant 1 : index
    %c0_57 = arith.constant 0 : index
    %c0_58 = arith.constant 0 : index
    %35 = vector.load %arg1[%c1_56, %c0_57, %c0_58] : memref<3x384x128xbf16, #tpu.memory_space<vmem>>, vector<1x384x128xbf16>
    %36 = vector.shape_cast %35 : vector<1x384x128xbf16> to vector<384x128xbf16>
    %cst_59 = arith.constant dense<0.000000e+00> : vector<128x128xf32>
    %37 = tpu.matmul %34, %36, %cst_59 {dimension_numbers = #tpu.dot_dimension_numbers<[1], [0], [0], [1], [0, 0, 1, 1], [], []>} : vector<128x384xbf16>, vector<384x128xbf16>, vector<128x128xf32> -> vector<128x128xf32>
    %38 = arith.addf %31, %37 : vector<128x128xf32>
    %39 = vector.extract_strided_slice %23 {offsets = [0, 2, 0, 0], sizes = [2, 8, 8, 384], strides = [1, 1, 1, 1]} : vector<2x10x8x384xf32> to vector<2x8x8x384xf32>
    %40 = vector.shape_cast %39 : vector<2x8x8x384xf32> to vector<128x384xf32>
    %41 = arith.truncf %40 : vector<128x384xf32> to vector<128x384xbf16>
    %c2 = arith.constant 2 : index
    %c0_60 = arith.constant 0 : index
    %c0_61 = arith.constant 0 : index
    %42 = vector.load %arg1[%c2, %c0_60, %c0_61] : memref<3x384x128xbf16, #tpu.memory_space<vmem>>, vector<1x384x128xbf16>
    %43 = vector.shape_cast %42 : vector<1x384x128xbf16> to vector<384x128xbf16>
    %cst_62 = arith.constant dense<0.000000e+00> : vector<128x128xf32>
    %44 = tpu.matmul %41, %43, %cst_62 {dimension_numbers = #tpu.dot_dimension_numbers<[1], [0], [0], [1], [0, 0, 1, 1], [], []>} : vector<128x384xbf16>, vector<384x128xbf16>, vector<128x128xf32> -> vector<128x128xf32>
    %45 = arith.addf %38, %44 : vector<128x128xf32>
    %cst_63 = arith.constant dense<0.000000e+00> : vector<128xf32>
    %46 = vector.multi_reduction <add>, %45, %cst_63 [0] : vector<128x128xf32> to vector<128xf32>
    %47 = vector.shape_cast %46 : vector<128xf32> to vector<1x128xf32>
    %cst_64 = arith.constant 7.812500e-03 : f32
    %48 = vector.broadcast %cst_64 : f32 to vector<1x128xf32>
    %49 = arith.mulf %47, %48 : vector<1x128xf32>
    %50 = vector.broadcast %49 : vector<1x128xf32> to vector<128x128xf32>
    %51 = arith.subf %45, %50 : vector<128x128xf32>
    %52 = arith.mulf %51, %51 : vector<128x128xf32>
    %cst_65 = arith.constant dense<0.000000e+00> : vector<128xf32>
    %53 = vector.multi_reduction <add>, %52, %cst_65 [0] : vector<128x128xf32> to vector<128xf32>
    %54 = vector.shape_cast %53 : vector<128xf32> to vector<1x128xf32>
    %cst_66 = arith.constant 7.812500e-03 : f32
    %55 = vector.broadcast %cst_66 : f32 to vector<1x128xf32>
    %56 = arith.mulf %54, %55 : vector<1x128xf32>
    %cst_67 = arith.constant 9.99999974E-6 : f32
    %57 = vector.broadcast %cst_67 : f32 to vector<1x128xf32>
    %58 = arith.addf %56, %57 : vector<1x128xf32>
    %59 = math.rsqrt %58 : vector<1x128xf32>
    %60 = vector.broadcast %59 : vector<1x128xf32> to vector<128x128xf32>
    %61 = arith.mulf %51, %60 : vector<128x128xf32>
    %c0_68 = arith.constant 0 : index
    %c0_69 = arith.constant 0 : index
    %62 = vector.load %arg2[%c0_68, %c0_69] : memref<1x128xf32, #tpu.memory_space<vmem>>, vector<1x128xf32>
    %63 = vector.broadcast %62 : vector<1x128xf32> to vector<128x128xf32>
    %64 = arith.mulf %61, %63 : vector<128x128xf32>
    %c0_70 = arith.constant 0 : index
    %c0_71 = arith.constant 0 : index
    %65 = vector.load %arg3[%c0_70, %c0_71] : memref<1x128xf32, #tpu.memory_space<vmem>>, vector<1x128xf32>
    %66 = vector.broadcast %65 : vector<1x128xf32> to vector<128x128xf32>
    %67 = arith.addf %64, %66 : vector<128x128xf32>
    %cst_72 = arith.constant 0.000000e+00 : f32
    %68 = vector.broadcast %cst_72 : f32 to vector<128x128xf32>
    %69 = arith.maximumf %67, %68 : vector<128x128xf32>
    %70 = vector.shape_cast %69 : vector<128x128xf32> to vector<2x8x8x128xf32>
    %c0_73 = arith.constant 0 : index
    %c1_74 = arith.constant 1 : index
    %c8_75 = arith.constant 8 : index
    %c0_76 = arith.constant 0 : index
    %71 = vector.load %arg8[%c0_73, %c1_74, %c8_75, %c0_76] : memref<2x10x17x128xf32, #tpu.memory_space<vmem>>, vector<2x8x8x128xf32>
    tpu.vector_store %arg8[%c0_73, %c1_74, %c8_75, %c0_76], %70 {strides = array<i32>} : memref<2x10x17x128xf32, #tpu.memory_space<vmem>>, vector<2x8x8x128xf32>,
    %c0_77 = arith.constant 0 : index
    %c0_78 = arith.constant 0 : index
    %c7_79 = arith.constant 7 : index
    %c0_80 = arith.constant 0 : index
    %72 = vector.load %arg8[%c0_77, %c0_78, %c7_79, %c0_80] : memref<2x10x17x128xf32, #tpu.memory_space<vmem>>, vector<2x10x8x128xf32>
    %c0_81 = arith.constant 0 : index
    %c0_82 = arith.constant 0 : index
    %c8_83 = arith.constant 8 : index
    %c0_84 = arith.constant 0 : index
    %73 = vector.load %arg8[%c0_81, %c0_82, %c8_83, %c0_84] : memref<2x10x17x128xf32, #tpu.memory_space<vmem>>, vector<2x10x8x128xf32>
    %c0_85 = arith.constant 0 : index
    %c0_86 = arith.constant 0 : index
    %c9_87 = arith.constant 9 : index
    %c0_88 = arith.constant 0 : index
    %74 = vector.load %arg8[%c0_85, %c0_86, %c9_87, %c0_88] : memref<2x10x17x128xf32, #tpu.memory_space<vmem>>, vector<2x10x8x128xf32>
    %75 = tpu.concatenate %72, %73, %74 in 3 : vector<2x10x8x128xf32>, vector<2x10x8x128xf32>, vector<2x10x8x128xf32> -> vector<2x10x8x384xf32>
    %cst_89 = arith.constant 0.000000e+00 : f32
    %76 = vector.broadcast %cst_89 : f32 to vector<128x128xf32>
    %77 = vector.extract_strided_slice %75 {offsets = [0, 0, 0, 0], sizes = [2, 8, 8, 384], strides = [1, 1, 1, 1]} : vector<2x10x8x384xf32> to vector<2x8x8x384xf32>
    %78 = vector.shape_cast %77 : vector<2x8x8x384xf32> to vector<128x384xf32>
    %79 = arith.truncf %78 : vector<128x384xf32> to vector<128x384xbf16>
    %c0_90 = arith.constant 0 : index
    %c0_91 = arith.constant 0 : index
    %c0_92 = arith.constant 0 : index
    %80 = vector.load %arg4[%c0_90, %c0_91, %c0_92] : memref<3x384x128xbf16, #tpu.memory_space<vmem>>, vector<1x384x128xbf16>
    %81 = vector.shape_cast %80 : vector<1x384x128xbf16> to vector<384x128xbf16>
    %cst_93 = arith.constant dense<0.000000e+00> : vector<128x128xf32>
    %82 = tpu.matmul %79, %81, %cst_93 {dimension_numbers = #tpu.dot_dimension_numbers<[1], [0], [0], [1], [0, 0, 1, 1], [], []>} : vector<128x384xbf16>, vector<384x128xbf16>, vector<128x128xf32> -> vector<128x128xf32>
    %83 = arith.addf %76, %82 : vector<128x128xf32>
    %84 = vector.extract_strided_slice %75 {offsets = [0, 1, 0, 0], sizes = [2, 8, 8, 384], strides = [1, 1, 1, 1]} : vector<2x10x8x384xf32> to vector<2x8x8x384xf32>
    %85 = vector.shape_cast %84 : vector<2x8x8x384xf32> to vector<128x384xf32>
    %86 = arith.truncf %85 : vector<128x384xf32> to vector<128x384xbf16>
    %c1_94 = arith.constant 1 : index
    %c0_95 = arith.constant 0 : index
    %c0_96 = arith.constant 0 : index
    %87 = vector.load %arg4[%c1_94, %c0_95, %c0_96] : memref<3x384x128xbf16, #tpu.memory_space<vmem>>, vector<1x384x128xbf16>
    %88 = vector.shape_cast %87 : vector<1x384x128xbf16> to vector<384x128xbf16>
    %cst_97 = arith.constant dense<0.000000e+00> : vector<128x128xf32>
    %89 = tpu.matmul %86, %88, %cst_97 {dimension_numbers = #tpu.dot_dimension_numbers<[1], [0], [0], [1], [0, 0, 1, 1], [], []>} : vector<128x384xbf16>, vector<384x128xbf16>, vector<128x128xf32> -> vector<128x128xf32>
    %90 = arith.addf %83, %89 : vector<128x128xf32>
    %91 = vector.extract_strided_slice %75 {offsets = [0, 2, 0, 0], sizes = [2, 8, 8, 384], strides = [1, 1, 1, 1]} : vector<2x10x8x384xf32> to vector<2x8x8x384xf32>
    %92 = vector.shape_cast %91 : vector<2x8x8x384xf32> to vector<128x384xf32>
    %93 = arith.truncf %92 : vector<128x384xf32> to vector<128x384xbf16>
    %c2_98 = arith.constant 2 : index
    %c0_99 = arith.constant 0 : index
    %c0_100 = arith.constant 0 : index
    %94 = vector.load %arg4[%c2_98, %c0_99, %c0_100] : memref<3x384x128xbf16, #tpu.memory_space<vmem>>, vector<1x384x128xbf16>
    %95 = vector.shape_cast %94 : vector<1x384x128xbf16> to vector<384x128xbf16>
    %cst_101 = arith.constant dense<0.000000e+00> : vector<128x128xf32>
    %96 = tpu.matmul %93, %95, %cst_101 {dimension_numbers = #tpu.dot_dimension_numbers<[1], [0], [0], [1], [0, 0, 1, 1], [], []>} : vector<128x384xbf16>, vector<384x128xbf16>, vector<128x128xf32> -> vector<128x128xf32>
    %97 = arith.addf %90, %96 : vector<128x128xf32>
    %cst_102 = arith.constant dense<0.000000e+00> : vector<128xf32>
    %98 = vector.multi_reduction <add>, %97, %cst_102 [0] : vector<128x128xf32> to vector<128xf32>
    %99 = vector.shape_cast %98 : vector<128xf32> to vector<1x128xf32>
    %cst_103 = arith.constant 7.812500e-03 : f32
    %100 = vector.broadcast %cst_103 : f32 to vector<1x128xf32>
    %101 = arith.mulf %99, %100 : vector<1x128xf32>
    %102 = vector.broadcast %101 : vector<1x128xf32> to vector<128x128xf32>
    %103 = arith.subf %97, %102 : vector<128x128xf32>
    %104 = arith.mulf %103, %103 : vector<128x128xf32>
    %cst_104 = arith.constant dense<0.000000e+00> : vector<128xf32>
    %105 = vector.multi_reduction <add>, %104, %cst_104 [0] : vector<128x128xf32> to vector<128xf32>
    %106 = vector.shape_cast %105 : vector<128xf32> to vector<1x128xf32>
    %cst_105 = arith.constant 7.812500e-03 : f32
    %107 = vector.broadcast %cst_105 : f32 to vector<1x128xf32>
    %108 = arith.mulf %106, %107 : vector<1x128xf32>
    %cst_106 = arith.constant 9.99999974E-6 : f32
    %109 = vector.broadcast %cst_106 : f32 to vector<1x128xf32>
    %110 = arith.addf %108, %109 : vector<1x128xf32>
    %111 = math.rsqrt %110 : vector<1x128xf32>
    %112 = vector.broadcast %111 : vector<1x128xf32> to vector<128x128xf32>
    %113 = arith.mulf %103, %112 : vector<128x128xf32>
    %c0_107 = arith.constant 0 : index
    %c0_108 = arith.constant 0 : index
    %114 = vector.load %arg5[%c0_107, %c0_108] : memref<1x128xf32, #tpu.memory_space<vmem>>, vector<1x128xf32>
    %115 = vector.broadcast %114 : vector<1x128xf32> to vector<128x128xf32>
    %116 = arith.mulf %113, %115 : vector<128x128xf32>
    %c0_109 = arith.constant 0 : index
    %c0_110 = arith.constant 0 : index
    %117 = vector.load %arg6[%c0_109, %c0_110] : memref<1x128xf32, #tpu.memory_space<vmem>>, vector<1x128xf32>
    %118 = vector.broadcast %117 : vector<1x128xf32> to vector<128x128xf32>
    %119 = arith.addf %116, %118 : vector<128x128xf32>
    %cst_111 = arith.constant 0.000000e+00 : f32
    %120 = vector.broadcast %cst_111 : f32 to vector<128x128xf32>
    %121 = arith.maximumf %119, %120 : vector<128x128xf32>
    %122 = vector.shape_cast %121 : vector<128x128xf32> to vector<2x8x8x128xf32>
    %c0_112 = arith.constant 0 : index
    %c0_113 = arith.constant 0 : index
    %c0_114 = arith.constant 0 : index
    %c0_115 = arith.constant 0 : index
    %123 = vector.load %arg7[%c0_112, %c0_113, %c0_114, %c0_115] : memref<2x8x8x128xf32, #tpu.memory_space<vmem>>, vector<2x8x8x128xf32>
    tpu.vector_store %arg7[%c0_112, %c0_113, %c0_114, %c0_115], %122 {strides = array<i32>} : memref<2x8x8x128xf32, #tpu.memory_space<vmem>>, vector<2x8x8x128xf32>,
    return
  }
}

</mosaic_0001>

<llo_original>
// kernel: down_cob_forward.1
$region0: #{down_cob_forward.1}
  #allocation0 [shape = 'u32[]', space=smem, size = 0x4, offset = 0x4, fixed_abs, tag = 'smem constant byte address 0x4 - core index']
  #allocation1 [shape = 'u32[144,128]{1,0:T(1,128)}', space=vmem, size = 0x12000, scoped, tag = 'internal scratch']
  #allocation2 [shape = 'f32[2,10,17,128]{3,2,1,0:T(8,128)}', space=vmem, size = 0x3c000, scoped, tag = 'scratch operand']
  %s0 = inlined_call_operand.vmem [shape: f32[2,8,2,8,8], index: 0, kind: input, shape index: {}]
  %s1 = inlined_call_operand.vmem [shape: bf16[3,384,128], index: 1, kind: input, shape index: {}]
  %s2 = inlined_call_operand.vmem [shape: f32[1,128], index: 2, kind: input, shape index: {}]
  %s3 = inlined_call_operand.vmem [shape: f32[1,128], index: 3, kind: input, shape index: {}]
  %s4 = inlined_call_operand.vmem [shape: bf16[3,384,128], index: 4, kind: input, shape index: {}]
  %s5 = inlined_call_operand.vmem [shape: f32[1,128], index: 5, kind: input, shape index: {}]
  %s6 = inlined_call_operand.vmem [shape: f32[1,128], index: 6, kind: input, shape index: {}]
  %s7 = inlined_call_operand.vmem [shape: f32[2,8,8,128], index: 7, kind: output, shape index: {}]
  %s8 = sld [smem:[#allocation0]]
  $region38: #{down_cob_forward.1} parent=0
    _
  %s10 = ssub.s32 1, %s8
  %s11 = scalar_select 0, %s10, %s8
  // Predicated region
  $region2: #{down_cob_forward.1} parent=0 // pred_check
    _
  $region3: #{down_cob_forward.1} parent=0 // pred_check_branch
    %13 = sbr.rel (0) target = $region5
  $region4: #{down_cob_forward.1} parent=0 // pred_region
    _
  $region5: #{down_cob_forward.1} parent=0 // pred_fallthru
    _
  // Predicated region
  $region6: #{down_cob_forward.1} parent=0 // pred_check
    _
  $region7: #{down_cob_forward.1} parent=0 // pred_check_branch
    %15 = sbr.rel (0) target = $region9
  $region8: #{down_cob_forward.1} parent=0 // pred_region
    _
  $region9: #{down_cob_forward.1} parent=0 // pred_fallthru
    _
  // Predicated region
  $region10: #{down_cob_forward.1} parent=0 // pred_check
    _
  $region11: #{down_cob_forward.1} parent=0 // pred_check_branch
    %17 = sbr.rel (0) target = $region13
  $region12: #{down_cob_forward.1} parent=0 // pred_region
    _
  $region13: #{down_cob_forward.1} parent=0 // pred_fallthru
    _
  // Predicated region
  $region14: #{down_cob_forward.1} parent=0 // pred_check
    _
  $region15: #{down_cob_forward.1} parent=0 // pred_check_branch
    %19 = sbr.rel (0) target = $region17
  $region16: #{down_cob_forward.1} parent=0 // pred_region
    _
  $region17: #{down_cob_forward.1} parent=0 // pred_fallthru
    _
  // Predicated region
  $region18: #{down_cob_forward.1} parent=0 // pred_check
    _
  $region19: #{down_cob_forward.1} parent=0 // pred_check_branch
    %21 = sbr.rel (0) target = $region21
  $region20: #{down_cob_forward.1} parent=0 // pred_region
    _
  $region21: #{down_cob_forward.1} parent=0 // pred_fallthru
    _
  // Predicated region
  $region22: #{down_cob_forward.1} parent=0 // pred_check
    _
  $region23: #{down_cob_forward.1} parent=0 // pred_check_branch
    %23 = sbr.rel (0) target = $region25
  $region24: #{down_cob_forward.1} parent=0 // pred_region
    _
  $region25: #{down_cob_forward.1} parent=0 // pred_fallthru
    _
  // Predicated region
  $region26: #{down_cob_forward.1} parent=0 // pred_check
    _
  $region27: #{down_cob_forward.1} parent=0 // pred_check_branch
    %25 = sbr.rel (0) target = $region29
  $region28: #{down_cob_forward.1} parent=0 // pred_region
    _
  $region29: #{down_cob_forward.1} parent=0 // pred_fallthru
    _
  %v27 = vld [vmem:[%s0] sm:$0xff]
  %v28 = vld [vmem:[%s0 + $0x10] sm:$0xff]
  %v29 = vld [vmem:[%s0 + $0x20] sm:$0xff]
  %v30 = vld [vmem:[%s0 + $0x30] sm:$0xff]
  %v31 = vld [vmem:[%s0 + $0x40] sm:$0xff]
  %v32 = vld [vmem:[%s0 + $0x50] sm:$0xff]
  %v33 = vld [vmem:[%s0 + $0x60] sm:$0xff]
  %v34 = vld [vmem:[%s0 + $0x70] sm:$0xff]
  %v35 = vld [vmem:[%s0 + $0x80] sm:$0xff]
  %v36 = vld [vmem:[%s0 + $0x90] sm:$0xff]
  %v37 = vld [vmem:[%s0 + $0xa0] sm:$0xff]
  %v38 = vld [vmem:[%s0 + $0xb0] sm:$0xff]
  %v39 = vld [vmem:[%s0 + $0xc0] sm:$0xff]
  %v40 = vld [vmem:[%s0 + $0xd0] sm:$0xff]
  %v41 = vld [vmem:[%s0 + $0xe0] sm:$0xff]
  %v42 = vld [vmem:[%s0 + $0xf0] sm:$0xff]
  %s43 = scalar_lea.vmem %s0, 8
  %v44 = vld [vmem:[%s43] sm:$0xff]
  %v45 = vld [vmem:[%s43 + $0x10] sm:$0xff]
  %v46 = vld [vmem:[%s43 + $0x20] sm:$0xff]
  %v47 = vld [vmem:[%s43 + $0x30] sm:$0xff]
  %v48 = vld [vmem:[%s43 + $0x40] sm:$0xff]
  %v49 = vld [vmem:[%s43 + $0x50] sm:$0xff]
  %v50 = vld [vmem:[%s43 + $0x60] sm:$0xff]
  %v51 = vld [vmem:[%s43 + $0x70] sm:$0xff]
  %v52 = vld [vmem:[%s43 + $0x80] sm:$0xff]
  %v53 = vld [vmem:[%s43 + $0x90] sm:$0xff]
  %v54 = vld [vmem:[%s43 + $0xa0] sm:$0xff]
  %v55 = vld [vmem:[%s43 + $0xb0] sm:$0xff]
  %v56 = vld [vmem:[%s43 + $0xc0] sm:$0xff]
  %v57 = vld [vmem:[%s43 + $0xd0] sm:$0xff]
  %v58 = vld [vmem:[%s43 + $0xe0] sm:$0xff]
  %v59 = vld [vmem:[%s43 + $0xf0] sm:$0xff]
  %76 = vrot.lane.b32.xlu0 %v27, 124
  %v77 = vpop.permute.xlu0 %76
  %78 = vrot.lane.b32.xlu0 %v28, 124
  %v79 = vpop.permute.xlu0 %78
  %80 = vrot.lane.b32.xlu0 %v29, 124
  %v81 = vpop.permute.xlu0 %80
  %82 = vrot.lane.b32.xlu0 %v30, 124
  %v83 = vpop.permute.xlu0 %82
  %84 = vrot.lane.b32.xlu0 %v31, 124
  %v85 = vpop.permute.xlu0 %84
  %86 = vrot.lane.b32.xlu0 %v32, 124
  %v87 = vpop.permute.xlu0 %86
  %88 = vrot.lane.b32.xlu0 %v33, 124
  %v89 = vpop.permute.xlu0 %88
  %90 = vrot.lane.b32.xlu0 %v34, 124
  %v91 = vpop.permute.xlu0 %90
  %92 = vrot.lane.b32.xlu0 %v35, 124
  %v93 = vpop.permute.xlu0 %92
  %94 = vrot.lane.b32.xlu0 %v36, 124
  %v95 = vpop.permute.xlu0 %94
  %96 = vrot.lane.b32.xlu0 %v37, 124
  %v97 = vpop.permute.xlu0 %96
  %98 = vrot.lane.b32.xlu0 %v38, 124
  %v99 = vpop.permute.xlu0 %98
  %100 = vrot.lane.b32.xlu0 %v39, 124
  %v101 = vpop.permute.xlu0 %100
  %102 = vrot.lane.b32.xlu0 %v40, 124
  %v103 = vpop.permute.xlu0 %102
  %104 = vrot.lane.b32.xlu0 %v41, 124
  %v105 = vpop.permute.xlu0 %104
  %106 = vrot.lane.b32.xlu0 %v42, 124
  %v107 = vpop.permute.xlu0 %106
  %v124 = vmax.f32 %v27, %v77
  %v125 = vmax.f32 %v28, %v79
  %v126 = vmax.f32 %v29, %v81
  %v127 = vmax.f32 %v30, %v83
  %v128 = vmax.f32 %v31, %v85
  %v129 = vmax.f32 %v32, %v87
  %v130 = vmax.f32 %v33, %v89
  %v131 = vmax.f32 %v34, %v91
  %v132 = vmax.f32 %v35, %v93
  %v133 = vmax.f32 %v36, %v95
  %v134 = vmax.f32 %v37, %v97
  %v135 = vmax.f32 %v38, %v99
  %v136 = vmax.f32 %v39, %v101
  %v137 = vmax.f32 %v40, %v103
  %v138 = vmax.f32 %v41, %v105
  %v139 = vmax.f32 %v42, %v107
  %156 = vrot.lane.b32.xlu0 %v44, 124
  %v157 = vpop.permute.xlu0 %156
  %158 = vrot.lane.b32.xlu0 %v45, 124
  %v159 = vpop.permute.xlu0 %158
  %160 = vrot.lane.b32.xlu0 %v46, 124
  %v161 = vpop.permute.xlu0 %160
  %162 = vrot.lane.b32.xlu0 %v47, 124
  %v163 = vpop.permute.xlu0 %162
  %164 = vrot.lane.b32.xlu0 %v48, 124
  %v165 = vpop.permute.xlu0 %164
  %166 = vrot.lane.b32.xlu0 %v49, 124
  %v167 = vpop.permute.xlu0 %166
  %168 = vrot.lane.b32.xlu0 %v50, 124
  %v169 = vpop.permute.xlu0 %168
  %170 = vrot.lane.b32.xlu0 %v51, 124
  %v171 = vpop.permute.xlu0 %170
  %172 = vrot.lane.b32.xlu0 %v52, 124
  %v173 = vpop.permute.xlu0 %172
  %174 = vrot.lane.b32.xlu0 %v53, 124
  %v175 = vpop.permute.xlu0 %174
  %176 = vrot.lane.b32.xlu0 %v54, 124
  %v177 = vpop.permute.xlu0 %176
  %178 = vrot.lane.b32.xlu0 %v55, 124
  %v179 = vpop.permute.xlu0 %178
  %180 = vrot.lane.b32.xlu0 %v56, 124
  %v181 = vpop.permute.xlu0 %180
  %182 = vrot.lane.b32.xlu0 %v57, 124
  %v183 = vpop.permute.xlu0 %182
  %184 = vrot.lane.b32.xlu0 %v58, 124
  %v185 = vpop.permute.xlu0 %184
  %186 = vrot.lane.b32.xlu0 %v59, 124
  %v187 = vpop.permute.xlu0 %186
  %v204 = vmax.f32 %v44, %v157
  %v205 = vmax.f32 %v45, %v159
  %v206 = vmax.f32 %v46, %v161
  %v207 = vmax.f32 %v47, %v163
  %v208 = vmax.f32 %v48, %v165
  %v209 = vmax.f32 %v49, %v167
  %v210 = vmax.f32 %v50, %v169
  %v211 = vmax.f32 %v51, %v171
  %v212 = vmax.f32 %v52, %v173
  %v213 = vmax.f32 %v53, %v175
  %v214 = vmax.f32 %v54, %v177
  %v215 = vmax.f32 %v55, %v179
  %v216 = vmax.f32 %v56, %v181
  %v217 = vmax.f32 %v57, %v183
  %v218 = vmax.f32 %v58, %v185
  %v219 = vmax.f32 %v59, %v187
  %v220 = vmax.f32 %v124, %v204
  %v221 = vmax.f32 %v125, %v205
  %v222 = vmax.f32 %v126, %v206
  %v223 = vmax.f32 %v127, %v207
  %v224 = vmax.f32 %v128, %v208
  %v225 = vmax.f32 %v129, %v209
  %v226 = vmax.f32 %v130, %v210
  %v227 = vmax.f32 %v131, %v211
  %v228 = vmax.f32 %v132, %v212
  %v229 = vmax.f32 %v133, %v213
  %v230 = vmax.f32 %v134, %v214
  %v231 = vmax.f32 %v135, %v215
  %v232 = vmax.f32 %v136, %v216
  %v233 = vmax.f32 %v137, %v217
  %v234 = vmax.f32 %v138, %v218
  %v235 = vmax.f32 %v139, %v219
  %236 = vst [vmem:[#allocation2] sm:$0xff] 0.0
  %237 = vst [vmem:[#allocation2 + $0x8] sm:$0xff] 0.0
  %238 = vst [vmem:[#allocation2 + $0x10] sm:$0x1] 0.0
  %239 = vst [vmem:[#allocation2 + $0xf0] sm:$0xff] 0.0
  %240 = vst [vmem:[#allocation2 + $0xf8] sm:$0xff] 0.0
  %241 = vst [vmem:[#allocation2 + $0x100] sm:$0x1] 0.0
  %s242 = scalar_lea.vmem [#allocation2], 216
  %243 = vst [vmem:[%s242] sm:$0xff] 0.0
  %244 = vst [vmem:[%s242 + $0x8] sm:$0xff] 0.0
  %245 = vst [vmem:[%s242 + $0x10] sm:$0x1] 0.0
  %246 = vst [vmem:[%s242 + $0xf0] sm:$0xff] 0.0
  %247 = vst [vmem:[%s242 + $0xf8] sm:$0xff] 0.0
  %248 = vst [vmem:[%s242 + $0x100] sm:$0x1] 0.0
  %249 = vst [vmem:[#allocation2 + $0x7] sm:$0x1] 0.0
  %250 = vst [vmem:[#allocation2 + $0x1f] sm:$0x1] 0.0
  %251 = vst [vmem:[#allocation2 + $0x37] sm:$0x1] 0.0
  %252 = vst [vmem:[#allocation2 + $0x4f] sm:$0x1] 0.0
  %253 = vst [vmem:[#allocation2 + $0x67] sm:$0x1] 0.0
  %254 = vst [vmem:[#allocation2 + $0x7f] sm:$0x1] 0.0
  %255 = vst [vmem:[#allocation2 + $0x97] sm:$0x1] 0.0
  %256 = vst [vmem:[#allocation2 + $0xaf] sm:$0x1] 0.0
  %257 = vst [vmem:[#allocation2 + $0xc7] sm:$0x1] 0.0
  %258 = vst [vmem:[#allocation2 + $0xdf] sm:$0x1] 0.0
  %259 = vst [vmem:[#allocation2 + $0xf7] sm:$0x1] 0.0
  %260 = vst [vmem:[#allocation2 + $0x10f] sm:$0x1] 0.0
  %261 = vst [vmem:[#allocation2 + $0x127] sm:$0x1] 0.0
  %262 = vst [vmem:[#allocation2 + $0x13f] sm:$0x1] 0.0
  %263 = vst [vmem:[#allocation2 + $0x157] sm:$0x1] 0.0
  %264 = vst [vmem:[#allocation2 + $0x16f] sm:$0x1] 0.0
  %265 = vst [vmem:[#allocation2 + $0x187] sm:$0x1] 0.0
  %266 = vst [vmem:[#allocation2 + $0x19f] sm:$0x1] 0.0
  %267 = vst [vmem:[#allocation2 + $0x1b7] sm:$0x1] 0.0
  %268 = vst [vmem:[#allocation2 + $0x1cf] sm:$0x1] 0.0
  %269 = vst [vmem:[#allocation2 + $0x10] sm:$0x1] 0.0
  %270 = vst [vmem:[#allocation2 + $0x28] sm:$0x1] 0.0
  %271 = vst [vmem:[#allocation2 + $0x40] sm:$0x1] 0.0
  %272 = vst [vmem:[#allocation2 + $0x58] sm:$0x1] 0.0
  %273 = vst [vmem:[#allocation2 + $0x70] sm:$0x1] 0.0
  %274 = vst [vmem:[#allocation2 + $0x88] sm:$0x1] 0.0
  %275 = vst [vmem:[#allocation2 + $0xa0] sm:$0x1] 0.0
  %276 = vst [vmem:[#allocation2 + $0xb8] sm:$0x1] 0.0
  %277 = vst [vmem:[#allocation2 + $0xd0] sm:$0x1] 0.0
  %278 = vst [vmem:[#allocation2 + $0xe8] sm:$0x1] 0.0
  %279 = vst [vmem:[#allocation2 + $0x100] sm:$0x1] 0.0
  %280 = vst [vmem:[#allocation2 + $0x118] sm:$0x1] 0.0
  %281 = vst [vmem:[#allocation2 + $0x130] sm:$0x1] 0.0
  %282 = vst [vmem:[#allocation2 + $0x148] sm:$0x1] 0.0
  %283 = vst [vmem:[#allocation2 + $0x160] sm:$0x1] 0.0
  %284 = vst [vmem:[#allocation2 + $0x178] sm:$0x1] 0.0
  %285 = vst [vmem:[#allocation2 + $0x190] sm:$0x1] 0.0
  %286 = vst [vmem:[#allocation2 + $0x1a8] sm:$0x1] 0.0
  %287 = vst [vmem:[#allocation2 + $0x1c0] sm:$0x1] 0.0
  %288 = vst [vmem:[#allocation2 + $0x1d8] sm:$0x1] 0.0
  %s289 = scalar_lea.vmem [#allocation2], 24
  %vm290 = vcmask 1047584
  %291 = vst.msk [vmem:[%s289 + $0x8] sm:$0xff] %vm290, 0.0
  %292 = vst.msk [vmem:[%s289 + $0x20] sm:$0xff] %vm290, 0.0
  %293 = vst.msk [vmem:[%s289 + $0x38] sm:$0xff] %vm290, 0.0
  %294 = vst.msk [vmem:[%s289 + $0x50] sm:$0xff] %vm290, 0.0
  %295 = vst.msk [vmem:[%s289 + $0x68] sm:$0xff] %vm290, 0.0
  %296 = vst.msk [vmem:[%s289 + $0x80] sm:$0xff] %vm290, 0.0
  %297 = vst.msk [vmem:[%s289 + $0x98] sm:$0xff] %vm290, 0.0
  %298 = vst.msk [vmem:[%s289 + $0xb0] sm:$0xff] %vm290, 0.0
  %299 = vst.msk [vmem:[%s289 + $0xf8] sm:$0xff] %vm290, 0.0
  %300 = vst.msk [vmem:[%s289 + $0x110] sm:$0xff] %vm290, 0.0
  %301 = vst.msk [vmem:[%s289 + $0x128] sm:$0xff] %vm290, 0.0
  %302 = vst.msk [vmem:[%s289 + $0x140] sm:$0xff] %vm290, 0.0
  %303 = vst.msk [vmem:[%s289 + $0x158] sm:$0xff] %vm290, 0.0
  %304 = vst.msk [vmem:[%s289 + $0x170] sm:$0xff] %vm290, 0.0
  %305 = vst.msk [vmem:[%s289 + $0x188] sm:$0xff] %vm290, 0.0
  %306 = vst.msk [vmem:[%s289 + $0x1a0] sm:$0xff] %vm290, 0.0
  %vm307 = vcmask 31744
  %308 = vst.msk [vmem:[%s289 + $0x8] sm:$0xff] %vm307, %v220
  %309 = vst.msk [vmem:[%s289 + $0x20] sm:$0xff] %vm307, %v221
  %310 = vst.msk [vmem:[%s289 + $0x38] sm:$0xff] %vm307, %v222
  %311 = vst.msk [vmem:[%s289 + $0x50] sm:$0xff] %vm307, %v223
  %312 = vst.msk [vmem:[%s289 + $0x68] sm:$0xff] %vm307, %v224
  %313 = vst.msk [vmem:[%s289 + $0x80] sm:$0xff] %vm307, %v225
  %314 = vst.msk [vmem:[%s289 + $0x98] sm:$0xff] %vm307, %v226
  %315 = vst.msk [vmem:[%s289 + $0xb0] sm:$0xff] %vm307, %v227
  %316 = vst.msk [vmem:[%s289 + $0xf8] sm:$0xff] %vm307, %v228
  %317 = vst.msk [vmem:[%s289 + $0x110] sm:$0xff] %vm307, %v229
  %318 = vst.msk [vmem:[%s289 + $0x128] sm:$0xff] %vm307, %v230
  %319 = vst.msk [vmem:[%s289 + $0x140] sm:$0xff] %vm307, %v231
  %320 = vst.msk [vmem:[%s289 + $0x158] sm:$0xff] %vm307, %v232
  %321 = vst.msk [vmem:[%s289 + $0x170] sm:$0xff] %vm307, %v233
  %322 = vst.msk [vmem:[%s289 + $0x188] sm:$0xff] %vm307, %v234
  %323 = vst.msk [vmem:[%s289 + $0x1a0] sm:$0xff] %vm307, %v235
  %v324 = vld [vmem:[#allocation2 + $0x7] sm:$0xff]
  %v325 = vld [vmem:[#allocation2 + $0x1f] sm:$0xff]
  %v326 = vld [vmem:[#allocation2 + $0x37] sm:$0xff]
  %v327 = vld [vmem:[#allocation2 + $0x4f] sm:$0xff]
  %v328 = vld [vmem:[#allocation2 + $0x67] sm:$0xff]
  %v329 = vld [vmem:[#allocation2 + $0x7f] sm:$0xff]
  %v330 = vld [vmem:[#allocation2 + $0x97] sm:$0xff]
  %v331 = vld [vmem:[#allocation2 + $0xaf] sm:$0xff]
  %v332 = vld [vmem:[#allocation2 + $0xc7] sm:$0xff]
  %v333 = vld [vmem:[#allocation2 + $0xdf] sm:$0xff]
  %v334 = vld [vmem:[#allocation2 + $0xf7] sm:$0xff]
  %v335 = vld [vmem:[#allocation2 + $0x10f] sm:$0xff]
  %v336 = vld [vmem:[#allocation2 + $0x127] sm:$0xff]
  %v337 = vld [vmem:[#allocation2 + $0x13f] sm:$0xff]
  %v338 = vld [vmem:[#allocation2 + $0x157] sm:$0xff]
  %v339 = vld [vmem:[#allocation2 + $0x16f] sm:$0xff]
  %v340 = vld [vmem:[#allocation2 + $0x187] sm:$0xff]
  %v341 = vld [vmem:[#allocation2 + $0x19f] sm:$0xff]
  %v342 = vld [vmem:[#allocation2 + $0x1b7] sm:$0xff]
  %v343 = vld [vmem:[#allocation2 + $0x1cf] sm:$0xff]
  %v344 = vld [vmem:[#allocation2 + $0x8] sm:$0xff]
  %v345 = vld [vmem:[#allocation2 + $0x20] sm:$0xff]
  %v346 = vld [vmem:[#allocation2 + $0x38] sm:$0xff]
  %v347 = vld [vmem:[#allocation2 + $0x50] sm:$0xff]
  %v348 = vld [vmem:[#allocation2 + $0x68] sm:$0xff]
  %v349 = vld [vmem:[#allocation2 + $0x80] sm:$0xff]
  %v350 = vld [vmem:[#allocation2 + $0x98] sm:$0xff]
  %v351 = vld [vmem:[#allocation2 + $0xb0] sm:$0xff]
  %v352 = vld [vmem:[#allocation2 + $0xc8] sm:$0xff]
  %v353 = vld [vmem:[#allocation2 + $0xe0] sm:$0xff]
  %v354 = vld [vmem:[#allocation2 + $0xf8] sm:$0xff]
  %v355 = vld [vmem:[#allocation2 + $0x110] sm:$0xff]
  %v356 = vld [vmem:[#allocation2 + $0x128] sm:$0xff]
  %v357 = vld [vmem:[#allocation2 + $0x140] sm:$0xff]
  %v358 = vld [vmem:[#allocation2 + $0x158] sm:$0xff]
  %v359 = vld [vmem:[#allocation2 + $0x170] sm:$0xff]
  %v360 = vld [vmem:[#allocation2 + $0x188] sm:$0xff]
  %v361 = vld [vmem:[#allocation2 + $0x1a0] sm:$0xff]
  %v362 = vld [vmem:[#allocation2 + $0x1b8] sm:$0xff]
  %v363 = vld [vmem:[#allocation2 + $0x1d0] sm:$0xff]
  %v364 = vld [vmem:[#allocation2 + $0x9] sm:$0xff]
  %v365 = vld [vmem:[#allocation2 + $0x21] sm:$0xff]
  %v366 = vld [vmem:[#allocation2 + $0x39] sm:$0xff]
  %v367 = vld [vmem:[#allocation2 + $0x51] sm:$0xff]
  %v368 = vld [vmem:[#allocation2 + $0x69] sm:$0xff]
  %v369 = vld [vmem:[#allocation2 + $0x81] sm:$0xff]
  %v370 = vld [vmem:[#allocation2 + $0x99] sm:$0xff]
  %v371 = vld [vmem:[#allocation2 + $0xb1] sm:$0xff]
  %v372 = vld [vmem:[#allocation2 + $0xc9] sm:$0xff]
  %v373 = vld [vmem:[#allocation2 + $0xe1] sm:$0xff]
  %v374 = vld [vmem:[#allocation2 + $0xf9] sm:$0xff]
  %v375 = vld [vmem:[#allocation2 + $0x111] sm:$0xff]
  %v376 = vld [vmem:[#allocation2 + $0x129] sm:$0xff]
  %v377 = vld [vmem:[#allocation2 + $0x141] sm:$0xff]
  %v378 = vld [vmem:[#allocation2 + $0x159] sm:$0xff]
  %v379 = vld [vmem:[#allocation2 + $0x171] sm:$0xff]
  %v380 = vld [vmem:[#allocation2 + $0x189] sm:$0xff]
  %v381 = vld [vmem:[#allocation2 + $0x1a1] sm:$0xff]
  %v382 = vld [vmem:[#allocation2 + $0x1b9] sm:$0xff]
  %v383 = vld [vmem:[#allocation2 + $0x1d1] sm:$0xff]
  %v384 = vpack.c.bf16 %v325, %v324
  %v385 = vpack.c.bf16 %v345, %v344
  %v386 = vpack.c.bf16 %v365, %v364
  %v387 = vpack.c.bf16 %v327, %v326
  %v388 = vpack.c.bf16 %v347, %v346
  %v389 = vpack.c.bf16 %v367, %v366
  %v390 = vpack.c.bf16 %v329, %v328
  %v391 = vpack.c.bf16 %v349, %v348
  %v392 = vpack.c.bf16 %v369, %v368
  %v393 = vpack.c.bf16 %v331, %v330
  %v394 = vpack.c.bf16 %v351, %v350
  %v395 = vpack.c.bf16 %v371, %v370
  %v396 = vpack.c.bf16 %v335, %v334
  %v397 = vpack.c.bf16 %v355, %v354
  %v398 = vpack.c.bf16 %v375, %v374
  %v399 = vpack.c.bf16 %v337, %v336
  %v400 = vpack.c.bf16 %v357, %v356
  %v401 = vpack.c.bf16 %v377, %v376
  %v402 = vpack.c.bf16 %v339, %v338
  %v403 = vpack.c.bf16 %v359, %v358
  %v404 = vpack.c.bf16 %v379, %v378
  %v405 = vpack.c.bf16 %v341, %v340
  %v406 = vpack.c.bf16 %v361, %v360
  %v407 = vpack.c.bf16 %v381, %v380
  %v408 = vld [vmem:[%s1] sm:$0xf]
  %v409 = vld [vmem:[%s1 + $0x4] sm:$0xf]
  %v410 = vld [vmem:[%s1 + $0x8] sm:$0xf]
  %v411 = vld [vmem:[%s1 + $0xc] sm:$0xf]
  %v412 = vld [vmem:[%s1 + $0x10] sm:$0xf]
  %v413 = vld [vmem:[%s1 + $0x14] sm:$0xf]
  %v414 = vld [vmem:[%s1 + $0x18] sm:$0xf]
  %v415 = vld [vmem:[%s1 + $0x1c] sm:$0xf]
  %v416 = vld [vmem:[%s1 + $0x20] sm:$0xf]
  %v417 = vld [vmem:[%s1 + $0x24] sm:$0xf]
  %v418 = vld [vmem:[%s1 + $0x28] sm:$0xf]
  %v419 = vld [vmem:[%s1 + $0x2c] sm:$0xf]
  %v420 = vld [vmem:[%s1 + $0x30] sm:$0xf]
  %v421 = vld [vmem:[%s1 + $0x34] sm:$0xf]
  %v422 = vld [vmem:[%s1 + $0x38] sm:$0xf]
  %v423 = vld [vmem:[%s1 + $0x3c] sm:$0xf]
  %v424 = vld [vmem:[%s1 + $0x40] sm:$0xf]
  %v425 = vld [vmem:[%s1 + $0x44] sm:$0xf]
  %v426 = vld [vmem:[%s1 + $0x48] sm:$0xf]
  %v427 = vld [vmem:[%s1 + $0x4c] sm:$0xf]
  %v428 = vld [vmem:[%s1 + $0x50] sm:$0xf]
  %v429 = vld [vmem:[%s1 + $0x54] sm:$0xf]
  %v430 = vld [vmem:[%s1 + $0x58] sm:$0xf]
  %v431 = vld [vmem:[%s1 + $0x5c] sm:$0xf]
  %v432 = vld [vmem:[%s1 + $0x60] sm:$0xf]
  %v433 = vld [vmem:[%s1 + $0x64] sm:$0xf]
  %v434 = vld [vmem:[%s1 + $0x68] sm:$0xf]
  %v435 = vld [vmem:[%s1 + $0x6c] sm:$0xf]
  %v436 = vld [vmem:[%s1 + $0x70] sm:$0xf]
  %v437 = vld [vmem:[%s1 + $0x74] sm:$0xf]
  %v438 = vld [vmem:[%s1 + $0x78] sm:$0xf]
  %v439 = vld [vmem:[%s1 + $0x7c] sm:$0xf]
  %v440 = vld [vmem:[%s1 + $0x80] sm:$0xf]
  %v441 = vld [vmem:[%s1 + $0x84] sm:$0xf]
  %v442 = vld [vmem:[%s1 + $0x88] sm:$0xf]
  %v443 = vld [vmem:[%s1 + $0x8c] sm:$0xf]
  %v444 = vld [vmem:[%s1 + $0x90] sm:$0xf]
  %v445 = vld [vmem:[%s1 + $0x94] sm:$0xf]
  %v446 = vld [vmem:[%s1 + $0x98] sm:$0xf]
  %v447 = vld [vmem:[%s1 + $0x9c] sm:$0xf]
  %v448 = vld [vmem:[%s1 + $0xa0] sm:$0xf]
  %v449 = vld [vmem:[%s1 + $0xa4] sm:$0xf]
  %v450 = vld [vmem:[%s1 + $0xa8] sm:$0xf]
  %v451 = vld [vmem:[%s1 + $0xac] sm:$0xf]
  %v452 = vld [vmem:[%s1 + $0xb0] sm:$0xf]
  %v453 = vld [vmem:[%s1 + $0xb4] sm:$0xf]
  %v454 = vld [vmem:[%s1 + $0xb8] sm:$0xf]
  %v455 = vld [vmem:[%s1 + $0xbc] sm:$0xf]
  %v456 = vpack.c.bf16 %v326, %v325
  %v457 = vpack.c.bf16 %v346, %v345
  %v458 = vpack.c.bf16 %v366, %v365
  %v459 = vpack.c.bf16 %v328, %v327
  %v460 = vpack.c.bf16 %v348, %v347
  %v461 = vpack.c.bf16 %v368, %v367
  %v462 = vpack.c.bf16 %v330, %v329
  %v463 = vpack.c.bf16 %v350, %v349
  %v464 = vpack.c.bf16 %v370, %v369
  %v465 = vpack.c.bf16 %v332, %v331
  %v466 = vpack.c.bf16 %v352, %v351
  %v467 = vpack.c.bf16 %v372, %v371
  %v468 = vpack.c.bf16 %v336, %v335
  %v469 = vpack.c.bf16 %v356, %v355
  %v470 = vpack.c.bf16 %v376, %v375
  %v471 = vpack.c.bf16 %v338, %v337
  %v472 = vpack.c.bf16 %v358, %v357
  %v473 = vpack.c.bf16 %v378, %v377
  %v474 = vpack.c.bf16 %v340, %v339
  %v475 = vpack.c.bf16 %v360, %v359
  %v476 = vpack.c.bf16 %v380, %v379
  %v477 = vpack.c.bf16 %v342, %v341
  %v478 = vpack.c.bf16 %v362, %v361
  %v479 = vpack.c.bf16 %v382, %v381
  %s480 = scalar_lea.vmem %s1, 192
  %v481 = vld [vmem:[%s480] sm:$0xf]
  %v482 = vld [vmem:[%s480 + $0x4] sm:$0xf]
  %v483 = vld [vmem:[%s480 + $0x8] sm:$0xf]
  %v484 = vld [vmem:[%s480 + $0xc] sm:$0xf]
  %v485 = vld [vmem:[%s480 + $0x10] sm:$0xf]
  %v486 = vld [vmem:[%s480 + $0x14] sm:$0xf]
  %v487 = vld [vmem:[%s480 + $0x18] sm:$0xf]
  %v488 = vld [vmem:[%s480 + $0x1c] sm:$0xf]
  %v489 = vld [vmem:[%s480 + $0x20] sm:$0xf]
  %v490 = vld [vmem:[%s480 + $0x24] sm:$0xf]
  %v491 = vld [vmem:[%s480 + $0x28] sm:$0xf]
  %v492 = vld [vmem:[%s480 + $0x2c] sm:$0xf]
  %v493 = vld [vmem:[%s480 + $0x30] sm:$0xf]
  %v494 = vld [vmem:[%s480 + $0x34] sm:$0xf]
  %v495 = vld [vmem:[%s480 + $0x38] sm:$0xf]
  %v496 = vld [vmem:[%s480 + $0x3c] sm:$0xf]
  %v497 = vld [vmem:[%s480 + $0x40] sm:$0xf]
  %v498 = vld [vmem:[%s480 + $0x44] sm:$0xf]
  %v499 = vld [vmem:[%s480 + $0x48] sm:$0xf]
  %v500 = vld [vmem:[%s480 + $0x4c] sm:$0xf]
  %v501 = vld [vmem:[%s480 + $0x50] sm:$0xf]
  %v502 = vld [vmem:[%s480 + $0x54] sm:$0xf]
  %v503 = vld [vmem:[%s480 + $0x58] sm:$0xf]
  %v504 = vld [vmem:[%s480 + $0x5c] sm:$0xf]
  %v505 = vld [vmem:[%s480 + $0x60] sm:$0xf]
  %v506 = vld [vmem:[%s480 + $0x64] sm:$0xf]
  %v507 = vld [vmem:[%s480 + $0x68] sm:$0xf]
  %v508 = vld [vmem:[%s480 + $0x6c] sm:$0xf]
  %v509 = vld [vmem:[%s480 + $0x70] sm:$0xf]
  %v510 = vld [vmem:[%s480 + $0x74] sm:$0xf]
  %v511 = vld [vmem:[%s480 + $0x78] sm:$0xf]
  %v512 = vld [vmem:[%s480 + $0x7c] sm:$0xf]
  %v513 = vld [vmem:[%s480 + $0x80] sm:$0xf]
  %v514 = vld [vmem:[%s480 + $0x84] sm:$0xf]
  %v515 = vld [vmem:[%s480 + $0x88] sm:$0xf]
  %v516 = vld [vmem:[%s480 + $0x8c] sm:$0xf]
  %v517 = vld [vmem:[%s480 + $0x90] sm:$0xf]
  %v518 = vld [vmem:[%s480 + $0x94] sm:$0xf]
  %v519 = vld [vmem:[%s480 + $0x98] sm:$0xf]
  %v520 = vld [vmem:[%s480 + $0x9c] sm:$0xf]
  %v521 = vld [vmem:[%s480 + $0xa0] sm:$0xf]
  %v522 = vld [vmem:[%s480 + $0xa4] sm:$0xf]
  %v523 = vld [vmem:[%s480 + $0xa8] sm:$0xf]
  %v524 = vld [vmem:[%s480 + $0xac] sm:$0xf]
  %v525 = vld [vmem:[%s480 + $0xb0] sm:$0xf]
  %v526 = vld [vmem:[%s480 + $0xb4] sm:$0xf]
  %v527 = vld [vmem:[%s480 + $0xb8] sm:$0xf]
  %v528 = vld [vmem:[%s480 + $0xbc] sm:$0xf]
  %v577 = vunpack.c.l.b16 %v481
  %v578 = vunpack.c.l.b16 %v482
  %v579 = vunpack.c.l.b16 %v483
  %v580 = vunpack.c.l.b16 %v484
  %v581 = vunpack.c.l.b16 %v485
  %v582 = vunpack.c.l.b16 %v486
  %v583 = vunpack.c.l.b16 %v487
  %v584 = vunpack.c.l.b16 %v488
  %v585 = vunpack.c.l.b16 %v489
  %v586 = vunpack.c.l.b16 %v490
  %v587 = vunpack.c.l.b16 %v491
  %v588 = vunpack.c.l.b16 %v492
  %v589 = vunpack.c.l.b16 %v493
  %v590 = vunpack.c.l.b16 %v494
  %v591 = vunpack.c.l.b16 %v495
  %v592 = vunpack.c.l.b16 %v496
  %v593 = vunpack.c.l.b16 %v497
  %v594 = vunpack.c.l.b16 %v498
  %v595 = vunpack.c.l.b16 %v499
  %v596 = vunpack.c.l.b16 %v500
  %v597 = vunpack.c.l.b16 %v501
  %v598 = vunpack.c.l.b16 %v502
  %v599 = vunpack.c.l.b16 %v503
  %v600 = vunpack.c.l.b16 %v504
  %v601 = vunpack.c.l.b16 %v505
  %v602 = vunpack.c.l.b16 %v506
  %v603 = vunpack.c.l.b16 %v507
  %v604 = vunpack.c.l.b16 %v508
  %v605 = vunpack.c.l.b16 %v509
  %v606 = vunpack.c.l.b16 %v510
  %v607 = vunpack.c.l.b16 %v511
  %v608 = vunpack.c.l.b16 %v512
  %v609 = vunpack.c.l.b16 %v513
  %v610 = vunpack.c.l.b16 %v514
  %v611 = vunpack.c.l.b16 %v515
  %v612 = vunpack.c.l.b16 %v516
  %v613 = vunpack.c.l.b16 %v517
  %v614 = vunpack.c.l.b16 %v518
  %v615 = vunpack.c.l.b16 %v519
  %v616 = vunpack.c.l.b16 %v520
  %v617 = vunpack.c.l.b16 %v521
  %v618 = vunpack.c.l.b16 %v522
  %v619 = vunpack.c.l.b16 %v523
  %v620 = vunpack.c.l.b16 %v524
  %v621 = vunpack.c.l.b16 %v525
  %v622 = vunpack.c.l.b16 %v526
  %v623 = vunpack.c.l.b16 %v527
  %v624 = vunpack.c.l.b16 %v528
  %v625 = vpack.c.b16 %v578, %v577
  %v626 = vpack.c.b16 %v580, %v579
  %v627 = vpack.c.b16 %v582, %v581
  %v628 = vpack.c.b16 %v584, %v583
  %v629 = vpack.c.b16 %v586, %v585
  %v630 = vpack.c.b16 %v588, %v587
  %v631 = vpack.c.b16 %v590, %v589
  %v632 = vpack.c.b16 %v592, %v591
  %v633 = vpack.c.b16 %v594, %v593
  %v634 = vpack.c.b16 %v596, %v595
  %v635 = vpack.c.b16 %v598, %v597
  %v636 = vpack.c.b16 %v600, %v599
  %v637 = vpack.c.b16 %v602, %v601
  %v638 = vpack.c.b16 %v604, %v603
  %v639 = vpack.c.b16 %v606, %v605
  %v640 = vpack.c.b16 %v608, %v607
  %v641 = vpack.c.b16 %v610, %v609
  %v642 = vpack.c.b16 %v612, %v611
  %v643 = vpack.c.b16 %v614, %v613
  %v644 = vpack.c.b16 %v616, %v615
  %v645 = vpack.c.b16 %v618, %v617
  %v646 = vpack.c.b16 %v620, %v619
  %v647 = vpack.c.b16 %v622, %v621
  %v648 = vpack.c.b16 %v624, %v623
  %673 = vmatprep.subr.bf16.mxu0 0
  %674 = vmatpush1.bf16.msra.mxu0 %v625
  %675 = vmatprep.subr.bf16.mxu0 0
  %676 = vmatpush1.bf16.msra.mxu0 %v626
  %677 = vmatprep.subr.bf16.mxu0 0
  %678 = vmatpush1.bf16.msra.mxu0 %v627
  %679 = vmatprep.subr.bf16.mxu0 0
  %680 = vmatpush1.bf16.msra.mxu0 %v628
  %681 = vmatprep.subr.bf16.mxu0 0
  %682 = vmatpush1.bf16.msra.mxu0 %v629
  %683 = vmatprep.subr.bf16.mxu0 0
  %684 = vmatpush1.bf16.msra.mxu0 %v630
  %685 = vmatprep.subr.bf16.mxu0 0
  %686 = vmatpush1.bf16.msra.mxu0 %v631
  %687 = vmatprep.subr.bf16.mxu0 0
  %688 = vmatpush1.bf16.msra.mxu0 %v632
  %689 = vmatprep.subr.bf16.mxu0 0
  %690 = vmatpush1.bf16.msra.mxu0 %v633
  %691 = vmatprep.subr.bf16.mxu0 0
  %692 = vmatpush1.bf16.msra.mxu0 %v634
  %693 = vmatprep.subr.bf16.mxu0 0
  %694 = vmatpush1.bf16.msra.mxu0 %v635
  %695 = vmatprep.subr.bf16.mxu0 0
  %696 = vmatpush1.bf16.msra.mxu0 %v636
  %697 = vmatprep.subr.bf16.mxu0 0
  %698 = vmatpush1.bf16.msra.mxu0 %v637
  %699 = vmatprep.subr.bf16.mxu0 0
  %700 = vmatpush1.bf16.msra.mxu0 %v638
  %701 = vmatprep.subr.bf16.mxu0 0
  %702 = vmatpush1.bf16.msra.mxu0 %v639
  %703 = vmatprep.subr.bf16.mxu0 0
  %704 = vmatpush1.bf16.msra.mxu0 %v640
  %705 = vmatprep.mubr.bf16.mxu0 %v457
  %706 = vmatmul.mubr.bf16.gmra.mrb[0].mxu0 %v456
  %v707 = vpop.f32.mrb[0].mxu0
  %v708 = vadd.f32 0.0, %v707
  %v709 = vpop.f32.mrb[0].mxu0
  %v710 = vpop.f32.mrb[0].mxu0
  %v711 = vadd.f32 0.0, %v710
  %v712 = vpop.f32.mrb[0].mxu0
  %713 = vmatprep.mubr.bf16.mxu0 %v460
  %714 = vmatmul.mubr.bf16.gmra.mrb[0].mxu0 %v459
  %v715 = vpop.f32.mrb[0].mxu0
  %v716 = vadd.f32 0.0, %v715
  %v717 = vpop.f32.mrb[0].mxu0
  %v718 = vpop.f32.mrb[0].mxu0
  %v719 = vadd.f32 0.0, %v718
  %v720 = vpop.f32.mrb[0].mxu0
  %721 = vmatprep.mubr.bf16.mxu0 %v463
  %722 = vmatmul.mubr.bf16.gmra.mrb[0].mxu0 %v462
  %v723 = vpop.f32.mrb[0].mxu0
  %v724 = vadd.f32 0.0, %v723
  %v725 = vpop.f32.mrb[0].mxu0
  %v726 = vpop.f32.mrb[0].mxu0
  %v727 = vadd.f32 0.0, %v726
  %v728 = vpop.f32.mrb[0].mxu0
  %729 = vmatprep.mubr.bf16.mxu0 %v466
  %730 = vmatmul.mubr.bf16.gmra.mrb[0].mxu0 %v465
  %v731 = vpop.f32.mrb[0].mxu0
  %v732 = vadd.f32 0.0, %v731
  %v733 = vpop.f32.mrb[0].mxu0
  %v734 = vpop.f32.mrb[0].mxu0
  %v735 = vadd.f32 0.0, %v734
  %v736 = vpop.f32.mrb[0].mxu0
  %737 = vmatprep.mubr.bf16.mxu0 %v469
  %738 = vmatmul.mubr.bf16.gmra.mrb[0].mxu0 %v468
  %v739 = vpop.f32.mrb[0].mxu0
  %v740 = vadd.f32 0.0, %v739
  %v741 = vpop.f32.mrb[0].mxu0
  %v742 = vpop.f32.mrb[0].mxu0
  %v743 = vadd.f32 0.0, %v742
  %v744 = vpop.f32.mrb[0].mxu0
  %745 = vmatprep.mubr.bf16.mxu0 %v472
  %746 = vmatmul.mubr.bf16.gmra.mrb[0].mxu0 %v471
  %v747 = vpop.f32.mrb[0].mxu0
  %v748 = vadd.f32 0.0, %v747
  %v749 = vpop.f32.mrb[0].mxu0
  %v750 = vpop.f32.mrb[0].mxu0
  %v751 = vadd.f32 0.0, %v750
  %v752 = vpop.f32.mrb[0].mxu0
  %753 = vmatprep.mubr.bf16.mxu0 %v475
  %754 = vmatmul.mubr.bf16.gmra.mrb[0].mxu0 %v474
  %v755 = vpop.f32.mrb[0].mxu0
  %v756 = vadd.f32 0.0, %v755
  %v757 = vpop.f32.mrb[0].mxu0
  %v758 = vpop.f32.mrb[0].mxu0
  %v759 = vadd.f32 0.0, %v758
  %v760 = vpop.f32.mrb[0].mxu0
  %761 = vmatprep.mubr.bf16.mxu0 %v478
  %762 = vmatmul.mubr.bf16.gmra.mrb[0].mxu0 %v477
  %v763 = vpop.f32.mrb[0].mxu0
  %v764 = vadd.f32 0.0, %v763
  %v765 = vpop.f32.mrb[0].mxu0
  %v766 = vpop.f32.mrb[0].mxu0
  %v767 = vadd.f32 0.0, %v766
  %v768 = vpop.f32.mrb[0].mxu0
  %769 = vdwg.mxu0
  %770 = vmatprep.subr.bf16.mxu0 0
  %771 = vmatpush1.bf16.msra.mxu0 %v641
  %772 = vmatprep.subr.bf16.mxu0 0
  %773 = vmatpush1.bf16.msra.mxu0 %v642
  %774 = vmatprep.subr.bf16.mxu0 0
  %775 = vmatpush1.bf16.msra.mxu0 %v643
  %776 = vmatprep.subr.bf16.mxu0 0
  %777 = vmatpush1.bf16.msra.mxu0 %v644
  %778 = vmatprep.subr.bf16.mxu0 0
  %779 = vmatpush1.bf16.msra.mxu0 %v645
  %780 = vmatprep.subr.bf16.mxu0 0
  %781 = vmatpush1.bf16.msra.mxu0 %v646
  %782 = vmatprep.subr.bf16.mxu0 0
  %783 = vmatpush1.bf16.msra.mxu0 %v647
  %784 = vmatprep.subr.bf16.mxu0 0
  %785 = vmatpush1.bf16.msra.mxu0 %v648
  %786 = vmatprep.subr.bf16.mxu0 0
  %787 = vmatpush1.bf16.msra.mxu0 0
  %788 = vmatprep.subr.bf16.mxu0 0
  %789 = vmatpush1.bf16.msra.mxu0 0
  %790 = vmatprep.subr.bf16.mxu0 0
  %791 = vmatpush1.bf16.msra.mxu0 0
  %792 = vmatprep.subr.bf16.mxu0 0
  %793 = vmatpush1.bf16.msra.mxu0 0
  %794 = vmatprep.subr.bf16.mxu0 0
  %795 = vmatpush1.bf16.msra.mxu0 0
  %796 = vmatprep.subr.bf16.mxu0 0
  %797 = vmatpush1.bf16.msra.mxu0 0
  %798 = vmatprep.subr.bf16.mxu0 0
  %799 = vmatpush1.bf16.msra.mxu0 0
  %800 = vmatprep.subr.bf16.mxu0 0
  %801 = vmatpush1.bf16.msra.mxu0 0
  %802 = vmatprep.mubr.bf16.mxu0 0
  %803 = vmatmul.mubr.bf16.gmra.mrb[0].mxu0 %v458
  %v804 = vpop.f32.mrb[0].mxu0
  %v805 = vadd.f32 %v708, %v804
  %v806 = vpop.f32.mrb[0].mxu0
  %v807 = vpop.f32.mrb[0].mxu0
  %v808 = vadd.f32 %v711, %v807
  %v809 = vpop.f32.mrb[0].mxu0
  %810 = vmatprep.mubr.bf16.mxu0 0
  %811 = vmatmul.mubr.bf16.gmra.mrb[0].mxu0 %v461
  %v812 = vpop.f32.mrb[0].mxu0
  %v813 = vadd.f32 %v716, %v812
  %v814 = vpop.f32.mrb[0].mxu0
  %v815 = vpop.f32.mrb[0].mxu0
  %v816 = vadd.f32 %v719, %v815
  %v817 = vpop.f32.mrb[0].mxu0
  %818 = vmatprep.mubr.bf16.mxu0 0
  %819 = vmatmul.mubr.bf16.gmra.mrb[0].mxu0 %v464
  %v820 = vpop.f32.mrb[0].mxu0
  %v821 = vadd.f32 %v724, %v820
  %v822 = vpop.f32.mrb[0].mxu0
  %v823 = vpop.f32.mrb[0].mxu0
  %v824 = vadd.f32 %v727, %v823
  %v825 = vpop.f32.mrb[0].mxu0
  %826 = vmatprep.mubr.bf16.mxu0 0
  %827 = vmatmul.mubr.bf16.gmra.mrb[0].mxu0 %v467
  %v828 = vpop.f32.mrb[0].mxu0
  %v829 = vadd.f32 %v732, %v828
  %v830 = vpop.f32.mrb[0].mxu0
  %v831 = vpop.f32.mrb[0].mxu0
  %v832 = vadd.f32 %v735, %v831
  %v833 = vpop.f32.mrb[0].mxu0
  %834 = vmatprep.mubr.bf16.mxu0 0
  %835 = vmatmul.mubr.bf16.gmra.mrb[0].mxu0 %v470
  %v836 = vpop.f32.mrb[0].mxu0
  %v837 = vadd.f32 %v740, %v836
  %v838 = vpop.f32.mrb[0].mxu0
  %v839 = vpop.f32.mrb[0].mxu0
  %v840 = vadd.f32 %v743, %v839
  %v841 = vpop.f32.mrb[0].mxu0
  %842 = vmatprep.mubr.bf16.mxu0 0
  %843 = vmatmul.mubr.bf16.gmra.mrb[0].mxu0 %v473
  %v844 = vpop.f32.mrb[0].mxu0
  %v845 = vadd.f32 %v748, %v844
  %v846 = vpop.f32.mrb[0].mxu0
  %v847 = vpop.f32.mrb[0].mxu0
  %v848 = vadd.f32 %v751, %v847
  %v849 = vpop.f32.mrb[0].mxu0
  %850 = vmatprep.mubr.bf16.mxu0 0
  %851 = vmatmul.mubr.bf16.gmra.mrb[0].mxu0 %v476
  %v852 = vpop.f32.mrb[0].mxu0
  %v853 = vadd.f32 %v756, %v852
  %v854 = vpop.f32.mrb[0].mxu0
  %v855 = vpop.f32.mrb[0].mxu0
  %v856 = vadd.f32 %v759, %v855
  %v857 = vpop.f32.mrb[0].mxu0
  %858 = vmatprep.mubr.bf16.mxu0 0
  %859 = vmatmul.mubr.bf16.gmra.mrb[0].mxu0 %v479
  %v860 = vpop.f32.mrb[0].mxu0
  %v861 = vadd.f32 %v764, %v860
  %v862 = vpop.f32.mrb[0].mxu0
  %v863 = vpop.f32.mrb[0].mxu0
  %v864 = vadd.f32 %v767, %v863
  %v865 = vpop.f32.mrb[0].mxu0
  %866 = vdwg.mxu0
  %v915 = vunpack.c.l.b16 %v408
  %v916 = vunpack.c.l.b16 %v409
  %v917 = vunpack.c.l.b16 %v410
  %v918 = vunpack.c.l.b16 %v411
  %v919 = vunpack.c.l.b16 %v412
  %v920 = vunpack.c.l.b16 %v413
  %v921 = vunpack.c.l.b16 %v414
  %v922 = vunpack.c.l.b16 %v415
  %v923 = vunpack.c.l.b16 %v416
  %v924 = vunpack.c.l.b16 %v417
  %v925 = vunpack.c.l.b16 %v418
  %v926 = vunpack.c.l.b16 %v419
  %v927 = vunpack.c.l.b16 %v420
  %v928 = vunpack.c.l.b16 %v421
  %v929 = vunpack.c.l.b16 %v422
  %v930 = vunpack.c.l.b16 %v423
  %v931 = vunpack.c.l.b16 %v424
  %v932 = vunpack.c.l.b16 %v425
  %v933 = vunpack.c.l.b16 %v426
  %v934 = vunpack.c.l.b16 %v427
  %v935 = vunpack.c.l.b16 %v428
  %v936 = vunpack.c.l.b16 %v429
  %v937 = vunpack.c.l.b16 %v430
  %v938 = vunpack.c.l.b16 %v431
  %v939 = vunpack.c.l.b16 %v432
  %v940 = vunpack.c.l.b16 %v433
  %v941 = vunpack.c.l.b16 %v434
  %v942 = vunpack.c.l.b16 %v435
  %v943 = vunpack.c.l.b16 %v436
  %v944 = vunpack.c.l.b16 %v437
  %v945 = vunpack.c.l.b16 %v438
  %v946 = vunpack.c.l.b16 %v439
  %v947 = vunpack.c.l.b16 %v440
  %v948 = vunpack.c.l.b16 %v441
  %v949 = vunpack.c.l.b16 %v442
  %v950 = vunpack.c.l.b16 %v443
  %v951 = vunpack.c.l.b16 %v444
  %v952 = vunpack.c.l.b16 %v445
  %v953 = vunpack.c.l.b16 %v446
  %v954 = vunpack.c.l.b16 %v447
  %v955 = vunpack.c.l.b16 %v448
  %v956 = vunpack.c.l.b16 %v449
  %v957 = vunpack.c.l.b16 %v450
  %v958 = vunpack.c.l.b16 %v451
  %v959 = vunpack.c.l.b16 %v452
  %v960 = vunpack.c.l.b16 %v453
  %v961 = vunpack.c.l.b16 %v454
  %v962 = vunpack.c.l.b16 %v455
  %v963 = vpack.c.b16 %v916, %v915
  %v964 = vpack.c.b16 %v918, %v917
  %v965 = vpack.c.b16 %v920, %v919
  %v966 = vpack.c.b16 %v922, %v921
  %v967 = vpack.c.b16 %v924, %v923
  %v968 = vpack.c.b16 %v926, %v925
  %v969 = vpack.c.b16 %v928, %v927
  %v970 = vpack.c.b16 %v930, %v929
  %v971 = vpack.c.b16 %v932, %v931
  %v972 = vpack.c.b16 %v934, %v933
  %v973 = vpack.c.b16 %v936, %v935
  %v974 = vpack.c.b16 %v938, %v937
  %v975 = vpack.c.b16 %v940, %v939
  %v976 = vpack.c.b16 %v942, %v941
  %v977 = vpack.c.b16 %v944, %v943
  %v978 = vpack.c.b16 %v946, %v945
  %v979 = vpack.c.b16 %v948, %v947
  %v980 = vpack.c.b16 %v950, %v949
  %v981 = vpack.c.b16 %v952, %v951
  %v982 = vpack.c.b16 %v954, %v953
  %v983 = vpack.c.b16 %v956, %v955
  %v984 = vpack.c.b16 %v958, %v957
  %v985 = vpack.c.b16 %v960, %v959
  %v986 = vpack.c.b16 %v962, %v961
  %1011 = vmatprep.subr.bf16.mxu0 0
  %1012 = vmatpush1.bf16.msra.mxu0 %v963
  %1013 = vmatprep.subr.bf16.mxu0 0
  %1014 = vmatpush1.bf16.msra.mxu0 %v964
  %1015 = vmatprep.subr.bf16.mxu0 0
  %1016 = vmatpush1.bf16.msra.mxu0 %v965
  %1017 = vmatprep.subr.bf16.mxu0 0
  %1018 = vmatpush1.bf16.msra.mxu0 %v966
  %1019 = vmatprep.subr.bf16.mxu0 0
  %1020 = vmatpush1.bf16.msra.mxu0 %v967
  %1021 = vmatprep.subr.bf16.mxu0 0
  %1022 = vmatpush1.bf16.msra.mxu0 %v968
  %1023 = vmatprep.subr.bf16.mxu0 0
  %1024 = vmatpush1.bf16.msra.mxu0 %v969
  %1025 = vmatprep.subr.bf16.mxu0 0
  %1026 = vmatpush1.bf16.msra.mxu0 %v970
  %1027 = vmatprep.subr.bf16.mxu0 0
  %1028 = vmatpush1.bf16.msra.mxu0 %v971
  %1029 = vmatprep.subr.bf16.mxu0 0
  %1030 = vmatpush1.bf16.msra.mxu0 %v972
  %1031 = vmatprep.subr.bf16.mxu0 0
  %1032 = vmatpush1.bf16.msra.mxu0 %v973
  %1033 = vmatprep.subr.bf16.mxu0 0
  %1034 = vmatpush1.bf16.msra.mxu0 %v974
  %1035 = vmatprep.subr.bf16.mxu0 0
  %1036 = vmatpush1.bf16.msra.mxu0 %v975
  %1037 = vmatprep.subr.bf16.mxu0 0
  %1038 = vmatpush1.bf16.msra.mxu0 %v976
  %1039 = vmatprep.subr.bf16.mxu0 0
  %1040 = vmatpush1.bf16.msra.mxu0 %v977
  %1041 = vmatprep.subr.bf16.mxu0 0
  %1042 = vmatpush1.bf16.msra.mxu0 %v978
  %1043 = vmatprep.mubr.bf16.mxu0 %v385
  %1044 = vmatmul.mubr.bf16.gmra.mrb[0].mxu0 %v384
  %v1045 = vpop.f32.mrb[0].mxu0
  %v1046 = vadd.f32 %v805, %v1045
  %v1047 = vpop.f32.mrb[0].mxu0
  %v1048 = vpop.f32.mrb[0].mxu0
  %v1049 = vadd.f32 %v808, %v1048
  %v1050 = vpop.f32.mrb[0].mxu0
  %1051 = vmatprep.mubr.bf16.mxu0 %v388
  %1052 = vmatmul.mubr.bf16.gmra.mrb[0].mxu0 %v387
  %v1053 = vpop.f32.mrb[0].mxu0
  %v1054 = vadd.f32 %v813, %v1053
  %v1055 = vpop.f32.mrb[0].mxu0
  %v1056 = vpop.f32.mrb[0].mxu0
  %v1057 = vadd.f32 %v816, %v1056
  %v1058 = vpop.f32.mrb[0].mxu0
  %1059 = vmatprep.mubr.bf16.mxu0 %v391
  %1060 = vmatmul.mubr.bf16.gmra.mrb[0].mxu0 %v390
  %v1061 = vpop.f32.mrb[0].mxu0
  %v1062 = vadd.f32 %v821, %v1061
  %v1063 = vpop.f32.mrb[0].mxu0
  %v1064 = vpop.f32.mrb[0].mxu0
  %v1065 = vadd.f32 %v824, %v1064
  %v1066 = vpop.f32.mrb[0].mxu0
  %1067 = vmatprep.mubr.bf16.mxu0 %v394
  %1068 = vmatmul.mubr.bf16.gmra.mrb[0].mxu0 %v393
  %v1069 = vpop.f32.mrb[0].mxu0
  %v1070 = vadd.f32 %v829, %v1069
  %v1071 = vpop.f32.mrb[0].mxu0
  %v1072 = vpop.f32.mrb[0].mxu0
  %v1073 = vadd.f32 %v832, %v1072
  %v1074 = vpop.f32.mrb[0].mxu0
  %1075 = vmatprep.mubr.bf16.mxu0 %v397
  %1076 = vmatmul.mubr.bf16.gmra.mrb[0].mxu0 %v396
  %v1077 = vpop.f32.mrb[0].mxu0
  %v1078 = vadd.f32 %v837, %v1077
  %v1079 = vpop.f32.mrb[0].mxu0
  %v1080 = vpop.f32.mrb[0].mxu0
  %v1081 = vadd.f32 %v840, %v1080
  %v1082 = vpop.f32.mrb[0].mxu0
  %1083 = vmatprep.mubr.bf16.mxu0 %v400
  %1084 = vmatmul.mubr.bf16.gmra.mrb[0].mxu0 %v399
  %v1085 = vpop.f32.mrb[0].mxu0
  %v1086 = vadd.f32 %v845, %v1085
  %v1087 = vpop.f32.mrb[0].mxu0
  %v1088 = vpop.f32.mrb[0].mxu0
  %v1089 = vadd.f32 %v848, %v1088
  %v1090 = vpop.f32.mrb[0].mxu0
  %1091 = vmatprep.mubr.bf16.mxu0 %v403
  %1092 = vmatmul.mubr.bf16.gmra.mrb[0].mxu0 %v402
  %v1093 = vpop.f32.mrb[0].mxu0
  %v1094 = vadd.f32 %v853, %v1093
  %v1095 = vpop.f32.mrb[0].mxu0
  %v1096 = vpop.f32.mrb[0].mxu0
  %v1097 = vadd.f32 %v856, %v1096
  %v1098 = vpop.f32.mrb[0].mxu0
  %1099 = vmatprep.mubr.bf16.mxu0 %v406
  %1100 = vmatmul.mubr.bf16.gmra.mrb[0].mxu0 %v405
  %v1101 = vpop.f32.mrb[0].mxu0
  %v1102 = vadd.f32 %v861, %v1101
  %v1103 = vpop.f32.mrb[0].mxu0
  %v1104 = vpop.f32.mrb[0].mxu0
  %v1105 = vadd.f32 %v864, %v1104
  %v1106 = vpop.f32.mrb[0].mxu0
  %1107 = vdwg.mxu0
  %1108 = vmatprep.subr.bf16.mxu0 0
  %1109 = vmatpush1.bf16.msra.mxu0 %v979
  %1110 = vmatprep.subr.bf16.mxu0 0
  %1111 = vmatpush1.bf16.msra.mxu0 %v980
  %1112 = vmatprep.subr.bf16.mxu0 0
  %1113 = vmatpush1.bf16.msra.mxu0 %v981
  %1114 = vmatprep.subr.bf16.mxu0 0
  %1115 = vmatpush1.bf16.msra.mxu0 %v982
  %1116 = vmatprep.subr.bf16.mxu0 0
  %1117 = vmatpush1.bf16.msra.mxu0 %v983
  %1118 = vmatprep.subr.bf16.mxu0 0
  %1119 = vmatpush1.bf16.msra.mxu0 %v984
  %1120 = vmatprep.subr.bf16.mxu0 0
  %1121 = vmatpush1.bf16.msra.mxu0 %v985
  %1122 = vmatprep.subr.bf16.mxu0 0
  %1123 = vmatpush1.bf16.msra.mxu0 %v986
  %1124 = vmatprep.subr.bf16.mxu0 0
  %1125 = vmatpush1.bf16.msra.mxu0 0
  %1126 = vmatprep.subr.bf16.mxu0 0
  %1127 = vmatpush1.bf16.msra.mxu0 0
  %1128 = vmatprep.subr.bf16.mxu0 0
  %1129 = vmatpush1.bf16.msra.mxu0 0
  %1130 = vmatprep.subr.bf16.mxu0 0
  %1131 = vmatpush1.bf16.msra.mxu0 0
  %1132 = vmatprep.subr.bf16.mxu0 0
  %1133 = vmatpush1.bf16.msra.mxu0 0
  %1134 = vmatprep.subr.bf16.mxu0 0
  %1135 = vmatpush1.bf16.msra.mxu0 0
  %1136 = vmatprep.subr.bf16.mxu0 0
  %1137 = vmatpush1.bf16.msra.mxu0 0
  %1138 = vmatprep.subr.bf16.mxu0 0
  %1139 = vmatpush1.bf16.msra.mxu0 0
  %1140 = vmatprep.mubr.bf16.mxu0 0
  %1141 = vmatmul.mubr.bf16.gmra.mrb[0].mxu0 %v386
  %v1142 = vpop.f32.mrb[0].mxu0
  %v1143 = vadd.f32 %v1046, %v1142
  %v1144 = vpop.f32.mrb[0].mxu0
  %v1145 = vpop.f32.mrb[0].mxu0
  %v1146 = vadd.f32 %v1049, %v1145
  %v1147 = vpop.f32.mrb[0].mxu0
  %1148 = vmatprep.mubr.bf16.mxu0 0
  %1149 = vmatmul.mubr.bf16.gmra.mrb[0].mxu0 %v389
  %v1150 = vpop.f32.mrb[0].mxu0
  %v1151 = vadd.f32 %v1054, %v1150
  %v1152 = vpop.f32.mrb[0].mxu0
  %v1153 = vpop.f32.mrb[0].mxu0
  %v1154 = vadd.f32 %v1057, %v1153
  %v1155 = vpop.f32.mrb[0].mxu0
  %1156 = vmatprep.mubr.bf16.mxu0 0
  %1157 = vmatmul.mubr.bf16.gmra.mrb[0].mxu0 %v392
  %v1158 = vpop.f32.mrb[0].mxu0
  %v1159 = vadd.f32 %v1062, %v1158
  %v1160 = vpop.f32.mrb[0].mxu0
  %v1161 = vpop.f32.mrb[0].mxu0
  %v1162 = vadd.f32 %v1065, %v1161
  %v1163 = vpop.f32.mrb[0].mxu0
  %1164 = vmatprep.mubr.bf16.mxu0 0
  %1165 = vmatmul.mubr.bf16.gmra.mrb[0].mxu0 %v395
  %v1166 = vpop.f32.mrb[0].mxu0
  %v1167 = vadd.f32 %v1070, %v1166
  %v1168 = vpop.f32.mrb[0].mxu0
  %v1169 = vpop.f32.mrb[0].mxu0
  %v1170 = vadd.f32 %v1073, %v1169
  %v1171 = vpop.f32.mrb[0].mxu0
  %1172 = vmatprep.mubr.bf16.mxu0 0
  %1173 = vmatmul.mubr.bf16.gmra.mrb[0].mxu0 %v398
  %v1174 = vpop.f32.mrb[0].mxu0
  %v1175 = vadd.f32 %v1078, %v1174
  %v1176 = vpop.f32.mrb[0].mxu0
  %v1177 = vpop.f32.mrb[0].mxu0
  %v1178 = vadd.f32 %v1081, %v1177
  %v1179 = vpop.f32.mrb[0].mxu0
  %1180 = vmatprep.mubr.bf16.mxu0 0
  %1181 = vmatmul.mubr.bf16.gmra.mrb[0].mxu0 %v401
  %v1182 = vpop.f32.mrb[0].mxu0
  %v1183 = vadd.f32 %v1086, %v1182
  %v1184 = vpop.f32.mrb[0].mxu0
  %v1185 = vpop.f32.mrb[0].mxu0
  %v1186 = vadd.f32 %v1089, %v1185
  %v1187 = vpop.f32.mrb[0].mxu0
  %1188 = vmatprep.mubr.bf16.mxu0 0
  %1189 = vmatmul.mubr.bf16.gmra.mrb[0].mxu0 %v404
  %v1190 = vpop.f32.mrb[0].mxu0
  %v1191 = vadd.f32 %v1094, %v1190
  %v1192 = vpop.f32.mrb[0].mxu0
  %v1193 = vpop.f32.mrb[0].mxu0
  %v1194 = vadd.f32 %v1097, %v1193
  %v1195 = vpop.f32.mrb[0].mxu0
  %1196 = vmatprep.mubr.bf16.mxu0 0
  %1197 = vmatmul.mubr.bf16.gmra.mrb[0].mxu0 %v407
  %v1198 = vpop.f32.mrb[0].mxu0
  %v1199 = vadd.f32 %v1102, %v1198
  %v1200 = vpop.f32.mrb[0].mxu0
  %v1201 = vpop.f32.mrb[0].mxu0
  %v1202 = vadd.f32 %v1105, %v1201
  %v1203 = vpop.f32.mrb[0].mxu0
  %1204 = vdwg.mxu0
  %v1205 = vpack.c.bf16 %v333, %v332
  %v1206 = vpack.c.bf16 %v353, %v352
  %v1207 = vpack.c.bf16 %v373, %v372
  %v1208 = vpack.c.bf16 %v343, %v342
  %v1209 = vpack.c.bf16 %v363, %v362
  %v1210 = vpack.c.bf16 %v383, %v382
  %s1211 = scalar_lea.vmem %s1, 384
  %v1212 = vld [vmem:[%s1211] sm:$0xf]
  %v1213 = vld [vmem:[%s1211 + $0x4] sm:$0xf]
  %v1214 = vld [vmem:[%s1211 + $0x8] sm:$0xf]
  %v1215 = vld [vmem:[%s1211 + $0xc] sm:$0xf]
  %v1216 = vld [vmem:[%s1211 + $0x10] sm:$0xf]
  %v1217 = vld [vmem:[%s1211 + $0x14] sm:$0xf]
  %v1218 = vld [vmem:[%s1211 + $0x18] sm:$0xf]
  %v1219 = vld [vmem:[%s1211 + $0x1c] sm:$0xf]
  %v1220 = vld [vmem:[%s1211 + $0x20] sm:$0xf]
  %v1221 = vld [vmem:[%s1211 + $0x24] sm:$0xf]
  %v1222 = vld [vmem:[%s1211 + $0x28] sm:$0xf]
  %v1223 = vld [vmem:[%s1211 + $0x2c] sm:$0xf]
  %v1224 = vld [vmem:[%s1211 + $0x30] sm:$0xf]
  %v1225 = vld [vmem:[%s1211 + $0x34] sm:$0xf]
  %v1226 = vld [vmem:[%s1211 + $0x38] sm:$0xf]
  %v1227 = vld [vmem:[%s1211 + $0x3c] sm:$0xf]
  %v1228 = vld [vmem:[%s1211 + $0x40] sm:$0xf]
  %v1229 = vld [vmem:[%s1211 + $0x44] sm:$0xf]
  %v1230 = vld [vmem:[%s1211 + $0x48] sm:$0xf]
  %v1231 = vld [vmem:[%s1211 + $0x4c] sm:$0xf]
  %v1232 = vld [vmem:[%s1211 + $0x50] sm:$0xf]
  %v1233 = vld [vmem:[%s1211 + $0x54] sm:$0xf]
  %v1234 = vld [vmem:[%s1211 + $0x58] sm:$0xf]
  %v1235 = vld [vmem:[%s1211 + $0x5c] sm:$0xf]
  %v1236 = vld [vmem:[%s1211 + $0x60] sm:$0xf]
  %v1237 = vld [vmem:[%s1211 + $0x64] sm:$0xf]
  %v1238 = vld [vmem:[%s1211 + $0x68] sm:$0xf]
  %v1239 = vld [vmem:[%s1211 + $0x6c] sm:$0xf]
  %v1240 = vld [vmem:[%s1211 + $0x70] sm:$0xf]
  %v1241 = vld [vmem:[%s1211 + $0x74] sm:$0xf]
  %v1242 = vld [vmem:[%s1211 + $0x78] sm:$0xf]
  %v1243 = vld [vmem:[%s1211 + $0x7c] sm:$0xf]
  %v1244 = vld [vmem:[%s1211 + $0x80] sm:$0xf]
  %v1245 = vld [vmem:[%s1211 + $0x84] sm:$0xf]
  %v1246 = vld [vmem:[%s1211 + $0x88] sm:$0xf]
  %v1247 = vld [vmem:[%s1211 + $0x8c] sm:$0xf]
  %v1248 = vld [vmem:[%s1211 + $0x90] sm:$0xf]
  %v1249 = vld [vmem:[%s1211 + $0x94] sm:$0xf]
  %v1250 = vld [vmem:[%s1211 + $0x98] sm:$0xf]
  %v1251 = vld [vmem:[%s1211 + $0x9c] sm:$0xf]
  %v1252 = vld [vmem:[%s1211 + $0xa0] sm:$0xf]
  %v1253 = vld [vmem:[%s1211 + $0xa4] sm:$0xf]
  %v1254 = vld [vmem:[%s1211 + $0xa8] sm:$0xf]
  %v1255 = vld [vmem:[%s1211 + $0xac] sm:$0xf]
  %v1256 = vld [vmem:[%s1211 + $0xb0] sm:$0xf]
  %v1257 = vld [vmem:[%s1211 + $0xb4] sm:$0xf]
  %v1258 = vld [vmem:[%s1211 + $0xb8] sm:$0xf]
  %v1259 = vld [vmem:[%s1211 + $0xbc] sm:$0xf]
  %v1308 = vunpack.c.l.b16 %v1212
  %v1309 = vunpack.c.l.b16 %v1213
  %v1310 = vunpack.c.l.b16 %v1214
  %v1311 = vunpack.c.l.b16 %v1215
  %v1312 = vunpack.c.l.b16 %v1216
  %v1313 = vunpack.c.l.b16 %v1217
  %v1314 = vunpack.c.l.b16 %v1218
  %v1315 = vunpack.c.l.b16 %v1219
  %v1316 = vunpack.c.l.b16 %v1220
  %v1317 = vunpack.c.l.b16 %v1221
  %v1318 = vunpack.c.l.b16 %v1222
  %v1319 = vunpack.c.l.b16 %v1223
  %v1320 = vunpack.c.l.b16 %v1224
  %v1321 = vunpack.c.l.b16 %v1225
  %v1322 = vunpack.c.l.b16 %v1226
  %v1323 = vunpack.c.l.b16 %v1227
  %v1324 = vunpack.c.l.b16 %v1228
  %v1325 = vunpack.c.l.b16 %v1229
  %v1326 = vunpack.c.l.b16 %v1230
  %v1327 = vunpack.c.l.b16 %v1231
  %v1328 = vunpack.c.l.b16 %v1232
  %v1329 = vunpack.c.l.b16 %v1233
  %v1330 = vunpack.c.l.b16 %v1234
  %v1331 = vunpack.c.l.b16 %v1235
  %v1332 = vunpack.c.l.b16 %v1236
  %v1333 = vunpack.c.l.b16 %v1237
  %v1334 = vunpack.c.l.b16 %v1238
  %v1335 = vunpack.c.l.b16 %v1239
  %v1336 = vunpack.c.l.b16 %v1240
  %v1337 = vunpack.c.l.b16 %v1241
  %v1338 = vunpack.c.l.b16 %v1242
  %v1339 = vunpack.c.l.b16 %v1243
  %v1340 = vunpack.c.l.b16 %v1244
  %v1341 = vunpack.c.l.b16 %v1245
  %v1342 = vunpack.c.l.b16 %v1246
  %v1343 = vunpack.c.l.b16 %v1247
  %v1344 = vunpack.c.l.b16 %v1248
  %v1345 = vunpack.c.l.b16 %v1249
  %v1346 = vunpack.c.l.b16 %v1250
  %v1347 = vunpack.c.l.b16 %v1251
  %v1348 = vunpack.c.l.b16 %v1252
  %v1349 = vunpack.c.l.b16 %v1253
  %v1350 = vunpack.c.l.b16 %v1254
  %v1351 = vunpack.c.l.b16 %v1255
  %v1352 = vunpack.c.l.b16 %v1256
  %v1353 = vunpack.c.l.b16 %v1257
  %v1354 = vunpack.c.l.b16 %v1258
  %v1355 = vunpack.c.l.b16 %v1259
  %v1356 = vpack.c.b16 %v1309, %v1308
  %v1357 = vpack.c.b16 %v1311, %v1310
  %v1358 = vpack.c.b16 %v1313, %v1312
  %v1359 = vpack.c.b16 %v1315, %v1314
  %v1360 = vpack.c.b16 %v1317, %v1316
  %v1361 = vpack.c.b16 %v1319, %v1318
  %v1362 = vpack.c.b16 %v1321, %v1320
  %v1363 = vpack.c.b16 %v1323, %v1322
  %v1364 = vpack.c.b16 %v1325, %v1324
  %v1365 = vpack.c.b16 %v1327, %v1326
  %v1366 = vpack.c.b16 %v1329, %v1328
  %v1367 = vpack.c.b16 %v1331, %v1330
  %v1368 = vpack.c.b16 %v1333, %v1332
  %v1369 = vpack.c.b16 %v1335, %v1334
  %v1370 = vpack.c.b16 %v1337, %v1336
  %v1371 = vpack.c.b16 %v1339, %v1338
  %v1372 = vpack.c.b16 %v1341, %v1340
  %v1373 = vpack.c.b16 %v1343, %v1342
  %v1374 = vpack.c.b16 %v1345, %v1344
  %v1375 = vpack.c.b16 %v1347, %v1346
  %v1376 = vpack.c.b16 %v1349, %v1348
  %v1377 = vpack.c.b16 %v1351, %v1350
  %v1378 = vpack.c.b16 %v1353, %v1352
  %v1379 = vpack.c.b16 %v1355, %v1354
  %1404 = vmatprep.subr.bf16.mxu0 0
  %1405 = vmatpush1.bf16.msra.mxu0 %v1356
  %1406 = vmatprep.subr.bf16.mxu0 0
  %1407 = vmatpush1.bf16.msra.mxu0 %v1357
  %1408 = vmatprep.subr.bf16.mxu0 0
  %1409 = vmatpush1.bf16.msra.mxu0 %v1358
  %1410 = vmatprep.subr.bf16.mxu0 0
  %1411 = vmatpush1.bf16.msra.mxu0 %v1359
  %1412 = vmatprep.subr.bf16.mxu0 0
  %1413 = vmatpush1.bf16.msra.mxu0 %v1360
  %1414 = vmatprep.subr.bf16.mxu0 0
  %1415 = vmatpush1.bf16.msra.mxu0 %v1361
  %1416 = vmatprep.subr.bf16.mxu0 0
  %1417 = vmatpush1.bf16.msra.mxu0 %v1362
  %1418 = vmatprep.subr.bf16.mxu0 0
  %1419 = vmatpush1.bf16.msra.mxu0 %v1363
  %1420 = vmatprep.subr.bf16.mxu0 0
  %1421 = vmatpush1.bf16.msra.mxu0 %v1364
  %1422 = vmatprep.subr.bf16.mxu0 0
  %1423 = vmatpush1.bf16.msra.mxu0 %v1365
  %1424 = vmatprep.subr.bf16.mxu0 0
  %1425 = vmatpush1.bf16.msra.mxu0 %v1366
  %1426 = vmatprep.subr.bf16.mxu0 0
  %1427 = vmatpush1.bf16.msra.mxu0 %v1367
  %1428 = vmatprep.subr.bf16.mxu0 0
  %1429 = vmatpush1.bf16.msra.mxu0 %v1368
  %1430 = vmatprep.subr.bf16.mxu0 0
  %1431 = vmatpush1.bf16.msra.mxu0 %v1369
  %1432 = vmatprep.subr.bf16.mxu0 0
  %1433 = vmatpush1.bf16.msra.mxu0 %v1370
  %1434 = vmatprep.subr.bf16.mxu0 0
  %1435 = vmatpush1.bf16.msra.mxu0 %v1371
  %1436 = vmatprep.mubr.bf16.mxu0 %v388
  %1437 = vmatmul.mubr.bf16.gmra.mrb[0].mxu0 %v387
  %v1438 = vpop.f32.mrb[0].mxu0
  %v1439 = vadd.f32 0.0, %v1438
  %v1440 = vpop.f32.mrb[0].mxu0
  %v1441 = vpop.f32.mrb[0].mxu0
  %v1442 = vadd.f32 0.0, %v1441
  %v1443 = vpop.f32.mrb[0].mxu0
  %1444 = vmatprep.mubr.bf16.mxu0 %v391
  %1445 = vmatmul.mubr.bf16.gmra.mrb[0].mxu0 %v390
  %v1446 = vpop.f32.mrb[0].mxu0
  %v1447 = vadd.f32 0.0, %v1446
  %v1448 = vpop.f32.mrb[0].mxu0
  %v1449 = vpop.f32.mrb[0].mxu0
  %v1450 = vadd.f32 0.0, %v1449
  %v1451 = vpop.f32.mrb[0].mxu0
  %1452 = vmatprep.mubr.bf16.mxu0 %v394
  %1453 = vmatmul.mubr.bf16.gmra.mrb[0].mxu0 %v393
  %v1454 = vpop.f32.mrb[0].mxu0
  %v1455 = vadd.f32 0.0, %v1454
  %v1456 = vpop.f32.mrb[0].mxu0
  %v1457 = vpop.f32.mrb[0].mxu0
  %v1458 = vadd.f32 0.0, %v1457
  %v1459 = vpop.f32.mrb[0].mxu0
  %1460 = vmatprep.mubr.bf16.mxu0 %v1206
  %1461 = vmatmul.mubr.bf16.gmra.mrb[0].mxu0 %v1205
  %v1462 = vpop.f32.mrb[0].mxu0
  %v1463 = vadd.f32 0.0, %v1462
  %v1464 = vpop.f32.mrb[0].mxu0
  %v1465 = vpop.f32.mrb[0].mxu0
  %v1466 = vadd.f32 0.0, %v1465
  %v1467 = vpop.f32.mrb[0].mxu0
  %1468 = vmatprep.mubr.bf16.mxu0 %v400
  %1469 = vmatmul.mubr.bf16.gmra.mrb[0].mxu0 %v399
  %v1470 = vpop.f32.mrb[0].mxu0
  %v1471 = vadd.f32 0.0, %v1470
  %v1472 = vpop.f32.mrb[0].mxu0
  %v1473 = vpop.f32.mrb[0].mxu0
  %v1474 = vadd.f32 0.0, %v1473
  %v1475 = vpop.f32.mrb[0].mxu0
  %1476 = vmatprep.mubr.bf16.mxu0 %v403
  %1477 = vmatmul.mubr.bf16.gmra.mrb[0].mxu0 %v402
  %v1478 = vpop.f32.mrb[0].mxu0
  %v1479 = vadd.f32 0.0, %v1478
  %v1480 = vpop.f32.mrb[0].mxu0
  %v1481 = vpop.f32.mrb[0].mxu0
  %v1482 = vadd.f32 0.0, %v1481
  %v1483 = vpop.f32.mrb[0].mxu0
  %1484 = vmatprep.mubr.bf16.mxu0 %v406
  %1485 = vmatmul.mubr.bf16.gmra.mrb[0].mxu0 %v405
  %v1486 = vpop.f32.mrb[0].mxu0
  %v1487 = vadd.f32 0.0, %v1486
  %v1488 = vpop.f32.mrb[0].mxu0
  %v1489 = vpop.f32.mrb[0].mxu0
  %v1490 = vadd.f32 0.0, %v1489
  %v1491 = vpop.f32.mrb[0].mxu0
  %1492 = vmatprep.mubr.bf16.mxu0 %v1209
  %1493 = vmatmul.mubr.bf16.gmra.mrb[0].mxu0 %v1208
  %v1494 = vpop.f32.mrb[0].mxu0
  %v1495 = vadd.f32 0.0, %v1494
  %v1496 = vpop.f32.mrb[0].mxu0
  %v1497 = vpop.f32.mrb[0].mxu0
  %v1498 = vadd.f32 0.0, %v1497
  %v1499 = vpop.f32.mrb[0].mxu0
  %1500 = vdwg.mxu0
  %1501 = vmatprep.subr.bf16.mxu0 0
  %1502 = vmatpush1.bf16.msra.mxu0 %v1372
  %1503 = vmatprep.subr.bf16.mxu0 0
  %1504 = vmatpush1.bf16.msra.mxu0 %v1373
  %1505 = vmatprep.subr.bf16.mxu0 0
  %1506 = vmatpush1.bf16.msra.mxu0 %v1374
  %1507 = vmatprep.subr.bf16.mxu0 0
  %1508 = vmatpush1.bf16.msra.mxu0 %v1375
  %1509 = vmatprep.subr.bf16.mxu0 0
  %1510 = vmatpush1.bf16.msra.mxu0 %v1376
  %1511 = vmatprep.subr.bf16.mxu0 0
  %1512 = vmatpush1.bf16.msra.mxu0 %v1377
  %1513 = vmatprep.subr.bf16.mxu0 0
  %1514 = vmatpush1.bf16.msra.mxu0 %v1378
  %1515 = vmatprep.subr.bf16.mxu0 0
  %1516 = vmatpush1.bf16.msra.mxu0 %v1379
  %1517 = vmatprep.subr.bf16.mxu0 0
  %1518 = vmatpush1.bf16.msra.mxu0 0
  %1519 = vmatprep.subr.bf16.mxu0 0
  %1520 = vmatpush1.bf16.msra.mxu0 0
  %1521 = vmatprep.subr.bf16.mxu0 0
  %1522 = vmatpush1.bf16.msra.mxu0 0
  %1523 = vmatprep.subr.bf16.mxu0 0
  %1524 = vmatpush1.bf16.msra.mxu0 0
  %1525 = vmatprep.subr.bf16.mxu0 0
  %1526 = vmatpush1.bf16.msra.mxu0 0
  %1527 = vmatprep.subr.bf16.mxu0 0
  %1528 = vmatpush1.bf16.msra.mxu0 0
  %1529 = vmatprep.subr.bf16.mxu0 0
  %1530 = vmatpush1.bf16.msra.mxu0 0
  %1531 = vmatprep.subr.bf16.mxu0 0
  %1532 = vmatpush1.bf16.msra.mxu0 0
  %1533 = vmatprep.mubr.bf16.mxu0 0
  %1534 = vmatmul.mubr.bf16.gmra.mrb[0].mxu0 %v389
  %v1535 = vpop.f32.mrb[0].mxu0
  %v1536 = vadd.f32 %v1439, %v1535
  %v1537 = vpop.f32.mrb[0].mxu0
  %v1538 = vpop.f32.mrb[0].mxu0
  %v1539 = vadd.f32 %v1442, %v1538
  %v1540 = vpop.f32.mrb[0].mxu0
  %1541 = vmatprep.mubr.bf16.mxu0 0
  %1542 = vmatmul.mubr.bf16.gmra.mrb[0].mxu0 %v392
  %v1543 = vpop.f32.mrb[0].mxu0
  %v1544 = vadd.f32 %v1447, %v1543
  %v1545 = vpop.f32.mrb[0].mxu0
  %v1546 = vpop.f32.mrb[0].mxu0
  %v1547 = vadd.f32 %v1450, %v1546
  %v1548 = vpop.f32.mrb[0].mxu0
  %1549 = vmatprep.mubr.bf16.mxu0 0
  %1550 = vmatmul.mubr.bf16.gmra.mrb[0].mxu0 %v395
  %v1551 = vpop.f32.mrb[0].mxu0
  %v1552 = vadd.f32 %v1455, %v1551
  %v1553 = vpop.f32.mrb[0].mxu0
  %v1554 = vpop.f32.mrb[0].mxu0
  %v1555 = vadd.f32 %v1458, %v1554
  %v1556 = vpop.f32.mrb[0].mxu0
  %1557 = vmatprep.mubr.bf16.mxu0 0
  %1558 = vmatmul.mubr.bf16.gmra.mrb[0].mxu0 %v1207
  %v1559 = vpop.f32.mrb[0].mxu0
  %v1560 = vadd.f32 %v1463, %v1559
  %v1561 = vpop.f32.mrb[0].mxu0
  %v1562 = vpop.f32.mrb[0].mxu0
  %v1563 = vadd.f32 %v1466, %v1562
  %v1564 = vpop.f32.mrb[0].mxu0
  %1565 = vmatprep.mubr.bf16.mxu0 0
  %1566 = vmatmul.mubr.bf16.gmra.mrb[0].mxu0 %v401
  %v1567 = vpop.f32.mrb[0].mxu0
  %v1568 = vadd.f32 %v1471, %v1567
  %v1569 = vpop.f32.mrb[0].mxu0
  %v1570 = vpop.f32.mrb[0].mxu0
  %v1571 = vadd.f32 %v1474, %v1570
  %v1572 = vpop.f32.mrb[0].mxu0
  %1573 = vmatprep.mubr.bf16.mxu0 0
  %1574 = vmatmul.mubr.bf16.gmra.mrb[0].mxu0 %v404
  %v1575 = vpop.f32.mrb[0].mxu0
  %v1576 = vadd.f32 %v1479, %v1575
  %v1577 = vpop.f32.mrb[0].mxu0
  %v1578 = vpop.f32.mrb[0].mxu0
  %v1579 = vadd.f32 %v1482, %v1578
  %v1580 = vpop.f32.mrb[0].mxu0
  %1581 = vmatprep.mubr.bf16.mxu0 0
  %1582 = vmatmul.mubr.bf16.gmra.mrb[0].mxu0 %v407
  %v1583 = vpop.f32.mrb[0].mxu0
  %v1584 = vadd.f32 %v1487, %v1583
  %v1585 = vpop.f32.mrb[0].mxu0
  %v1586 = vpop.f32.mrb[0].mxu0
  %v1587 = vadd.f32 %v1490, %v1586
  %v1588 = vpop.f32.mrb[0].mxu0
  %1589 = vmatprep.mubr.bf16.mxu0 0
  %1590 = vmatmul.mubr.bf16.gmra.mrb[0].mxu0 %v1210
  %v1591 = vpop.f32.mrb[0].mxu0
  %v1592 = vadd.f32 %v1495, %v1591
  %v1593 = vpop.f32.mrb[0].mxu0
  %v1594 = vpop.f32.mrb[0].mxu0
  %v1595 = vadd.f32 %v1498, %v1594
  %v1596 = vpop.f32.mrb[0].mxu0
  %1597 = vdwg.mxu0
  %v1598 = vadd.f32 %v1143, %v1536
  %v1599 = vadd.f32 %v1146, %v1539
  %v1600 = vadd.f32 %v1151, %v1544
  %v1601 = vadd.f32 %v1154, %v1547
  %v1602 = vadd.f32 %v1159, %v1552
  %v1603 = vadd.f32 %v1162, %v1555
  %v1604 = vadd.f32 %v1167, %v1560
  %v1605 = vadd.f32 %v1170, %v1563
  %v1606 = vadd.f32 %v1175, %v1568
  %v1607 = vadd.f32 %v1178, %v1571
  %v1608 = vadd.f32 %v1183, %v1576
  %v1609 = vadd.f32 %v1186, %v1579
  %v1610 = vadd.f32 %v1191, %v1584
  %v1611 = vadd.f32 %v1194, %v1587
  %v1612 = vadd.f32 %v1199, %v1592
  %v1613 = vadd.f32 %v1202, %v1595
  %v1614 = vadd.f32 %v1598, %v1599
  %v1615 = vadd.f32 %v1614, %v1600
  %v1616 = vadd.f32 %v1615, %v1601
  %v1617 = vadd.f32 %v1616, %v1602
  %v1618 = vadd.f32 %v1617, %v1603
  %v1619 = vadd.f32 %v1618, %v1604
  %v1620 = vadd.f32 %v1619, %v1605
  %v1621 = vadd.f32 %v1620, %v1606
  %v1622 = vadd.f32 %v1621, %v1607
  %v1623 = vadd.f32 %v1622, %v1608
  %v1624 = vadd.f32 %v1623, %v1609
  %v1625 = vadd.f32 %v1624, %v1610
  %v1626 = vadd.f32 %v1625, %v1611
  %v1627 = vadd.f32 %v1626, %v1612
  %v1628 = vadd.f32 %v1627, %v1613
  %v1629 = vrot.slane %v1628, 4
  %v1630 = vadd.f32 %v1628, %v1629
  %v1631 = vrot.slane %v1630, 2
  %v1632 = vadd.f32 %v1630, %v1631
  %v1633 = vrot.slane %v1632, 1
  %v1634 = vadd.f32 %v1632, %v1633
  %v1635 = vmul.f32 %v1634, 0.0078125
  %v1636 = vsub.f32 %v1598, %v1635
  %v1637 = vsub.f32 %v1599, %v1635
  %v1638 = vsub.f32 %v1600, %v1635
  %v1639 = vsub.f32 %v1601, %v1635
  %v1640 = vsub.f32 %v1602, %v1635
  %v1641 = vsub.f32 %v1603, %v1635
  %v1642 = vsub.f32 %v1604, %v1635
  %v1643 = vsub.f32 %v1605, %v1635
  %v1644 = vsub.f32 %v1606, %v1635
  %v1645 = vsub.f32 %v1607, %v1635
  %v1646 = vsub.f32 %v1608, %v1635
  %v1647 = vsub.f32 %v1609, %v1635
  %v1648 = vsub.f32 %v1610, %v1635
  %v1649 = vsub.f32 %v1611, %v1635
  %v1650 = vsub.f32 %v1612, %v1635
  %v1651 = vsub.f32 %v1613, %v1635
  %v1652 = vmul.f32 %v1636, %v1636
  %v1653 = vmul.f32 %v1637, %v1637
  %v1654 = vmul.f32 %v1638, %v1638
  %v1655 = vmul.f32 %v1639, %v1639
  %v1656 = vmul.f32 %v1640, %v1640
  %v1657 = vmul.f32 %v1641, %v1641
  %v1658 = vmul.f32 %v1642, %v1642
  %v1659 = vmul.f32 %v1643, %v1643
  %v1660 = vmul.f32 %v1644, %v1644
  %v1661 = vmul.f32 %v1645, %v1645
  %v1662 = vmul.f32 %v1646, %v1646
  %v1663 = vmul.f32 %v1647, %v1647
  %v1664 = vmul.f32 %v1648, %v1648
  %v1665 = vmul.f32 %v1649, %v1649
  %v1666 = vmul.f32 %v1650, %v1650
  %v1667 = vmul.f32 %v1651, %v1651
  %v1668 = vadd.f32 %v1652, %v1653
  %v1669 = vadd.f32 %v1668, %v1654
  %v1670 = vadd.f32 %v1669, %v1655
  %v1671 = vadd.f32 %v1670, %v1656
  %v1672 = vadd.f32 %v1671, %v1657
  %v1673 = vadd.f32 %v1672, %v1658
  %v1674 = vadd.f32 %v1673, %v1659
  %v1675 = vadd.f32 %v1674, %v1660
  %v1676 = vadd.f32 %v1675, %v1661
  %v1677 = vadd.f32 %v1676, %v1662
  %v1678 = vadd.f32 %v1677, %v1663
  %v1679 = vadd.f32 %v1678, %v1664
  %v1680 = vadd.f32 %v1679, %v1665
  %v1681 = vadd.f32 %v1680, %v1666
  %v1682 = vadd.f32 %v1681, %v1667
  %v1683 = vrot.slane %v1682, 4
  %v1684 = vadd.f32 %v1682, %v1683
  %v1685 = vrot.slane %v1684, 2
  %v1686 = vadd.f32 %v1684, %v1685
  %v1687 = vrot.slane %v1686, 1
  %v1688 = vadd.f32 %v1686, %v1687
  %v1689 = vmul.f32 %v1688, 0.0078125
  %v1690 = vadd.f32 %v1689, 1e-05
  %v1691 = vrsqrt.pop %v1690
  %v1692 = vmul.f32 %v1636, %v1691
  %v1693 = vmul.f32 %v1637, %v1691
  %v1694 = vmul.f32 %v1638, %v1691
  %v1695 = vmul.f32 %v1639, %v1691
  %v1696 = vmul.f32 %v1640, %v1691
  %v1697 = vmul.f32 %v1641, %v1691
  %v1698 = vmul.f32 %v1642, %v1691
  %v1699 = vmul.f32 %v1643, %v1691
  %v1700 = vmul.f32 %v1644, %v1691
  %v1701 = vmul.f32 %v1645, %v1691
  %v1702 = vmul.f32 %v1646, %v1691
  %v1703 = vmul.f32 %v1647, %v1691
  %v1704 = vmul.f32 %v1648, %v1691
  %v1705 = vmul.f32 %v1649, %v1691
  %v1706 = vmul.f32 %v1650, %v1691
  %v1707 = vmul.f32 %v1651, %v1691
  %v1708 = vld [vmem:[%s2] sm:$0x1]
  %v1710 = vlaneseq
  %v1711 = vshrl.u32 %v1710, 7
  %v1712 = vsub.s32 0, %v1711
  %v1713 = vrot.slane %v1708, %v1712
  %v1715 = vmul.f32 %v1692, %v1713
  %v1716 = vmul.f32 %v1693, %v1713
  %v1717 = vmul.f32 %v1694, %v1713
  %v1718 = vmul.f32 %v1695, %v1713
  %v1719 = vmul.f32 %v1696, %v1713
  %v1720 = vmul.f32 %v1697, %v1713
  %v1721 = vmul.f32 %v1698, %v1713
  %v1722 = vmul.f32 %v1699, %v1713
  %v1723 = vmul.f32 %v1700, %v1713
  %v1724 = vmul.f32 %v1701, %v1713
  %v1725 = vmul.f32 %v1702, %v1713
  %v1726 = vmul.f32 %v1703, %v1713
  %v1727 = vmul.f32 %v1704, %v1713
  %v1728 = vmul.f32 %v1705, %v1713
  %v1729 = vmul.f32 %v1706, %v1713
  %v1730 = vmul.f32 %v1707, %v1713
  %v1731 = vld [vmem:[%s3] sm:$0x1]
  %v1733 = vlaneseq
  %v1734 = vshrl.u32 %v1733, 7
  %v1735 = vsub.s32 0, %v1734
  %v1736 = vrot.slane %v1731, %v1735
  %v1738 = vadd.f32 %v1715, %v1736
  %v1739 = vadd.f32 %v1716, %v1736
  %v1740 = vadd.f32 %v1717, %v1736
  %v1741 = vadd.f32 %v1718, %v1736
  %v1742 = vadd.f32 %v1719, %v1736
  %v1743 = vadd.f32 %v1720, %v1736
  %v1744 = vadd.f32 %v1721, %v1736
  %v1745 = vadd.f32 %v1722, %v1736
  %v1746 = vadd.f32 %v1723, %v1736
  %v1747 = vadd.f32 %v1724, %v1736
  %v1748 = vadd.f32 %v1725, %v1736
  %v1749 = vadd.f32 %v1726, %v1736
  %v1750 = vadd.f32 %v1727, %v1736
  %v1751 = vadd.f32 %v1728, %v1736
  %v1752 = vadd.f32 %v1729, %v1736
  %v1753 = vadd.f32 %v1730, %v1736
  %v1754 = vmax.f32 %v1738, 0.0
  %v1755 = vmax.f32 %v1739, 0.0
  %v1756 = vmax.f32 %v1740, 0.0
  %v1757 = vmax.f32 %v1741, 0.0
  %v1758 = vmax.f32 %v1742, 0.0
  %v1759 = vmax.f32 %v1743, 0.0
  %v1760 = vmax.f32 %v1744, 0.0
  %v1761 = vmax.f32 %v1745, 0.0
  %v1762 = vmax.f32 %v1746, 0.0
  %v1763 = vmax.f32 %v1747, 0.0
  %v1764 = vmax.f32 %v1748, 0.0
  %v1765 = vmax.f32 %v1749, 0.0
  %v1766 = vmax.f32 %v1750, 0.0
  %v1767 = vmax.f32 %v1751, 0.0
  %v1768 = vmax.f32 %v1752, 0.0
  %v1769 = vmax.f32 %v1753, 0.0
  %1770 = vst [vmem:[%s289 + $0x8] sm:$0xff] %v1754
  %1771 = vst [vmem:[%s289 + $0x20] sm:$0xff] %v1755
  %1772 = vst [vmem:[%s289 + $0x38] sm:$0xff] %v1756
  %1773 = vst [vmem:[%s289 + $0x50] sm:$0xff] %v1757
  %1774 = vst [vmem:[%s289 + $0x68] sm:$0xff] %v1758
  %1775 = vst [vmem:[%s289 + $0x80] sm:$0xff] %v1759
  %1776 = vst [vmem:[%s289 + $0x98] sm:$0xff] %v1760
  %1777 = vst [vmem:[%s289 + $0xb0] sm:$0xff] %v1761
  %1778 = vst [vmem:[%s289 + $0xf8] sm:$0xff] %v1762
  %1779 = vst [vmem:[%s289 + $0x110] sm:$0xff] %v1763
  %1780 = vst [vmem:[%s289 + $0x128] sm:$0xff] %v1764
  %1781 = vst [vmem:[%s289 + $0x140] sm:$0xff] %v1765
  %1782 = vst [vmem:[%s289 + $0x158] sm:$0xff] %v1766
  %1783 = vst [vmem:[%s289 + $0x170] sm:$0xff] %v1767
  %1784 = vst [vmem:[%s289 + $0x188] sm:$0xff] %v1768
  %1785 = vst [vmem:[%s289 + $0x1a0] sm:$0xff] %v1769
  %v1786 = vld [vmem:[#allocation2 + $0x7] sm:$0xff]
  %v1787 = vld [vmem:[#allocation2 + $0x1f] sm:$0xff]
  %v1788 = vld [vmem:[#allocation2 + $0x37] sm:$0xff]
  %v1789 = vld [vmem:[#allocation2 + $0x4f] sm:$0xff]
  %v1790 = vld [vmem:[#allocation2 + $0x67] sm:$0xff]
  %v1791 = vld [vmem:[#allocation2 + $0x7f] sm:$0xff]
  %v1792 = vld [vmem:[#allocation2 + $0x97] sm:$0xff]
  %v1793 = vld [vmem:[#allocation2 + $0xaf] sm:$0xff]
  %v1794 = vld [vmem:[#allocation2 + $0xc7] sm:$0xff]
  %v1795 = vld [vmem:[#allocation2 + $0xdf] sm:$0xff]
  %v1796 = vld [vmem:[#allocation2 + $0xf7] sm:$0xff]
  %v1797 = vld [vmem:[#allocation2 + $0x10f] sm:$0xff]
  %v1798 = vld [vmem:[#allocation2 + $0x127] sm:$0xff]
  %v1799 = vld [vmem:[#allocation2 + $0x13f] sm:$0xff]
  %v1800 = vld [vmem:[#allocation2 + $0x157] sm:$0xff]
  %v1801 = vld [vmem:[#allocation2 + $0x16f] sm:$0xff]
  %v1802 = vld [vmem:[#allocation2 + $0x187] sm:$0xff]
  %v1803 = vld [vmem:[#allocation2 + $0x19f] sm:$0xff]
  %v1804 = vld [vmem:[#allocation2 + $0x1b7] sm:$0xff]
  %v1805 = vld [vmem:[#allocation2 + $0x1cf] sm:$0xff]
  %v1806 = vld [vmem:[#allocation2 + $0x8] sm:$0xff]
  %v1807 = vld [vmem:[#allocation2 + $0x20] sm:$0xff]
  %v1808 = vld [vmem:[#allocation2 + $0x38] sm:$0xff]
  %v1809 = vld [vmem:[#allocation2 + $0x50] sm:$0xff]
  %v1810 = vld [vmem:[#allocation2 + $0x68] sm:$0xff]
  %v1811 = vld [vmem:[#allocation2 + $0x80] sm:$0xff]
  %v1812 = vld [vmem:[#allocation2 + $0x98] sm:$0xff]
  %v1813 = vld [vmem:[#allocation2 + $0xb0] sm:$0xff]
  %v1814 = vld [vmem:[#allocation2 + $0xc8] sm:$0xff]
  %v1815 = vld [vmem:[#allocation2 + $0xe0] sm:$0xff]
  %v1816 = vld [vmem:[#allocation2 + $0xf8] sm:$0xff]
  %v1817 = vld [vmem:[#allocation2 + $0x110] sm:$0xff]
  %v1818 = vld [vmem:[#allocation2 + $0x128] sm:$0xff]
  %v1819 = vld [vmem:[#allocation2 + $0x140] sm:$0xff]
  %v1820 = vld [vmem:[#allocation2 + $0x158] sm:$0xff]
  %v1821 = vld [vmem:[#allocation2 + $0x170] sm:$0xff]
  %v1822 = vld [vmem:[#allocation2 + $0x188] sm:$0xff]
  %v1823 = vld [vmem:[#allocation2 + $0x1a0] sm:$0xff]
  %v1824 = vld [vmem:[#allocation2 + $0x1b8] sm:$0xff]
  %v1825 = vld [vmem:[#allocation2 + $0x1d0] sm:$0xff]
  %v1826 = vld [vmem:[#allocation2 + $0x9] sm:$0xff]
  %v1827 = vld [vmem:[#allocation2 + $0x21] sm:$0xff]
  %v1828 = vld [vmem:[#allocation2 + $0x39] sm:$0xff]
  %v1829 = vld [vmem:[#allocation2 + $0x51] sm:$0xff]
  %v1830 = vld [vmem:[#allocation2 + $0x69] sm:$0xff]
  %v1831 = vld [vmem:[#allocation2 + $0x81] sm:$0xff]
  %v1832 = vld [vmem:[#allocation2 + $0x99] sm:$0xff]
  %v1833 = vld [vmem:[#allocation2 + $0xb1] sm:$0xff]
  %v1834 = vld [vmem:[#allocation2 + $0xc9] sm:$0xff]
  %v1835 = vld [vmem:[#allocation2 + $0xe1] sm:$0xff]
  %v1836 = vld [vmem:[#allocation2 + $0xf9] sm:$0xff]
  %v1837 = vld [vmem:[#allocation2 + $0x111] sm:$0xff]
  %v1838 = vld [vmem:[#allocation2 + $0x129] sm:$0xff]
  %v1839 = vld [vmem:[#allocation2 + $0x141] sm:$0xff]
  %v1840 = vld [vmem:[#allocation2 + $0x159] sm:$0xff]
  %v1841 = vld [vmem:[#allocation2 + $0x171] sm:$0xff]
  %v1842 = vld [vmem:[#allocation2 + $0x189] sm:$0xff]
  %v1843 = vld [vmem:[#allocation2 + $0x1a1] sm:$0xff]
  %v1844 = vld [vmem:[#allocation2 + $0x1b9] sm:$0xff]
  %v1845 = vld [vmem:[#allocation2 + $0x1d1] sm:$0xff]
  %v1846 = vpack.c.bf16 %v1787, %v1786
  %v1847 = vpack.c.bf16 %v1807, %v1806
  %v1848 = vpack.c.bf16 %v1827, %v1826
  %v1849 = vpack.c.bf16 %v1789, %v1788
  %v1850 = vpack.c.bf16 %v1809, %v1808
  %v1851 = vpack.c.bf16 %v1829, %v1828
  %v1852 = vpack.c.bf16 %v1791, %v1790
  %v1853 = vpack.c.bf16 %v1811, %v1810
  %v1854 = vpack.c.bf16 %v1831, %v1830
  %v1855 = vpack.c.bf16 %v1793, %v1792
  %v1856 = vpack.c.bf16 %v1813, %v1812
  %v1857 = vpack.c.bf16 %v1833, %v1832
  %v1858 = vpack.c.bf16 %v1797, %v1796
  %v1859 = vpack.c.bf16 %v1817, %v1816
  %v1860 = vpack.c.bf16 %v1837, %v1836
  %v1861 = vpack.c.bf16 %v1799, %v1798
  %v1862 = vpack.c.bf16 %v1819, %v1818
  %v1863 = vpack.c.bf16 %v1839, %v1838
  %v1864 = vpack.c.bf16 %v1801, %v1800
  %v1865 = vpack.c.bf16 %v1821, %v1820
  %v1866 = vpack.c.bf16 %v1841, %v1840
  %v1867 = vpack.c.bf16 %v1803, %v1802
  %v1868 = vpack.c.bf16 %v1823, %v1822
  %v1869 = vpack.c.bf16 %v1843, %v1842
  %v1870 = vld [vmem:[%s4] sm:$0xf]
  %v1871 = vld [vmem:[%s4 + $0x4] sm:$0xf]
  %v1872 = vld [vmem:[%s4 + $0x8] sm:$0xf]
  %v1873 = vld [vmem:[%s4 + $0xc] sm:$0xf]
  %v1874 = vld [vmem:[%s4 + $0x10] sm:$0xf]
  %v1875 = vld [vmem:[%s4 + $0x14] sm:$0xf]
  %v1876 = vld [vmem:[%s4 + $0x18] sm:$0xf]
  %v1877 = vld [vmem:[%s4 + $0x1c] sm:$0xf]
  %v1878 = vld [vmem:[%s4 + $0x20] sm:$0xf]
  %v1879 = vld [vmem:[%s4 + $0x24] sm:$0xf]
  %v1880 = vld [vmem:[%s4 + $0x28] sm:$0xf]
  %v1881 = vld [vmem:[%s4 + $0x2c] sm:$0xf]
  %v1882 = vld [vmem:[%s4 + $0x30] sm:$0xf]
  %v1883 = vld [vmem:[%s4 + $0x34] sm:$0xf]
  %v1884 = vld [vmem:[%s4 + $0x38] sm:$0xf]
  %v1885 = vld [vmem:[%s4 + $0x3c] sm:$0xf]
  %v1886 = vld [vmem:[%s4 + $0x40] sm:$0xf]
  %v1887 = vld [vmem:[%s4 + $0x44] sm:$0xf]
  %v1888 = vld [vmem:[%s4 + $0x48] sm:$0xf]
  %v1889 = vld [vmem:[%s4 + $0x4c] sm:$0xf]
  %v1890 = vld [vmem:[%s4 + $0x50] sm:$0xf]
  %v1891 = vld [vmem:[%s4 + $0x54] sm:$0xf]
  %v1892 = vld [vmem:[%s4 + $0x58] sm:$0xf]
  %v1893 = vld [vmem:[%s4 + $0x5c] sm:$0xf]
  %v1894 = vld [vmem:[%s4 + $0x60] sm:$0xf]
  %v1895 = vld [vmem:[%s4 + $0x64] sm:$0xf]
  %v1896 = vld [vmem:[%s4 + $0x68] sm:$0xf]
  %v1897 = vld [vmem:[%s4 + $0x6c] sm:$0xf]
  %v1898 = vld [vmem:[%s4 + $0x70] sm:$0xf]
  %v1899 = vld [vmem:[%s4 + $0x74] sm:$0xf]
  %v1900 = vld [vmem:[%s4 + $0x78] sm:$0xf]
  %v1901 = vld [vmem:[%s4 + $0x7c] sm:$0xf]
  %v1902 = vld [vmem:[%s4 + $0x80] sm:$0xf]
  %v1903 = vld [vmem:[%s4 + $0x84] sm:$0xf]
  %v1904 = vld [vmem:[%s4 + $0x88] sm:$0xf]
  %v1905 = vld [vmem:[%s4 + $0x8c] sm:$0xf]
  %v1906 = vld [vmem:[%s4 + $0x90] sm:$0xf]
  %v1907 = vld [vmem:[%s4 + $0x94] sm:$0xf]
  %v1908 = vld [vmem:[%s4 + $0x98] sm:$0xf]
  %v1909 = vld [vmem:[%s4 + $0x9c] sm:$0xf]
  %v1910 = vld [vmem:[%s4 + $0xa0] sm:$0xf]
  %v1911 = vld [vmem:[%s4 + $0xa4] sm:$0xf]
  %v1912 = vld [vmem:[%s4 + $0xa8] sm:$0xf]
  %v1913 = vld [vmem:[%s4 + $0xac] sm:$0xf]
  %v1914 = vld [vmem:[%s4 + $0xb0] sm:$0xf]
  %v1915 = vld [vmem:[%s4 + $0xb4] sm:$0xf]
  %v1916 = vld [vmem:[%s4 + $0xb8] sm:$0xf]
  %v1917 = vld [vmem:[%s4 + $0xbc] sm:$0xf]
  %v1918 = vpack.c.bf16 %v1788, %v1787
  %v1919 = vpack.c.bf16 %v1808, %v1807
  %v1920 = vpack.c.bf16 %v1828, %v1827
  %v1921 = vpack.c.bf16 %v1790, %v1789
  %v1922 = vpack.c.bf16 %v1810, %v1809
  %v1923 = vpack.c.bf16 %v1830, %v1829
  %v1924 = vpack.c.bf16 %v1792, %v1791
  %v1925 = vpack.c.bf16 %v1812, %v1811
  %v1926 = vpack.c.bf16 %v1832, %v1831
  %v1927 = vpack.c.bf16 %v1794, %v1793
  %v1928 = vpack.c.bf16 %v1814, %v1813
  %v1929 = vpack.c.bf16 %v1834, %v1833
  %v1930 = vpack.c.bf16 %v1798, %v1797
  %v1931 = vpack.c.bf16 %v1818, %v1817
  %v1932 = vpack.c.bf16 %v1838, %v1837
  %v1933 = vpack.c.bf16 %v1800, %v1799
  %v1934 = vpack.c.bf16 %v1820, %v1819
  %v1935 = vpack.c.bf16 %v1840, %v1839
  %v1936 = vpack.c.bf16 %v1802, %v1801
  %v1937 = vpack.c.bf16 %v1822, %v1821
  %v1938 = vpack.c.bf16 %v1842, %v1841
  %v1939 = vpack.c.bf16 %v1804, %v1803
  %v1940 = vpack.c.bf16 %v1824, %v1823
  %v1941 = vpack.c.bf16 %v1844, %v1843
  %s1942 = scalar_lea.vmem %s4, 192
  %v1943 = vld [vmem:[%s1942] sm:$0xf]
  %v1944 = vld [vmem:[%s1942 + $0x4] sm:$0xf]
  %v1945 = vld [vmem:[%s1942 + $0x8] sm:$0xf]
  %v1946 = vld [vmem:[%s1942 + $0xc] sm:$0xf]
  %v1947 = vld [vmem:[%s1942 + $0x10] sm:$0xf]
  %v1948 = vld [vmem:[%s1942 + $0x14] sm:$0xf]
  %v1949 = vld [vmem:[%s1942 + $0x18] sm:$0xf]
  %v1950 = vld [vmem:[%s1942 + $0x1c] sm:$0xf]
  %v1951 = vld [vmem:[%s1942 + $0x20] sm:$0xf]
  %v1952 = vld [vmem:[%s1942 + $0x24] sm:$0xf]
  %v1953 = vld [vmem:[%s1942 + $0x28] sm:$0xf]
  %v1954 = vld [vmem:[%s1942 + $0x2c] sm:$0xf]
  %v1955 = vld [vmem:[%s1942 + $0x30] sm:$0xf]
  %v1956 = vld [vmem:[%s1942 + $0x34] sm:$0xf]
  %v1957 = vld [vmem:[%s1942 + $0x38] sm:$0xf]
  %v1958 = vld [vmem:[%s1942 + $0x3c] sm:$0xf]
  %v1959 = vld [vmem:[%s1942 + $0x40] sm:$0xf]
  %v1960 = vld [vmem:[%s1942 + $0x44] sm:$0xf]
  %v1961 = vld [vmem:[%s1942 + $0x48] sm:$0xf]
  %v1962 = vld [vmem:[%s1942 + $0x4c] sm:$0xf]
  %v1963 = vld [vmem:[%s1942 + $0x50] sm:$0xf]
  %v1964 = vld [vmem:[%s1942 + $0x54] sm:$0xf]
  %v1965 = vld [vmem:[%s1942 + $0x58] sm:$0xf]
  %v1966 = vld [vmem:[%s1942 + $0x5c] sm:$0xf]
  %v1967 = vld [vmem:[%s1942 + $0x60] sm:$0xf]
  %v1968 = vld [vmem:[%s1942 + $0x64] sm:$0xf]
  %v1969 = vld [vmem:[%s1942 + $0x68] sm:$0xf]
  %v1970 = vld [vmem:[%s1942 + $0x6c] sm:$0xf]
  %v1971 = vld [vmem:[%s1942 + $0x70] sm:$0xf]
  %v1972 = vld [vmem:[%s1942 + $0x74] sm:$0xf]
  %v1973 = vld [vmem:[%s1942 + $0x78] sm:$0xf]
  %v1974 = vld [vmem:[%s1942 + $0x7c] sm:$0xf]
  %v1975 = vld [vmem:[%s1942 + $0x80] sm:$0xf]
  %v1976 = vld [vmem:[%s1942 + $0x84] sm:$0xf]
  %v1977 = vld [vmem:[%s1942 + $0x88] sm:$0xf]
  %v1978 = vld [vmem:[%s1942 + $0x8c] sm:$0xf]
  %v1979 = vld [vmem:[%s1942 + $0x90] sm:$0xf]
  %v1980 = vld [vmem:[%s1942 + $0x94] sm:$0xf]
  %v1981 = vld [vmem:[%s1942 + $0x98] sm:$0xf]
  %v1982 = vld [vmem:[%s1942 + $0x9c] sm:$0xf]
  %v1983 = vld [vmem:[%s1942 + $0xa0] sm:$0xf]
  %v1984 = vld [vmem:[%s1942 + $0xa4] sm:$0xf]
  %v1985 = vld [vmem:[%s1942 + $0xa8] sm:$0xf]
  %v1986 = vld [vmem:[%s1942 + $0xac] sm:$0xf]
  %v1987 = vld [vmem:[%s1942 + $0xb0] sm:$0xf]
  %v1988 = vld [vmem:[%s1942 + $0xb4] sm:$0xf]
  %v1989 = vld [vmem:[%s1942 + $0xb8] sm:$0xf]
  %v1990 = vld [vmem:[%s1942 + $0xbc] sm:$0xf]
  %v2039 = vunpack.c.l.b16 %v1943
  %v2040 = vunpack.c.l.b16 %v1944
  %v2041 = vunpack.c.l.b16 %v1945
  %v2042 = vunpack.c.l.b16 %v1946
  %v2043 = vunpack.c.l.b16 %v1947
  %v2044 = vunpack.c.l.b16 %v1948
  %v2045 = vunpack.c.l.b16 %v1949
  %v2046 = vunpack.c.l.b16 %v1950
  %v2047 = vunpack.c.l.b16 %v1951
  %v2048 = vunpack.c.l.b16 %v1952
  %v2049 = vunpack.c.l.b16 %v1953
  %v2050 = vunpack.c.l.b16 %v1954
  %v2051 = vunpack.c.l.b16 %v1955
  %v2052 = vunpack.c.l.b16 %v1956
  %v2053 = vunpack.c.l.b16 %v1957
  %v2054 = vunpack.c.l.b16 %v1958
  %v2055 = vunpack.c.l.b16 %v1959
  %v2056 = vunpack.c.l.b16 %v1960
  %v2057 = vunpack.c.l.b16 %v1961
  %v2058 = vunpack.c.l.b16 %v1962
  %v2059 = vunpack.c.l.b16 %v1963
  %v2060 = vunpack.c.l.b16 %v1964
  %v2061 = vunpack.c.l.b16 %v1965
  %v2062 = vunpack.c.l.b16 %v1966
  %v2063 = vunpack.c.l.b16 %v1967
  %v2064 = vunpack.c.l.b16 %v1968
  %v2065 = vunpack.c.l.b16 %v1969
  %v2066 = vunpack.c.l.b16 %v1970
  %v2067 = vunpack.c.l.b16 %v1971
  %v2068 = vunpack.c.l.b16 %v1972
  %v2069 = vunpack.c.l.b16 %v1973
  %v2070 = vunpack.c.l.b16 %v1974
  %v2071 = vunpack.c.l.b16 %v1975
  %v2072 = vunpack.c.l.b16 %v1976
  %v2073 = vunpack.c.l.b16 %v1977
  %v2074 = vunpack.c.l.b16 %v1978
  %v2075 = vunpack.c.l.b16 %v1979
  %v2076 = vunpack.c.l.b16 %v1980
  %v2077 = vunpack.c.l.b16 %v1981
  %v2078 = vunpack.c.l.b16 %v1982
  %v2079 = vunpack.c.l.b16 %v1983
  %v2080 = vunpack.c.l.b16 %v1984
  %v2081 = vunpack.c.l.b16 %v1985
  %v2082 = vunpack.c.l.b16 %v1986
  %v2083 = vunpack.c.l.b16 %v1987
  %v2084 = vunpack.c.l.b16 %v1988
  %v2085 = vunpack.c.l.b16 %v1989
  %v2086 = vunpack.c.l.b16 %v1990
  %v2087 = vpack.c.b16 %v2040, %v2039
  %v2088 = vpack.c.b16 %v2042, %v2041
  %v2089 = vpack.c.b16 %v2044, %v2043
  %v2090 = vpack.c.b16 %v2046, %v2045
  %v2091 = vpack.c.b16 %v2048, %v2047
  %v2092 = vpack.c.b16 %v2050, %v2049
  %v2093 = vpack.c.b16 %v2052, %v2051
  %v2094 = vpack.c.b16 %v2054, %v2053
  %v2095 = vpack.c.b16 %v2056, %v2055
  %v2096 = vpack.c.b16 %v2058, %v2057
  %v2097 = vpack.c.b16 %v2060, %v2059
  %v2098 = vpack.c.b16 %v2062, %v2061
  %v2099 = vpack.c.b16 %v2064, %v2063
  %v2100 = vpack.c.b16 %v2066, %v2065
  %v2101 = vpack.c.b16 %v2068, %v2067
  %v2102 = vpack.c.b16 %v2070, %v2069
  %v2103 = vpack.c.b16 %v2072, %v2071
  %v2104 = vpack.c.b16 %v2074, %v2073
  %v2105 = vpack.c.b16 %v2076, %v2075
  %v2106 = vpack.c.b16 %v2078, %v2077
  %v2107 = vpack.c.b16 %v2080, %v2079
  %v2108 = vpack.c.b16 %v2082, %v2081
  %v2109 = vpack.c.b16 %v2084, %v2083
  %v2110 = vpack.c.b16 %v2086, %v2085
  %2135 = vmatprep.subr.bf16.mxu0 0
  %2136 = vmatpush1.bf16.msra.mxu0 %v2087
  %2137 = vmatprep.subr.bf16.mxu0 0
  %2138 = vmatpush1.bf16.msra.mxu0 %v2088
  %2139 = vmatprep.subr.bf16.mxu0 0
  %2140 = vmatpush1.bf16.msra.mxu0 %v2089
  %2141 = vmatprep.subr.bf16.mxu0 0
  %2142 = vmatpush1.bf16.msra.mxu0 %v2090
  %2143 = vmatprep.subr.bf16.mxu0 0
  %2144 = vmatpush1.bf16.msra.mxu0 %v2091
  %2145 = vmatprep.subr.bf16.mxu0 0
  %2146 = vmatpush1.bf16.msra.mxu0 %v2092
  %2147 = vmatprep.subr.bf16.mxu0 0
  %2148 = vmatpush1.bf16.msra.mxu0 %v2093
  %2149 = vmatprep.subr.bf16.mxu0 0
  %2150 = vmatpush1.bf16.msra.mxu0 %v2094
  %2151 = vmatprep.subr.bf16.mxu0 0
  %2152 = vmatpush1.bf16.msra.mxu0 %v2095
  %2153 = vmatprep.subr.bf16.mxu0 0
  %2154 = vmatpush1.bf16.msra.mxu0 %v2096
  %2155 = vmatprep.subr.bf16.mxu0 0
  %2156 = vmatpush1.bf16.msra.mxu0 %v2097
  %2157 = vmatprep.subr.bf16.mxu0 0
  %2158 = vmatpush1.bf16.msra.mxu0 %v2098
  %2159 = vmatprep.subr.bf16.mxu0 0
  %2160 = vmatpush1.bf16.msra.mxu0 %v2099
  %2161 = vmatprep.subr.bf16.mxu0 0
  %2162 = vmatpush1.bf16.msra.mxu0 %v2100
  %2163 = vmatprep.subr.bf16.mxu0 0
  %2164 = vmatpush1.bf16.msra.mxu0 %v2101
  %2165 = vmatprep.subr.bf16.mxu0 0
  %2166 = vmatpush1.bf16.msra.mxu0 %v2102
  %2167 = vmatprep.mubr.bf16.mxu0 %v1919
  %2168 = vmatmul.mubr.bf16.gmra.mrb[0].mxu0 %v1918
  %v2169 = vpop.f32.mrb[0].mxu0
  %v2170 = vadd.f32 0.0, %v2169
  %v2171 = vpop.f32.mrb[0].mxu0
  %v2172 = vpop.f32.mrb[0].mxu0
  %v2173 = vadd.f32 0.0, %v2172
  %v2174 = vpop.f32.mrb[0].mxu0
  %2175 = vmatprep.mubr.bf16.mxu0 %v1922
  %2176 = vmatmul.mubr.bf16.gmra.mrb[0].mxu0 %v1921
  %v2177 = vpop.f32.mrb[0].mxu0
  %v2178 = vadd.f32 0.0, %v2177
  %v2179 = vpop.f32.mrb[0].mxu0
  %v2180 = vpop.f32.mrb[0].mxu0
  %v2181 = vadd.f32 0.0, %v2180
  %v2182 = vpop.f32.mrb[0].mxu0
  %2183 = vmatprep.mubr.bf16.mxu0 %v1925
  %2184 = vmatmul.mubr.bf16.gmra.mrb[0].mxu0 %v1924
  %v2185 = vpop.f32.mrb[0].mxu0
  %v2186 = vadd.f32 0.0, %v2185
  %v2187 = vpop.f32.mrb[0].mxu0
  %v2188 = vpop.f32.mrb[0].mxu0
  %v2189 = vadd.f32 0.0, %v2188
  %v2190 = vpop.f32.mrb[0].mxu0
  %2191 = vmatprep.mubr.bf16.mxu0 %v1928
  %2192 = vmatmul.mubr.bf16.gmra.mrb[0].mxu0 %v1927
  %v2193 = vpop.f32.mrb[0].mxu0
  %v2194 = vadd.f32 0.0, %v2193
  %v2195 = vpop.f32.mrb[0].mxu0
  %v2196 = vpop.f32.mrb[0].mxu0
  %v2197 = vadd.f32 0.0, %v2196
  %v2198 = vpop.f32.mrb[0].mxu0
  %2199 = vmatprep.mubr.bf16.mxu0 %v1931
  %2200 = vmatmul.mubr.bf16.gmra.mrb[0].mxu0 %v1930
  %v2201 = vpop.f32.mrb[0].mxu0
  %v2202 = vadd.f32 0.0, %v2201
  %v2203 = vpop.f32.mrb[0].mxu0
  %v2204 = vpop.f32.mrb[0].mxu0
  %v2205 = vadd.f32 0.0, %v2204
  %v2206 = vpop.f32.mrb[0].mxu0
  %2207 = vmatprep.mubr.bf16.mxu0 %v1934
  %2208 = vmatmul.mubr.bf16.gmra.mrb[0].mxu0 %v1933
  %v2209 = vpop.f32.mrb[0].mxu0
  %v2210 = vadd.f32 0.0, %v2209
  %v2211 = vpop.f32.mrb[0].mxu0
  %v2212 = vpop.f32.mrb[0].mxu0
  %v2213 = vadd.f32 0.0, %v2212
  %v2214 = vpop.f32.mrb[0].mxu0
  %2215 = vmatprep.mubr.bf16.mxu0 %v1937
  %2216 = vmatmul.mubr.bf16.gmra.mrb[0].mxu0 %v1936
  %v2217 = vpop.f32.mrb[0].mxu0
  %v2218 = vadd.f32 0.0, %v2217
  %v2219 = vpop.f32.mrb[0].mxu0
  %v2220 = vpop.f32.mrb[0].mxu0
  %v2221 = vadd.f32 0.0, %v2220
  %v2222 = vpop.f32.mrb[0].mxu0
  %2223 = vmatprep.mubr.bf16.mxu0 %v1940
  %2224 = vmatmul.mubr.bf16.gmra.mrb[0].mxu0 %v1939
  %v2225 = vpop.f32.mrb[0].mxu0
  %v2226 = vadd.f32 0.0, %v2225
  %v2227 = vpop.f32.mrb[0].mxu0
  %v2228 = vpop.f32.mrb[0].mxu0
  %v2229 = vadd.f32 0.0, %v2228
  %v2230 = vpop.f32.mrb[0].mxu0
  %2231 = vdwg.mxu0
  %2232 = vmatprep.subr.bf16.mxu0 0
  %2233 = vmatpush1.bf16.msra.mxu0 %v2103
  %2234 = vmatprep.subr.bf16.mxu0 0
  %2235 = vmatpush1.bf16.msra.mxu0 %v2104
  %2236 = vmatprep.subr.bf16.mxu0 0
  %2237 = vmatpush1.bf16.msra.mxu0 %v2105
  %2238 = vmatprep.subr.bf16.mxu0 0
  %2239 = vmatpush1.bf16.msra.mxu0 %v2106
  %2240 = vmatprep.subr.bf16.mxu0 0
  %2241 = vmatpush1.bf16.msra.mxu0 %v2107
  %2242 = vmatprep.subr.bf16.mxu0 0
  %2243 = vmatpush1.bf16.msra.mxu0 %v2108
  %2244 = vmatprep.subr.bf16.mxu0 0
  %2245 = vmatpush1.bf16.msra.mxu0 %v2109
  %2246 = vmatprep.subr.bf16.mxu0 0
  %2247 = vmatpush1.bf16.msra.mxu0 %v2110
  %2248 = vmatprep.subr.bf16.mxu0 0
  %2249 = vmatpush1.bf16.msra.mxu0 0
  %2250 = vmatprep.subr.bf16.mxu0 0
  %2251 = vmatpush1.bf16.msra.mxu0 0
  %2252 = vmatprep.subr.bf16.mxu0 0
  %2253 = vmatpush1.bf16.msra.mxu0 0
  %2254 = vmatprep.subr.bf16.mxu0 0
  %2255 = vmatpush1.bf16.msra.mxu0 0
  %2256 = vmatprep.subr.bf16.mxu0 0
  %2257 = vmatpush1.bf16.msra.mxu0 0
  %2258 = vmatprep.subr.bf16.mxu0 0
  %2259 = vmatpush1.bf16.msra.mxu0 0
  %2260 = vmatprep.subr.bf16.mxu0 0
  %2261 = vmatpush1.bf16.msra.mxu0 0
  %2262 = vmatprep.subr.bf16.mxu0 0
  %2263 = vmatpush1.bf16.msra.mxu0 0
  %2264 = vmatprep.mubr.bf16.mxu0 0
  %2265 = vmatmul.mubr.bf16.gmra.mrb[0].mxu0 %v1920
  %v2266 = vpop.f32.mrb[0].mxu0
  %v2267 = vadd.f32 %v2170, %v2266
  %v2268 = vpop.f32.mrb[0].mxu0
  %v2269 = vpop.f32.mrb[0].mxu0
  %v2270 = vadd.f32 %v2173, %v2269
  %v2271 = vpop.f32.mrb[0].mxu0
  %2272 = vmatprep.mubr.bf16.mxu0 0
  %2273 = vmatmul.mubr.bf16.gmra.mrb[0].mxu0 %v1923
  %v2274 = vpop.f32.mrb[0].mxu0
  %v2275 = vadd.f32 %v2178, %v2274
  %v2276 = vpop.f32.mrb[0].mxu0
  %v2277 = vpop.f32.mrb[0].mxu0
  %v2278 = vadd.f32 %v2181, %v2277
  %v2279 = vpop.f32.mrb[0].mxu0
  %2280 = vmatprep.mubr.bf16.mxu0 0
  %2281 = vmatmul.mubr.bf16.gmra.mrb[0].mxu0 %v1926
  %v2282 = vpop.f32.mrb[0].mxu0
  %v2283 = vadd.f32 %v2186, %v2282
  %v2284 = vpop.f32.mrb[0].mxu0
  %v2285 = vpop.f32.mrb[0].mxu0
  %v2286 = vadd.f32 %v2189, %v2285
  %v2287 = vpop.f32.mrb[0].mxu0
  %2288 = vmatprep.mubr.bf16.mxu0 0
  %2289 = vmatmul.mubr.bf16.gmra.mrb[0].mxu0 %v1929
  %v2290 = vpop.f32.mrb[0].mxu0
  %v2291 = vadd.f32 %v2194, %v2290
  %v2292 = vpop.f32.mrb[0].mxu0
  %v2293 = vpop.f32.mrb[0].mxu0
  %v2294 = vadd.f32 %v2197, %v2293
  %v2295 = vpop.f32.mrb[0].mxu0
  %2296 = vmatprep.mubr.bf16.mxu0 0
  %2297 = vmatmul.mubr.bf16.gmra.mrb[0].mxu0 %v1932
  %v2298 = vpop.f32.mrb[0].mxu0
  %v2299 = vadd.f32 %v2202, %v2298
  %v2300 = vpop.f32.mrb[0].mxu0
  %v2301 = vpop.f32.mrb[0].mxu0
  %v2302 = vadd.f32 %v2205, %v2301
  %v2303 = vpop.f32.mrb[0].mxu0
  %2304 = vmatprep.mubr.bf16.mxu0 0
  %2305 = vmatmul.mubr.bf16.gmra.mrb[0].mxu0 %v1935
  %v2306 = vpop.f32.mrb[0].mxu0
  %v2307 = vadd.f32 %v2210, %v2306
  %v2308 = vpop.f32.mrb[0].mxu0
  %v2309 = vpop.f32.mrb[0].mxu0
  %v2310 = vadd.f32 %v2213, %v2309
  %v2311 = vpop.f32.mrb[0].mxu0
  %2312 = vmatprep.mubr.bf16.mxu0 0
  %2313 = vmatmul.mubr.bf16.gmra.mrb[0].mxu0 %v1938
  %v2314 = vpop.f32.mrb[0].mxu0
  %v2315 = vadd.f32 %v2218, %v2314
  %v2316 = vpop.f32.mrb[0].mxu0
  %v2317 = vpop.f32.mrb[0].mxu0
  %v2318 = vadd.f32 %v2221, %v2317
  %v2319 = vpop.f32.mrb[0].mxu0
  %2320 = vmatprep.mubr.bf16.mxu0 0
  %2321 = vmatmul.mubr.bf16.gmra.mrb[0].mxu0 %v1941
  %v2322 = vpop.f32.mrb[0].mxu0
  %v2323 = vadd.f32 %v2226, %v2322
  %v2324 = vpop.f32.mrb[0].mxu0
  %v2325 = vpop.f32.mrb[0].mxu0
  %v2326 = vadd.f32 %v2229, %v2325
  %v2327 = vpop.f32.mrb[0].mxu0
  %2328 = vdwg.mxu0
  %v2377 = vunpack.c.l.b16 %v1870
  %v2378 = vunpack.c.l.b16 %v1871
  %v2379 = vunpack.c.l.b16 %v1872
  %v2380 = vunpack.c.l.b16 %v1873
  %v2381 = vunpack.c.l.b16 %v1874
  %v2382 = vunpack.c.l.b16 %v1875
  %v2383 = vunpack.c.l.b16 %v1876
  %v2384 = vunpack.c.l.b16 %v1877
  %v2385 = vunpack.c.l.b16 %v1878
  %v2386 = vunpack.c.l.b16 %v1879
  %v2387 = vunpack.c.l.b16 %v1880
  %v2388 = vunpack.c.l.b16 %v1881
  %v2389 = vunpack.c.l.b16 %v1882
  %v2390 = vunpack.c.l.b16 %v1883
  %v2391 = vunpack.c.l.b16 %v1884
  %v2392 = vunpack.c.l.b16 %v1885
  %v2393 = vunpack.c.l.b16 %v1886
  %v2394 = vunpack.c.l.b16 %v1887
  %v2395 = vunpack.c.l.b16 %v1888
  %v2396 = vunpack.c.l.b16 %v1889
  %v2397 = vunpack.c.l.b16 %v1890
  %v2398 = vunpack.c.l.b16 %v1891
  %v2399 = vunpack.c.l.b16 %v1892
  %v2400 = vunpack.c.l.b16 %v1893
  %v2401 = vunpack.c.l.b16 %v1894
  %v2402 = vunpack.c.l.b16 %v1895
  %v2403 = vunpack.c.l.b16 %v1896
  %v2404 = vunpack.c.l.b16 %v1897
  %v2405 = vunpack.c.l.b16 %v1898
  %v2406 = vunpack.c.l.b16 %v1899
  %v2407 = vunpack.c.l.b16 %v1900
  %v2408 = vunpack.c.l.b16 %v1901
  %v2409 = vunpack.c.l.b16 %v1902
  %v2410 = vunpack.c.l.b16 %v1903
  %v2411 = vunpack.c.l.b16 %v1904
  %v2412 = vunpack.c.l.b16 %v1905
  %v2413 = vunpack.c.l.b16 %v1906
  %v2414 = vunpack.c.l.b16 %v1907
  %v2415 = vunpack.c.l.b16 %v1908
  %v2416 = vunpack.c.l.b16 %v1909
  %v2417 = vunpack.c.l.b16 %v1910
  %v2418 = vunpack.c.l.b16 %v1911
  %v2419 = vunpack.c.l.b16 %v1912
  %v2420 = vunpack.c.l.b16 %v1913
  %v2421 = vunpack.c.l.b16 %v1914
  %v2422 = vunpack.c.l.b16 %v1915
  %v2423 = vunpack.c.l.b16 %v1916
  %v2424 = vunpack.c.l.b16 %v1917
  %v2425 = vpack.c.b16 %v2378, %v2377
  %v2426 = vpack.c.b16 %v2380, %v2379
  %v2427 = vpack.c.b16 %v2382, %v2381
  %v2428 = vpack.c.b16 %v2384, %v2383
  %v2429 = vpack.c.b16 %v2386, %v2385
  %v2430 = vpack.c.b16 %v2388, %v2387
  %v2431 = vpack.c.b16 %v2390, %v2389
  %v2432 = vpack.c.b16 %v2392, %v2391
  %v2433 = vpack.c.b16 %v2394, %v2393
  %v2434 = vpack.c.b16 %v2396, %v2395
  %v2435 = vpack.c.b16 %v2398, %v2397
  %v2436 = vpack.c.b16 %v2400, %v2399
  %v2437 = vpack.c.b16 %v2402, %v2401
  %v2438 = vpack.c.b16 %v2404, %v2403
  %v2439 = vpack.c.b16 %v2406, %v2405
  %v2440 = vpack.c.b16 %v2408, %v2407
  %v2441 = vpack.c.b16 %v2410, %v2409
  %v2442 = vpack.c.b16 %v2412, %v2411
  %v2443 = vpack.c.b16 %v2414, %v2413
  %v2444 = vpack.c.b16 %v2416, %v2415
  %v2445 = vpack.c.b16 %v2418, %v2417
  %v2446 = vpack.c.b16 %v2420, %v2419
  %v2447 = vpack.c.b16 %v2422, %v2421
  %v2448 = vpack.c.b16 %v2424, %v2423
  %2473 = vmatprep.subr.bf16.mxu0 0
  %2474 = vmatpush1.bf16.msra.mxu0 %v2425
  %2475 = vmatprep.subr.bf16.mxu0 0
  %2476 = vmatpush1.bf16.msra.mxu0 %v2426
  %2477 = vmatprep.subr.bf16.mxu0 0
  %2478 = vmatpush1.bf16.msra.mxu0 %v2427
  %2479 = vmatprep.subr.bf16.mxu0 0
  %2480 = vmatpush1.bf16.msra.mxu0 %v2428
  %2481 = vmatprep.subr.bf16.mxu0 0
  %2482 = vmatpush1.bf16.msra.mxu0 %v2429
  %2483 = vmatprep.subr.bf16.mxu0 0
  %2484 = vmatpush1.bf16.msra.mxu0 %v2430
  %2485 = vmatprep.subr.bf16.mxu0 0
  %2486 = vmatpush1.bf16.msra.mxu0 %v2431
  %2487 = vmatprep.subr.bf16.mxu0 0
  %2488 = vmatpush1.bf16.msra.mxu0 %v2432
  %2489 = vmatprep.subr.bf16.mxu0 0
  %2490 = vmatpush1.bf16.msra.mxu0 %v2433
  %2491 = vmatprep.subr.bf16.mxu0 0
  %2492 = vmatpush1.bf16.msra.mxu0 %v2434
  %2493 = vmatprep.subr.bf16.mxu0 0
  %2494 = vmatpush1.bf16.msra.mxu0 %v2435
  %2495 = vmatprep.subr.bf16.mxu0 0
  %2496 = vmatpush1.bf16.msra.mxu0 %v2436
  %2497 = vmatprep.subr.bf16.mxu0 0
  %2498 = vmatpush1.bf16.msra.mxu0 %v2437
  %2499 = vmatprep.subr.bf16.mxu0 0
  %2500 = vmatpush1.bf16.msra.mxu0 %v2438
  %2501 = vmatprep.subr.bf16.mxu0 0
  %2502 = vmatpush1.bf16.msra.mxu0 %v2439
  %2503 = vmatprep.subr.bf16.mxu0 0
  %2504 = vmatpush1.bf16.msra.mxu0 %v2440
  %2505 = vmatprep.mubr.bf16.mxu0 %v1847
  %2506 = vmatmul.mubr.bf16.gmra.mrb[0].mxu0 %v1846
  %v2507 = vpop.f32.mrb[0].mxu0
  %v2508 = vadd.f32 %v2267, %v2507
  %v2509 = vpop.f32.mrb[0].mxu0
  %v2510 = vpop.f32.mrb[0].mxu0
  %v2511 = vadd.f32 %v2270, %v2510
  %v2512 = vpop.f32.mrb[0].mxu0
  %2513 = vmatprep.mubr.bf16.mxu0 %v1850
  %2514 = vmatmul.mubr.bf16.gmra.mrb[0].mxu0 %v1849
  %v2515 = vpop.f32.mrb[0].mxu0
  %v2516 = vadd.f32 %v2275, %v2515
  %v2517 = vpop.f32.mrb[0].mxu0
  %v2518 = vpop.f32.mrb[0].mxu0
  %v2519 = vadd.f32 %v2278, %v2518
  %v2520 = vpop.f32.mrb[0].mxu0
  %2521 = vmatprep.mubr.bf16.mxu0 %v1853
  %2522 = vmatmul.mubr.bf16.gmra.mrb[0].mxu0 %v1852
  %v2523 = vpop.f32.mrb[0].mxu0
  %v2524 = vadd.f32 %v2283, %v2523
  %v2525 = vpop.f32.mrb[0].mxu0
  %v2526 = vpop.f32.mrb[0].mxu0
  %v2527 = vadd.f32 %v2286, %v2526
  %v2528 = vpop.f32.mrb[0].mxu0
  %2529 = vmatprep.mubr.bf16.mxu0 %v1856
  %2530 = vmatmul.mubr.bf16.gmra.mrb[0].mxu0 %v1855
  %v2531 = vpop.f32.mrb[0].mxu0
  %v2532 = vadd.f32 %v2291, %v2531
  %v2533 = vpop.f32.mrb[0].mxu0
  %v2534 = vpop.f32.mrb[0].mxu0
  %v2535 = vadd.f32 %v2294, %v2534
  %v2536 = vpop.f32.mrb[0].mxu0
  %2537 = vmatprep.mubr.bf16.mxu0 %v1859
  %2538 = vmatmul.mubr.bf16.gmra.mrb[0].mxu0 %v1858
  %v2539 = vpop.f32.mrb[0].mxu0
  %v2540 = vadd.f32 %v2299, %v2539
  %v2541 = vpop.f32.mrb[0].mxu0
  %v2542 = vpop.f32.mrb[0].mxu0
  %v2543 = vadd.f32 %v2302, %v2542
  %v2544 = vpop.f32.mrb[0].mxu0
  %2545 = vmatprep.mubr.bf16.mxu0 %v1862
  %2546 = vmatmul.mubr.bf16.gmra.mrb[0].mxu0 %v1861
  %v2547 = vpop.f32.mrb[0].mxu0
  %v2548 = vadd.f32 %v2307, %v2547
  %v2549 = vpop.f32.mrb[0].mxu0
  %v2550 = vpop.f32.mrb[0].mxu0
  %v2551 = vadd.f32 %v2310, %v2550
  %v2552 = vpop.f32.mrb[0].mxu0
  %2553 = vmatprep.mubr.bf16.mxu0 %v1865
  %2554 = vmatmul.mubr.bf16.gmra.mrb[0].mxu0 %v1864
  %v2555 = vpop.f32.mrb[0].mxu0
  %v2556 = vadd.f32 %v2315, %v2555
  %v2557 = vpop.f32.mrb[0].mxu0
  %v2558 = vpop.f32.mrb[0].mxu0
  %v2559 = vadd.f32 %v2318, %v2558
  %v2560 = vpop.f32.mrb[0].mxu0
  %2561 = vmatprep.mubr.bf16.mxu0 %v1868
  %2562 = vmatmul.mubr.bf16.gmra.mrb[0].mxu0 %v1867
  %v2563 = vpop.f32.mrb[0].mxu0
  %v2564 = vadd.f32 %v2323, %v2563
  %v2565 = vpop.f32.mrb[0].mxu0
  %v2566 = vpop.f32.mrb[0].mxu0
  %v2567 = vadd.f32 %v2326, %v2566
  %v2568 = vpop.f32.mrb[0].mxu0
  %2569 = vdwg.mxu0
  %2570 = vmatprep.subr.bf16.mxu0 0
  %2571 = vmatpush1.bf16.msra.mxu0 %v2441
  %2572 = vmatprep.subr.bf16.mxu0 0
  %2573 = vmatpush1.bf16.msra.mxu0 %v2442
  %2574 = vmatprep.subr.bf16.mxu0 0
  %2575 = vmatpush1.bf16.msra.mxu0 %v2443
  %2576 = vmatprep.subr.bf16.mxu0 0
  %2577 = vmatpush1.bf16.msra.mxu0 %v2444
  %2578 = vmatprep.subr.bf16.mxu0 0
  %2579 = vmatpush1.bf16.msra.mxu0 %v2445
  %2580 = vmatprep.subr.bf16.mxu0 0
  %2581 = vmatpush1.bf16.msra.mxu0 %v2446
  %2582 = vmatprep.subr.bf16.mxu0 0
  %2583 = vmatpush1.bf16.msra.mxu0 %v2447
  %2584 = vmatprep.subr.bf16.mxu0 0
  %2585 = vmatpush1.bf16.msra.mxu0 %v2448
  %2586 = vmatprep.subr.bf16.mxu0 0
  %2587 = vmatpush1.bf16.msra.mxu0 0
  %2588 = vmatprep.subr.bf16.mxu0 0
  %2589 = vmatpush1.bf16.msra.mxu0 0
  %2590 = vmatprep.subr.bf16.mxu0 0
  %2591 = vmatpush1.bf16.msra.mxu0 0
  %2592 = vmatprep.subr.bf16.mxu0 0
  %2593 = vmatpush1.bf16.msra.mxu0 0
  %2594 = vmatprep.subr.bf16.mxu0 0
  %2595 = vmatpush1.bf16.msra.mxu0 0
  %2596 = vmatprep.subr.bf16.mxu0 0
  %2597 = vmatpush1.bf16.msra.mxu0 0
  %2598 = vmatprep.subr.bf16.mxu0 0
  %2599 = vmatpush1.bf16.msra.mxu0 0
  %2600 = vmatprep.subr.bf16.mxu0 0
  %2601 = vmatpush1.bf16.msra.mxu0 0
  %2602 = vmatprep.mubr.bf16.mxu0 0
  %2603 = vmatmul.mubr.bf16.gmra.mrb[0].mxu0 %v1848
  %v2604 = vpop.f32.mrb[0].mxu0
  %v2605 = vadd.f32 %v2508, %v2604
  %v2606 = vpop.f32.mrb[0].mxu0
  %v2607 = vpop.f32.mrb[0].mxu0
  %v2608 = vadd.f32 %v2511, %v2607
  %v2609 = vpop.f32.mrb[0].mxu0
  %2610 = vmatprep.mubr.bf16.mxu0 0
  %2611 = vmatmul.mubr.bf16.gmra.mrb[0].mxu0 %v1851
  %v2612 = vpop.f32.mrb[0].mxu0
  %v2613 = vadd.f32 %v2516, %v2612
  %v2614 = vpop.f32.mrb[0].mxu0
  %v2615 = vpop.f32.mrb[0].mxu0
  %v2616 = vadd.f32 %v2519, %v2615
  %v2617 = vpop.f32.mrb[0].mxu0
  %2618 = vmatprep.mubr.bf16.mxu0 0
  %2619 = vmatmul.mubr.bf16.gmra.mrb[0].mxu0 %v1854
  %v2620 = vpop.f32.mrb[0].mxu0
  %v2621 = vadd.f32 %v2524, %v2620
  %v2622 = vpop.f32.mrb[0].mxu0
  %v2623 = vpop.f32.mrb[0].mxu0
  %v2624 = vadd.f32 %v2527, %v2623
  %v2625 = vpop.f32.mrb[0].mxu0
  %2626 = vmatprep.mubr.bf16.mxu0 0
  %2627 = vmatmul.mubr.bf16.gmra.mrb[0].mxu0 %v1857
  %v2628 = vpop.f32.mrb[0].mxu0
  %v2629 = vadd.f32 %v2532, %v2628
  %v2630 = vpop.f32.mrb[0].mxu0
  %v2631 = vpop.f32.mrb[0].mxu0
  %v2632 = vadd.f32 %v2535, %v2631
  %v2633 = vpop.f32.mrb[0].mxu0
  %2634 = vmatprep.mubr.bf16.mxu0 0
  %2635 = vmatmul.mubr.bf16.gmra.mrb[0].mxu0 %v1860
  %v2636 = vpop.f32.mrb[0].mxu0
  %v2637 = vadd.f32 %v2540, %v2636
  %v2638 = vpop.f32.mrb[0].mxu0
  %v2639 = vpop.f32.mrb[0].mxu0
  %v2640 = vadd.f32 %v2543, %v2639
  %v2641 = vpop.f32.mrb[0].mxu0
  %2642 = vmatprep.mubr.bf16.mxu0 0
  %2643 = vmatmul.mubr.bf16.gmra.mrb[0].mxu0 %v1863
  %v2644 = vpop.f32.mrb[0].mxu0
  %v2645 = vadd.f32 %v2548, %v2644
  %v2646 = vpop.f32.mrb[0].mxu0
  %v2647 = vpop.f32.mrb[0].mxu0
  %v2648 = vadd.f32 %v2551, %v2647
  %v2649 = vpop.f32.mrb[0].mxu0
  %2650 = vmatprep.mubr.bf16.mxu0 0
  %2651 = vmatmul.mubr.bf16.gmra.mrb[0].mxu0 %v1866
  %v2652 = vpop.f32.mrb[0].mxu0
  %v2653 = vadd.f32 %v2556, %v2652
  %v2654 = vpop.f32.mrb[0].mxu0
  %v2655 = vpop.f32.mrb[0].mxu0
  %v2656 = vadd.f32 %v2559, %v2655
  %v2657 = vpop.f32.mrb[0].mxu0
  %2658 = vmatprep.mubr.bf16.mxu0 0
  %2659 = vmatmul.mubr.bf16.gmra.mrb[0].mxu0 %v1869
  %v2660 = vpop.f32.mrb[0].mxu0
  %v2661 = vadd.f32 %v2564, %v2660
  %v2662 = vpop.f32.mrb[0].mxu0
  %v2663 = vpop.f32.mrb[0].mxu0
  %v2664 = vadd.f32 %v2567, %v2663
  %v2665 = vpop.f32.mrb[0].mxu0
  %2666 = vdwg.mxu0
  %v2667 = vpack.c.bf16 %v1795, %v1794
  %v2668 = vpack.c.bf16 %v1815, %v1814
  %v2669 = vpack.c.bf16 %v1835, %v1834
  %v2670 = vpack.c.bf16 %v1805, %v1804
  %v2671 = vpack.c.bf16 %v1825, %v1824
  %v2672 = vpack.c.bf16 %v1845, %v1844
  %s2673 = scalar_lea.vmem %s4, 384
  %v2674 = vld [vmem:[%s2673] sm:$0xf]
  %v2675 = vld [vmem:[%s2673 + $0x4] sm:$0xf]
  %v2676 = vld [vmem:[%s2673 + $0x8] sm:$0xf]
  %v2677 = vld [vmem:[%s2673 + $0xc] sm:$0xf]
  %v2678 = vld [vmem:[%s2673 + $0x10] sm:$0xf]
  %v2679 = vld [vmem:[%s2673 + $0x14] sm:$0xf]
  %v2680 = vld [vmem:[%s2673 + $0x18] sm:$0xf]
  %v2681 = vld [vmem:[%s2673 + $0x1c] sm:$0xf]
  %v2682 = vld [vmem:[%s2673 + $0x20] sm:$0xf]
  %v2683 = vld [vmem:[%s2673 + $0x24] sm:$0xf]
  %v2684 = vld [vmem:[%s2673 + $0x28] sm:$0xf]
  %v2685 = vld [vmem:[%s2673 + $0x2c] sm:$0xf]
  %v2686 = vld [vmem:[%s2673 + $0x30] sm:$0xf]
  %v2687 = vld [vmem:[%s2673 + $0x34] sm:$0xf]
  %v2688 = vld [vmem:[%s2673 + $0x38] sm:$0xf]
  %v2689 = vld [vmem:[%s2673 + $0x3c] sm:$0xf]
  %v2690 = vld [vmem:[%s2673 + $0x40] sm:$0xf]
  %v2691 = vld [vmem:[%s2673 + $0x44] sm:$0xf]
  %v2692 = vld [vmem:[%s2673 + $0x48] sm:$0xf]
  %v2693 = vld [vmem:[%s2673 + $0x4c] sm:$0xf]
  %v2694 = vld [vmem:[%s2673 + $0x50] sm:$0xf]
  %v2695 = vld [vmem:[%s2673 + $0x54] sm:$0xf]
  %v2696 = vld [vmem:[%s2673 + $0x58] sm:$0xf]
  %v2697 = vld [vmem:[%s2673 + $0x5c] sm:$0xf]
  %v2698 = vld [vmem:[%s2673 + $0x60] sm:$0xf]
  %v2699 = vld [vmem:[%s2673 + $0x64] sm:$0xf]
  %v2700 = vld [vmem:[%s2673 + $0x68] sm:$0xf]
  %v2701 = vld [vmem:[%s2673 + $0x6c] sm:$0xf]
  %v2702 = vld [vmem:[%s2673 + $0x70] sm:$0xf]
  %v2703 = vld [vmem:[%s2673 + $0x74] sm:$0xf]
  %v2704 = vld [vmem:[%s2673 + $0x78] sm:$0xf]
  %v2705 = vld [vmem:[%s2673 + $0x7c] sm:$0xf]
  %v2706 = vld [vmem:[%s2673 + $0x80] sm:$0xf]
  %v2707 = vld [vmem:[%s2673 + $0x84] sm:$0xf]
  %v2708 = vld [vmem:[%s2673 + $0x88] sm:$0xf]
  %v2709 = vld [vmem:[%s2673 + $0x8c] sm:$0xf]
  %v2710 = vld [vmem:[%s2673 + $0x90] sm:$0xf]
  %v2711 = vld [vmem:[%s2673 + $0x94] sm:$0xf]
  %v2712 = vld [vmem:[%s2673 + $0x98] sm:$0xf]
  %v2713 = vld [vmem:[%s2673 + $0x9c] sm:$0xf]
  %v2714 = vld [vmem:[%s2673 + $0xa0] sm:$0xf]
  %v2715 = vld [vmem:[%s2673 + $0xa4] sm:$0xf]
  %v2716 = vld [vmem:[%s2673 + $0xa8] sm:$0xf]
  %v2717 = vld [vmem:[%s2673 + $0xac] sm:$0xf]
  %v2718 = vld [vmem:[%s2673 + $0xb0] sm:$0xf]
  %v2719 = vld [vmem:[%s2673 + $0xb4] sm:$0xf]
  %v2720 = vld [vmem:[%s2673 + $0xb8] sm:$0xf]
  %v2721 = vld [vmem:[%s2673 + $0xbc] sm:$0xf]
  %v2770 = vunpack.c.l.b16 %v2674
  %v2771 = vunpack.c.l.b16 %v2675
  %v2772 = vunpack.c.l.b16 %v2676
  %v2773 = vunpack.c.l.b16 %v2677
  %v2774 = vunpack.c.l.b16 %v2678
  %v2775 = vunpack.c.l.b16 %v2679
  %v2776 = vunpack.c.l.b16 %v2680
  %v2777 = vunpack.c.l.b16 %v2681
  %v2778 = vunpack.c.l.b16 %v2682
  %v2779 = vunpack.c.l.b16 %v2683
  %v2780 = vunpack.c.l.b16 %v2684
  %v2781 = vunpack.c.l.b16 %v2685
  %v2782 = vunpack.c.l.b16 %v2686
  %v2783 = vunpack.c.l.b16 %v2687
  %v2784 = vunpack.c.l.b16 %v2688
  %v2785 = vunpack.c.l.b16 %v2689
  %v2786 = vunpack.c.l.b16 %v2690
  %v2787 = vunpack.c.l.b16 %v2691
  %v2788 = vunpack.c.l.b16 %v2692
  %v2789 = vunpack.c.l.b16 %v2693
  %v2790 = vunpack.c.l.b16 %v2694
  %v2791 = vunpack.c.l.b16 %v2695
  %v2792 = vunpack.c.l.b16 %v2696
  %v2793 = vunpack.c.l.b16 %v2697
  %v2794 = vunpack.c.l.b16 %v2698
  %v2795 = vunpack.c.l.b16 %v2699
  %v2796 = vunpack.c.l.b16 %v2700
  %v2797 = vunpack.c.l.b16 %v2701
  %v2798 = vunpack.c.l.b16 %v2702
  %v2799 = vunpack.c.l.b16 %v2703
  %v2800 = vunpack.c.l.b16 %v2704
  %v2801 = vunpack.c.l.b16 %v2705
  %v2802 = vunpack.c.l.b16 %v2706
  %v2803 = vunpack.c.l.b16 %v2707
  %v2804 = vunpack.c.l.b16 %v2708
  %v2805 = vunpack.c.l.b16 %v2709
  %v2806 = vunpack.c.l.b16 %v2710
  %v2807 = vunpack.c.l.b16 %v2711
  %v2808 = vunpack.c.l.b16 %v2712
  %v2809 = vunpack.c.l.b16 %v2713
  %v2810 = vunpack.c.l.b16 %v2714
  %v2811 = vunpack.c.l.b16 %v2715
  %v2812 = vunpack.c.l.b16 %v2716
  %v2813 = vunpack.c.l.b16 %v2717
  %v2814 = vunpack.c.l.b16 %v2718
  %v2815 = vunpack.c.l.b16 %v2719
  %v2816 = vunpack.c.l.b16 %v2720
  %v2817 = vunpack.c.l.b16 %v2721
  %v2818 = vpack.c.b16 %v2771, %v2770
  %v2819 = vpack.c.b16 %v2773, %v2772
  %v2820 = vpack.c.b16 %v2775, %v2774
  %v2821 = vpack.c.b16 %v2777, %v2776
  %v2822 = vpack.c.b16 %v2779, %v2778
  %v2823 = vpack.c.b16 %v2781, %v2780
  %v2824 = vpack.c.b16 %v2783, %v2782
  %v2825 = vpack.c.b16 %v2785, %v2784
  %v2826 = vpack.c.b16 %v2787, %v2786
  %v2827 = vpack.c.b16 %v2789, %v2788
  %v2828 = vpack.c.b16 %v2791, %v2790
  %v2829 = vpack.c.b16 %v2793, %v2792
  %v2830 = vpack.c.b16 %v2795, %v2794
  %v2831 = vpack.c.b16 %v2797, %v2796
  %v2832 = vpack.c.b16 %v2799, %v2798
  %v2833 = vpack.c.b16 %v2801, %v2800
  %v2834 = vpack.c.b16 %v2803, %v2802
  %v2835 = vpack.c.b16 %v2805, %v2804
  %v2836 = vpack.c.b16 %v2807, %v2806
  %v2837 = vpack.c.b16 %v2809, %v2808
  %v2838 = vpack.c.b16 %v2811, %v2810
  %v2839 = vpack.c.b16 %v2813, %v2812
  %v2840 = vpack.c.b16 %v2815, %v2814
  %v2841 = vpack.c.b16 %v2817, %v2816
  %2866 = vmatprep.subr.bf16.mxu0 0
  %2867 = vmatpush1.bf16.msra.mxu0 %v2818
  %2868 = vmatprep.subr.bf16.mxu0 0
  %2869 = vmatpush1.bf16.msra.mxu0 %v2819
  %2870 = vmatprep.subr.bf16.mxu0 0
  %2871 = vmatpush1.bf16.msra.mxu0 %v2820
  %2872 = vmatprep.subr.bf16.mxu0 0
  %2873 = vmatpush1.bf16.msra.mxu0 %v2821
  %2874 = vmatprep.subr.bf16.mxu0 0
  %2875 = vmatpush1.bf16.msra.mxu0 %v2822
  %2876 = vmatprep.subr.bf16.mxu0 0
  %2877 = vmatpush1.bf16.msra.mxu0 %v2823
  %2878 = vmatprep.subr.bf16.mxu0 0
  %2879 = vmatpush1.bf16.msra.mxu0 %v2824
  %2880 = vmatprep.subr.bf16.mxu0 0
  %2881 = vmatpush1.bf16.msra.mxu0 %v2825
  %2882 = vmatprep.subr.bf16.mxu0 0
  %2883 = vmatpush1.bf16.msra.mxu0 %v2826
  %2884 = vmatprep.subr.bf16.mxu0 0
  %2885 = vmatpush1.bf16.msra.mxu0 %v2827
  %2886 = vmatprep.subr.bf16.mxu0 0
  %2887 = vmatpush1.bf16.msra.mxu0 %v2828
  %2888 = vmatprep.subr.bf16.mxu0 0
  %2889 = vmatpush1.bf16.msra.mxu0 %v2829
  %2890 = vmatprep.subr.bf16.mxu0 0
  %2891 = vmatpush1.bf16.msra.mxu0 %v2830
  %2892 = vmatprep.subr.bf16.mxu0 0
  %2893 = vmatpush1.bf16.msra.mxu0 %v2831
  %2894 = vmatprep.subr.bf16.mxu0 0
  %2895 = vmatpush1.bf16.msra.mxu0 %v2832
  %2896 = vmatprep.subr.bf16.mxu0 0
  %2897 = vmatpush1.bf16.msra.mxu0 %v2833
  %2898 = vmatprep.mubr.bf16.mxu0 %v1850
  %2899 = vmatmul.mubr.bf16.gmra.mrb[0].mxu0 %v1849
  %v2900 = vpop.f32.mrb[0].mxu0
  %v2901 = vadd.f32 0.0, %v2900
  %v2902 = vpop.f32.mrb[0].mxu0
  %v2903 = vpop.f32.mrb[0].mxu0
  %v2904 = vadd.f32 0.0, %v2903
  %v2905 = vpop.f32.mrb[0].mxu0
  %2906 = vmatprep.mubr.bf16.mxu0 %v1853
  %2907 = vmatmul.mubr.bf16.gmra.mrb[0].mxu0 %v1852
  %v2908 = vpop.f32.mrb[0].mxu0
  %v2909 = vadd.f32 0.0, %v2908
  %v2910 = vpop.f32.mrb[0].mxu0
  %v2911 = vpop.f32.mrb[0].mxu0
  %v2912 = vadd.f32 0.0, %v2911
  %v2913 = vpop.f32.mrb[0].mxu0
  %2914 = vmatprep.mubr.bf16.mxu0 %v1856
  %2915 = vmatmul.mubr.bf16.gmra.mrb[0].mxu0 %v1855
  %v2916 = vpop.f32.mrb[0].mxu0
  %v2917 = vadd.f32 0.0, %v2916
  %v2918 = vpop.f32.mrb[0].mxu0
  %v2919 = vpop.f32.mrb[0].mxu0
  %v2920 = vadd.f32 0.0, %v2919
  %v2921 = vpop.f32.mrb[0].mxu0
  %2922 = vmatprep.mubr.bf16.mxu0 %v2668
  %2923 = vmatmul.mubr.bf16.gmra.mrb[0].mxu0 %v2667
  %v2924 = vpop.f32.mrb[0].mxu0
  %v2925 = vadd.f32 0.0, %v2924
  %v2926 = vpop.f32.mrb[0].mxu0
  %v2927 = vpop.f32.mrb[0].mxu0
  %v2928 = vadd.f32 0.0, %v2927
  %v2929 = vpop.f32.mrb[0].mxu0
  %2930 = vmatprep.mubr.bf16.mxu0 %v1862
  %2931 = vmatmul.mubr.bf16.gmra.mrb[0].mxu0 %v1861
  %v2932 = vpop.f32.mrb[0].mxu0
  %v2933 = vadd.f32 0.0, %v2932
  %v2934 = vpop.f32.mrb[0].mxu0
  %v2935 = vpop.f32.mrb[0].mxu0
  %v2936 = vadd.f32 0.0, %v2935
  %v2937 = vpop.f32.mrb[0].mxu0
  %2938 = vmatprep.mubr.bf16.mxu0 %v1865
  %2939 = vmatmul.mubr.bf16.gmra.mrb[0].mxu0 %v1864
  %v2940 = vpop.f32.mrb[0].mxu0
  %v2941 = vadd.f32 0.0, %v2940
  %v2942 = vpop.f32.mrb[0].mxu0
  %v2943 = vpop.f32.mrb[0].mxu0
  %v2944 = vadd.f32 0.0, %v2943
  %v2945 = vpop.f32.mrb[0].mxu0
  %2946 = vmatprep.mubr.bf16.mxu0 %v1868
  %2947 = vmatmul.mubr.bf16.gmra.mrb[0].mxu0 %v1867
  %v2948 = vpop.f32.mrb[0].mxu0
  %v2949 = vadd.f32 0.0, %v2948
  %v2950 = vpop.f32.mrb[0].mxu0
  %v2951 = vpop.f32.mrb[0].mxu0
  %v2952 = vadd.f32 0.0, %v2951
  %v2953 = vpop.f32.mrb[0].mxu0
  %2954 = vmatprep.mubr.bf16.mxu0 %v2671
  %2955 = vmatmul.mubr.bf16.gmra.mrb[0].mxu0 %v2670
  %v2956 = vpop.f32.mrb[0].mxu0
  %v2957 = vadd.f32 0.0, %v2956
  %v2958 = vpop.f32.mrb[0].mxu0
  %v2959 = vpop.f32.mrb[0].mxu0
  %v2960 = vadd.f32 0.0, %v2959
  %v2961 = vpop.f32.mrb[0].mxu0
  %2962 = vdwg.mxu0
  %2963 = vmatprep.subr.bf16.mxu0 0
  %2964 = vmatpush1.bf16.msra.mxu0 %v2834
  %2965 = vmatprep.subr.bf16.mxu0 0
  %2966 = vmatpush1.bf16.msra.mxu0 %v2835
  %2967 = vmatprep.subr.bf16.mxu0 0
  %2968 = vmatpush1.bf16.msra.mxu0 %v2836
  %2969 = vmatprep.subr.bf16.mxu0 0
  %2970 = vmatpush1.bf16.msra.mxu0 %v2837
  %2971 = vmatprep.subr.bf16.mxu0 0
  %2972 = vmatpush1.bf16.msra.mxu0 %v2838
  %2973 = vmatprep.subr.bf16.mxu0 0
  %2974 = vmatpush1.bf16.msra.mxu0 %v2839
  %2975 = vmatprep.subr.bf16.mxu0 0
  %2976 = vmatpush1.bf16.msra.mxu0 %v2840
  %2977 = vmatprep.subr.bf16.mxu0 0
  %2978 = vmatpush1.bf16.msra.mxu0 %v2841
  %2979 = vmatprep.subr.bf16.mxu0 0
  %2980 = vmatpush1.bf16.msra.mxu0 0
  %2981 = vmatprep.subr.bf16.mxu0 0
  %2982 = vmatpush1.bf16.msra.mxu0 0
  %2983 = vmatprep.subr.bf16.mxu0 0
  %2984 = vmatpush1.bf16.msra.mxu0 0
  %2985 = vmatprep.subr.bf16.mxu0 0
  %2986 = vmatpush1.bf16.msra.mxu0 0
  %2987 = vmatprep.subr.bf16.mxu0 0
  %2988 = vmatpush1.bf16.msra.mxu0 0
  %2989 = vmatprep.subr.bf16.mxu0 0
  %2990 = vmatpush1.bf16.msra.mxu0 0
  %2991 = vmatprep.subr.bf16.mxu0 0
  %2992 = vmatpush1.bf16.msra.mxu0 0
  %2993 = vmatprep.subr.bf16.mxu0 0
  %2994 = vmatpush1.bf16.msra.mxu0 0
  %2995 = vmatprep.mubr.bf16.mxu0 0
  %2996 = vmatmul.mubr.bf16.gmra.mrb[0].mxu0 %v1851
  %v2997 = vpop.f32.mrb[0].mxu0
  %v2998 = vadd.f32 %v2901, %v2997
  %v2999 = vpop.f32.mrb[0].mxu0
  %v3000 = vpop.f32.mrb[0].mxu0
  %v3001 = vadd.f32 %v2904, %v3000
  %v3002 = vpop.f32.mrb[0].mxu0
  %3003 = vmatprep.mubr.bf16.mxu0 0
  %3004 = vmatmul.mubr.bf16.gmra.mrb[0].mxu0 %v1854
  %v3005 = vpop.f32.mrb[0].mxu0
  %v3006 = vadd.f32 %v2909, %v3005
  %v3007 = vpop.f32.mrb[0].mxu0
  %v3008 = vpop.f32.mrb[0].mxu0
  %v3009 = vadd.f32 %v2912, %v3008
  %v3010 = vpop.f32.mrb[0].mxu0
  %3011 = vmatprep.mubr.bf16.mxu0 0
  %3012 = vmatmul.mubr.bf16.gmra.mrb[0].mxu0 %v1857
  %v3013 = vpop.f32.mrb[0].mxu0
  %v3014 = vadd.f32 %v2917, %v3013
  %v3015 = vpop.f32.mrb[0].mxu0
  %v3016 = vpop.f32.mrb[0].mxu0
  %v3017 = vadd.f32 %v2920, %v3016
  %v3018 = vpop.f32.mrb[0].mxu0
  %3019 = vmatprep.mubr.bf16.mxu0 0
  %3020 = vmatmul.mubr.bf16.gmra.mrb[0].mxu0 %v2669
  %v3021 = vpop.f32.mrb[0].mxu0
  %v3022 = vadd.f32 %v2925, %v3021
  %v3023 = vpop.f32.mrb[0].mxu0
  %v3024 = vpop.f32.mrb[0].mxu0
  %v3025 = vadd.f32 %v2928, %v3024
  %v3026 = vpop.f32.mrb[0].mxu0
  %3027 = vmatprep.mubr.bf16.mxu0 0
  %3028 = vmatmul.mubr.bf16.gmra.mrb[0].mxu0 %v1863
  %v3029 = vpop.f32.mrb[0].mxu0
  %v3030 = vadd.f32 %v2933, %v3029
  %v3031 = vpop.f32.mrb[0].mxu0
  %v3032 = vpop.f32.mrb[0].mxu0
  %v3033 = vadd.f32 %v2936, %v3032
  %v3034 = vpop.f32.mrb[0].mxu0
  %3035 = vmatprep.mubr.bf16.mxu0 0
  %3036 = vmatmul.mubr.bf16.gmra.mrb[0].mxu0 %v1866
  %v3037 = vpop.f32.mrb[0].mxu0
  %v3038 = vadd.f32 %v2941, %v3037
  %v3039 = vpop.f32.mrb[0].mxu0
  %v3040 = vpop.f32.mrb[0].mxu0
  %v3041 = vadd.f32 %v2944, %v3040
  %v3042 = vpop.f32.mrb[0].mxu0
  %3043 = vmatprep.mubr.bf16.mxu0 0
  %3044 = vmatmul.mubr.bf16.gmra.mrb[0].mxu0 %v1869
  %v3045 = vpop.f32.mrb[0].mxu0
  %v3046 = vadd.f32 %v2949, %v3045
  %v3047 = vpop.f32.mrb[0].mxu0
  %v3048 = vpop.f32.mrb[0].mxu0
  %v3049 = vadd.f32 %v2952, %v3048
  %v3050 = vpop.f32.mrb[0].mxu0
  %3051 = vmatprep.mubr.bf16.mxu0 0
  %3052 = vmatmul.mubr.bf16.gmra.mrb[0].mxu0 %v2672
  %v3053 = vpop.f32.mrb[0].mxu0
  %v3054 = vadd.f32 %v2957, %v3053
  %v3055 = vpop.f32.mrb[0].mxu0
  %v3056 = vpop.f32.mrb[0].mxu0
  %v3057 = vadd.f32 %v2960, %v3056
  %v3058 = vpop.f32.mrb[0].mxu0
  %3059 = vdwg.mxu0
  %v3060 = vadd.f32 %v2605, %v2998
  %v3061 = vadd.f32 %v2608, %v3001
  %v3062 = vadd.f32 %v2613, %v3006
  %v3063 = vadd.f32 %v2616, %v3009
  %v3064 = vadd.f32 %v2621, %v3014
  %v3065 = vadd.f32 %v2624, %v3017
  %v3066 = vadd.f32 %v2629, %v3022
  %v3067 = vadd.f32 %v2632, %v3025
  %v3068 = vadd.f32 %v2637, %v3030
  %v3069 = vadd.f32 %v2640, %v3033
  %v3070 = vadd.f32 %v2645, %v3038
  %v3071 = vadd.f32 %v2648, %v3041
  %v3072 = vadd.f32 %v2653, %v3046
  %v3073 = vadd.f32 %v2656, %v3049
  %v3074 = vadd.f32 %v2661, %v3054
  %v3075 = vadd.f32 %v2664, %v3057
  %v3076 = vadd.f32 %v3060, %v3061
  %v3077 = vadd.f32 %v3076, %v3062
  %v3078 = vadd.f32 %v3077, %v3063
  %v3079 = vadd.f32 %v3078, %v3064
  %v3080 = vadd.f32 %v3079, %v3065
  %v3081 = vadd.f32 %v3080, %v3066
  %v3082 = vadd.f32 %v3081, %v3067
  %v3083 = vadd.f32 %v3082, %v3068
  %v3084 = vadd.f32 %v3083, %v3069
  %v3085 = vadd.f32 %v3084, %v3070
  %v3086 = vadd.f32 %v3085, %v3071
  %v3087 = vadd.f32 %v3086, %v3072
  %v3088 = vadd.f32 %v3087, %v3073
  %v3089 = vadd.f32 %v3088, %v3074
  %v3090 = vadd.f32 %v3089, %v3075
  %v3091 = vrot.slane %v3090, 4
  %v3092 = vadd.f32 %v3090, %v3091
  %v3093 = vrot.slane %v3092, 2
  %v3094 = vadd.f32 %v3092, %v3093
  %v3095 = vrot.slane %v3094, 1
  %v3096 = vadd.f32 %v3094, %v3095
  %v3097 = vmul.f32 %v3096, 0.0078125
  %v3098 = vsub.f32 %v3060, %v3097
  %v3099 = vsub.f32 %v3061, %v3097
  %v3100 = vsub.f32 %v3062, %v3097
  %v3101 = vsub.f32 %v3063, %v3097
  %v3102 = vsub.f32 %v3064, %v3097
  %v3103 = vsub.f32 %v3065, %v3097
  %v3104 = vsub.f32 %v3066, %v3097
  %v3105 = vsub.f32 %v3067, %v3097
  %v3106 = vsub.f32 %v3068, %v3097
  %v3107 = vsub.f32 %v3069, %v3097
  %v3108 = vsub.f32 %v3070, %v3097
  %v3109 = vsub.f32 %v3071, %v3097
  %v3110 = vsub.f32 %v3072, %v3097
  %v3111 = vsub.f32 %v3073, %v3097
  %v3112 = vsub.f32 %v3074, %v3097
  %v3113 = vsub.f32 %v3075, %v3097
  %v3114 = vmul.f32 %v3098, %v3098
  %v3115 = vmul.f32 %v3099, %v3099
  %v3116 = vmul.f32 %v3100, %v3100
  %v3117 = vmul.f32 %v3101, %v3101
  %v3118 = vmul.f32 %v3102, %v3102
  %v3119 = vmul.f32 %v3103, %v3103
  %v3120 = vmul.f32 %v3104, %v3104
  %v3121 = vmul.f32 %v3105, %v3105
  %v3122 = vmul.f32 %v3106, %v3106
  %v3123 = vmul.f32 %v3107, %v3107
  %v3124 = vmul.f32 %v3108, %v3108
  %v3125 = vmul.f32 %v3109, %v3109
  %v3126 = vmul.f32 %v3110, %v3110
  %v3127 = vmul.f32 %v3111, %v3111
  %v3128 = vmul.f32 %v3112, %v3112
  %v3129 = vmul.f32 %v3113, %v3113
  %v3130 = vadd.f32 %v3114, %v3115
  %v3131 = vadd.f32 %v3130, %v3116
  %v3132 = vadd.f32 %v3131, %v3117
  %v3133 = vadd.f32 %v3132, %v3118
  %v3134 = vadd.f32 %v3133, %v3119
  %v3135 = vadd.f32 %v3134, %v3120
  %v3136 = vadd.f32 %v3135, %v3121
  %v3137 = vadd.f32 %v3136, %v3122
  %v3138 = vadd.f32 %v3137, %v3123
  %v3139 = vadd.f32 %v3138, %v3124
  %v3140 = vadd.f32 %v3139, %v3125
  %v3141 = vadd.f32 %v3140, %v3126
  %v3142 = vadd.f32 %v3141, %v3127
  %v3143 = vadd.f32 %v3142, %v3128
  %v3144 = vadd.f32 %v3143, %v3129
  %v3145 = vrot.slane %v3144, 4
  %v3146 = vadd.f32 %v3144, %v3145
  %v3147 = vrot.slane %v3146, 2
  %v3148 = vadd.f32 %v3146, %v3147
  %v3149 = vrot.slane %v3148, 1
  %v3150 = vadd.f32 %v3148, %v3149
  %v3151 = vmul.f32 %v3150, 0.0078125
  %v3152 = vadd.f32 %v3151, 1e-05
  %v3153 = vrsqrt.pop %v3152
  %v3154 = vmul.f32 %v3098, %v3153
  %v3155 = vmul.f32 %v3099, %v3153
  %v3156 = vmul.f32 %v3100, %v3153
  %v3157 = vmul.f32 %v3101, %v3153
  %v3158 = vmul.f32 %v3102, %v3153
  %v3159 = vmul.f32 %v3103, %v3153
  %v3160 = vmul.f32 %v3104, %v3153
  %v3161 = vmul.f32 %v3105, %v3153
  %v3162 = vmul.f32 %v3106, %v3153
  %v3163 = vmul.f32 %v3107, %v3153
  %v3164 = vmul.f32 %v3108, %v3153
  %v3165 = vmul.f32 %v3109, %v3153
  %v3166 = vmul.f32 %v3110, %v3153
  %v3167 = vmul.f32 %v3111, %v3153
  %v3168 = vmul.f32 %v3112, %v3153
  %v3169 = vmul.f32 %v3113, %v3153
  %v3170 = vld [vmem:[%s5] sm:$0x1]
  %v3172 = vlaneseq
  %v3173 = vshrl.u32 %v3172, 7
  %v3174 = vsub.s32 0, %v3173
  %v3175 = vrot.slane %v3170, %v3174
  %v3177 = vmul.f32 %v3154, %v3175
  %v3178 = vmul.f32 %v3155, %v3175
  %v3179 = vmul.f32 %v3156, %v3175
  %v3180 = vmul.f32 %v3157, %v3175
  %v3181 = vmul.f32 %v3158, %v3175
  %v3182 = vmul.f32 %v3159, %v3175
  %v3183 = vmul.f32 %v3160, %v3175
  %v3184 = vmul.f32 %v3161, %v3175
  %v3185 = vmul.f32 %v3162, %v3175
  %v3186 = vmul.f32 %v3163, %v3175
  %v3187 = vmul.f32 %v3164, %v3175
  %v3188 = vmul.f32 %v3165, %v3175
  %v3189 = vmul.f32 %v3166, %v3175
  %v3190 = vmul.f32 %v3167, %v3175
  %v3191 = vmul.f32 %v3168, %v3175
  %v3192 = vmul.f32 %v3169, %v3175
  %v3193 = vld [vmem:[%s6] sm:$0x1]
  %v3195 = vlaneseq
  %v3196 = vshrl.u32 %v3195, 7
  %v3197 = vsub.s32 0, %v3196
  %v3198 = vrot.slane %v3193, %v3197
  %v3200 = vadd.f32 %v3177, %v3198
  %v3201 = vadd.f32 %v3178, %v3198
  %v3202 = vadd.f32 %v3179, %v3198
  %v3203 = vadd.f32 %v3180, %v3198
  %v3204 = vadd.f32 %v3181, %v3198
  %v3205 = vadd.f32 %v3182, %v3198
  %v3206 = vadd.f32 %v3183, %v3198
  %v3207 = vadd.f32 %v3184, %v3198
  %v3208 = vadd.f32 %v3185, %v3198
  %v3209 = vadd.f32 %v3186, %v3198
  %v3210 = vadd.f32 %v3187, %v3198
  %v3211 = vadd.f32 %v3188, %v3198
  %v3212 = vadd.f32 %v3189, %v3198
  %v3213 = vadd.f32 %v3190, %v3198
  %v3214 = vadd.f32 %v3191, %v3198
  %v3215 = vadd.f32 %v3192, %v3198
  %v3216 = vmax.f32 %v3200, 0.0
  %v3217 = vmax.f32 %v3201, 0.0
  %v3218 = vmax.f32 %v3202, 0.0
  %v3219 = vmax.f32 %v3203, 0.0
  %v3220 = vmax.f32 %v3204, 0.0
  %v3221 = vmax.f32 %v3205, 0.0
  %v3222 = vmax.f32 %v3206, 0.0
  %v3223 = vmax.f32 %v3207, 0.0
  %v3224 = vmax.f32 %v3208, 0.0
  %v3225 = vmax.f32 %v3209, 0.0
  %v3226 = vmax.f32 %v3210, 0.0
  %v3227 = vmax.f32 %v3211, 0.0
  %v3228 = vmax.f32 %v3212, 0.0
  %v3229 = vmax.f32 %v3213, 0.0
  %v3230 = vmax.f32 %v3214, 0.0
  %v3231 = vmax.f32 %v3215, 0.0
  %3232 = vst [vmem:[%s7] sm:$0xff] %v3216
  %3233 = vst [vmem:[%s7 + $0x8] sm:$0xff] %v3217
  %3234 = vst [vmem:[%s7 + $0x10] sm:$0xff] %v3218
  %3235 = vst [vmem:[%s7 + $0x18] sm:$0xff] %v3219
  %3236 = vst [vmem:[%s7 + $0x20] sm:$0xff] %v3220
  %3237 = vst [vmem:[%s7 + $0x28] sm:$0xff] %v3221
  %3238 = vst [vmem:[%s7 + $0x30] sm:$0xff] %v3222
  %3239 = vst [vmem:[%s7 + $0x38] sm:$0xff] %v3223
  %3240 = vst [vmem:[%s7 + $0x40] sm:$0xff] %v3224
  %3241 = vst [vmem:[%s7 + $0x48] sm:$0xff] %v3225
  %3242 = vst [vmem:[%s7 + $0x50] sm:$0xff] %v3226
  %3243 = vst [vmem:[%s7 + $0x58] sm:$0xff] %v3227
  %3244 = vst [vmem:[%s7 + $0x60] sm:$0xff] %v3228
  %3245 = vst [vmem:[%s7 + $0x68] sm:$0xff] %v3229
  %3246 = vst [vmem:[%s7 + $0x70] sm:$0xff] %v3230
  %3247 = vst [vmem:[%s7 + $0x78] sm:$0xff] %v3231
  // Predicated region
  $region30: #{down_cob_forward.1} parent=0 // pred_check
    _
  $region31: #{down_cob_forward.1} parent=0 // pred_check_branch
    %3249 = sbr.rel (0) target = $region33
  $region32: #{down_cob_forward.1} parent=0 // pred_region
    _
  $region33: #{down_cob_forward.1} parent=0 // pred_fallthru
    _
  // Predicated region
  $region34: #{down_cob_forward.1} parent=0 // pred_check
    _
  $region35: #{down_cob_forward.1} parent=0 // pred_check_branch
    %3251 = sbr.rel (0) target = $region37
  $region36: #{down_cob_forward.1} parent=0 // pred_region
    _
  $region37: #{down_cob_forward.1} parent=0 // pred_fallthru
    _

</llo_original>
